<compile_context>
chip_gen: v7x
topology: tpu7x:2x2x1
jax: 0.10.0
libtpu: 0.0.40
codegen_flags: <defaults>
</compile_context>

<pallas_src>
import functools

import jax
import jax.numpy as jnp
from jax import lax
from jax.experimental import pallas as pl
from jax.experimental.pallas import tpu as pltpu


def _lstm_kernel(x_ref,            # (B, TT, D) f32   time tile of the input
                 wih0_ref,         # (D, 8H)   bf16   layer-0 input proj, stacked gate cols
                 wr_ref,           # (2H, 8H)  bf16   fused recurrent weights (both layers)
                 bs_ref,           # (1, 8H)   f32    stacked biases (b0 / b1 per gate block)
                 wc_ref,           # (H, C)    bf16   classifier weight
                 bc_ref,           # (1, C)    f32    classifier bias
                 out_ref,          # (B, C)    f32
                 h_ref, c_ref,     # (B, 2H)   f32    stacked carried state [h0|h1], [c0|c1]
                 gin_ref,          # (B, TT, 8H) f32  per-tile layer-0 pre-activations
                 *, seq_len, padded):
    B, TT, D = x_ref.shape
    H2 = h_ref.shape[1]          # 2H
    H = H2 // 2
    G2 = 8 * H                   # stacked gate width (both layers)
    t = pl.program_id(0)

    @pl.when(t == 0)
    def _init():
        h_ref[...] = jnp.zeros((B, H2), jnp.float32)
        c_ref[...] = jnp.zeros((B, H2), jnp.float32)

    w_r = wr_ref[...]            # resident fused recurrent weights (bf16)

    # Batched layer-0 input projection for the whole tile (M = B*TT MXU rows), with
    # biases folded in, landed in VMEM scratch so the recurrence reads one (B, 8H)
    # row per step instead of keeping the full tile live in vregs.
    x_flat = x_ref[...].astype(jnp.bfloat16).reshape(B * TT, D)
    gin_ref[...] = (jnp.dot(x_flat, wih0_ref[...],
                            preferred_element_type=jnp.float32)
                    + bs_ref[...]).reshape(B, TT, G2)

    h = h_ref[...]               # (B, 2H) = [h0 | h1]
    c = c_ref[...]               # (B, 2H) = [c0 | c1]

    def stacked_step(pre, c_prev):
        # column layout: [i0 i1 f0 f1 o0 o1 | g0 g1]  -> one sigmoid + one tanh
        sig = jax.nn.sigmoid(pre[:, :6 * H])
        g = jnp.tanh(pre[:, 6 * H:])
        c_new = sig[:, 2 * H:4 * H] * c_prev + sig[:, :2 * H] * g
        h_new = sig[:, 4 * H:6 * H] * jnp.tanh(c_new)
        return h_new, c_new

    # lane mask separating layer-0 / layer-1 halves of the stacked state (hoisted)
    lane = lax.broadcasted_iota(jnp.int32, (B, H2), 1)
    is_l0 = lane < H

    # Skewed two-layer recurrence: iteration i runs layer-0 step s = t*TT + i and
    # layer-1 step s-1, both fed by a single fused MXU matmul on the stacked state.
    for i in range(TT):
        fused = jnp.dot(h.astype(jnp.bfloat16), w_r,
                        preferred_element_type=jnp.float32)      # (B, 8H)
        pre = gin_ref[:, i, :] + fused
        h_new, c_new = stacked_step(pre, c)

        s = t * TT + i
        if padded:
            v0 = s < seq_len                    # layer-0 step s is a real timestep
            v1 = (s >= 1) & (s <= seq_len)      # layer-1 step s-1 is a real timestep
            valid = jnp.where(is_l0, v0, v1)
            h = jnp.where(valid, h_new, h)
            c = jnp.where(valid, c_new, c)
        elif i == 0:
            # very first global step: layer 1 has nothing to consume yet
            valid = is_l0 | (t > 0)
            h = jnp.where(valid, h_new, h)
            c = jnp.where(valid, c_new, c)
        else:
            h, c = h_new, c_new

    h_ref[...] = h
    c_ref[...] = c

    @pl.when(t == pl.num_programs(0) - 1)
    def _final():
        if padded:
            # padded iterations already let layer 1 catch up to step seq_len-1
            h1_last = h[:, H:]
        else:
            # layer 1 is one step behind layer 0: catch-up step consuming h0_{T-1}
            fused = jnp.dot(h.astype(jnp.bfloat16), w_r,
                            preferred_element_type=jnp.float32)
            h_new, _ = stacked_step(fused + bs_ref[...], c)
            h1_last = h_new[:, H:]
        out_ref[...] = (jnp.dot(h1_last.astype(jnp.bfloat16), wc_ref[...],
                                preferred_element_type=jnp.float32)
                        + bc_ref[...]).astype(out_ref.dtype)


def prepare_kernel_params(params):
    """PyTorch-layout params -> fused / stacked kernel layout.

    Column layout of the stacked gate axis (width 8H):
        [i0 i1 f0 f1 o0 o1 g0 g1]   (layer-0 / layer-1 interleaved per gate)
    so that one sigmoid covers the first 6H columns, one tanh the last 2H, and the
    stacked hidden state [h0|h1] is directly the LHS of the fused recurrent matmul
        [h0|h1] @ [[Whh0, Wih1], [0, Whh1]]  (gate-column order applied to the RHS).
    MXU operands are bf16 (f32 accumulation in the kernel); biases stay f32.
    """
    H = params["w_hh_l0"].shape[1]
    D = params["w_ih_l0"].shape[1]

    def gate_blocks(w_pt):          # (4H, in) PyTorch (i,f,g,o) -> 4 x (in, H)
        W = w_pt.T
        return W[:, :H], W[:, H:2 * H], W[:, 2 * H:3 * H], W[:, 3 * H:]

    i0x, f0x, g0x, o0x = gate_blocks(params["w_ih_l0"])   # (D, H)
    i0h, f0h, g0h, o0h = gate_blocks(params["w_hh_l0"])   # (H, H)
    i1x, f1x, g1x, o1x = gate_blocks(params["w_ih_l1"])   # (H, H)
    i1h, f1h, g1h, o1h = gate_blocks(params["w_hh_l1"])   # (H, H)

    zD = jnp.zeros((D, H), jnp.float32)
    zH = jnp.zeros((H, H), jnp.float32)

    # layer-0 input projection, stacked columns (layer-1 positions are zero)
    wih0s = jnp.concatenate([i0x, zD, f0x, zD, o0x, zD, g0x, zD],
                            axis=1).astype(jnp.bfloat16)              # (D, 8H)

    # fused recurrent RHS: rows [0:H] multiply h0, rows [H:2H] multiply h1
    wr_top = jnp.concatenate([i0h, i1x, f0h, f1x, o0h, o1x, g0h, g1x], axis=1)
    wr_bot = jnp.concatenate([zH, i1h, zH, f1h, zH, o1h, zH, g1h], axis=1)
    wr = jnp.concatenate([wr_top, wr_bot], axis=0).astype(jnp.bfloat16)  # (2H, 8H)

    # combined biases (b_ih + b_hh), stacked per gate block
    b0 = (params["b_ih_l0"] + params["b_hh_l0"]).astype(jnp.float32)
    b1 = (params["b_ih_l1"] + params["b_hh_l1"]).astype(jnp.float32)
    bi0, bf0, bg0, bo0 = b0[:H], b0[H:2 * H], b0[2 * H:3 * H], b0[3 * H:]
    bi1, bf1, bg1, bo1 = b1[:H], b1[H:2 * H], b1[2 * H:3 * H], b1[3 * H:]
    bs = jnp.concatenate([bi0, bi1, bf0, bf1, bo0, bo1, bg0, bg1]
                         ).reshape(1, 8 * H).astype(jnp.float32)       # (1, 8H)

    wc = params["w_fc"].T.astype(jnp.bfloat16)                         # (H, C)
    bc = params["b_fc"].reshape(1, -1).astype(jnp.float32)             # (1, C)
    return wih0s, wr, bs, wc, bc


def _choose_time_tile(B, T):
    """Pick the time tile TT: whole sequence for tiny problems, otherwise a multiple
    of 8 aiming for B*TT >= 256 MXU rows (>=128 suffices on v5e), capped to bound the
    unrolled recurrence and the (B, TT, 8H) gin scratch."""
    if B * T <= 512 or T <= 8:
        return T
    tt = -(-256 // B)                               # ceil(256 / B)
    tt = max(8, min(64, ((tt + 7) // 8) * 8))
    return min(tt, ((T + 7) // 8) * 8)


def lstm_forward(x, params, time_tile=None):
    """x: (B, T, D) float32. Returns (B, n_class) float32."""
    B, T, D = x.shape
    H = params["w_hh_l0"].shape[1]
    C = params["w_fc"].shape[0]

    wih0s, wr, bs, wc, bc = prepare_kernel_params(params)

    TT = time_tile if time_tile is not None else _choose_time_tile(B, T)
    TT = min(max(int(TT), 1), T)
    if TT != T:
        TT = max(8, (TT // 8) * 8)                  # tiled path needs a multiple of 8
        if TT >= T:
            TT = T

    n_tiles = (T + TT - 1) // TT
    t_pad = n_tiles * TT
    padded = t_pad != T
    if padded:
        x = jnp.pad(x, ((0, 0), (0, t_pad - T), (0, 0)))

    kernel = functools.partial(_lstm_kernel, seq_len=T, padded=padded)

    grid_spec = pltpu.PrefetchScalarGridSpec(
        num_scalar_prefetch=0,
        grid=(n_tiles,),
        in_specs=[
            pl.BlockSpec((B, TT, D), lambda t: (0, t, 0)),      # x time tile (pipelined DMA)
            pl.BlockSpec((D, 8 * H), lambda t: (0, 0)),         # wih0 stacked (resident)
            pl.BlockSpec((2 * H, 8 * H), lambda t: (0, 0)),     # fused recurrent weights
            pl.BlockSpec((1, 8 * H), lambda t: (0, 0)),         # stacked biases
            pl.BlockSpec((H, C), lambda t: (0, 0)),             # classifier weight
            pl.BlockSpec((1, C), lambda t: (0, 0)),             # classifier bias
        ],
        out_specs=pl.BlockSpec((B, C), lambda t: (0, 0)),
        scratch_shapes=[pltpu.VMEM((B, 2 * H), jnp.float32)] * 2       # h, c (stacked)
                       + [pltpu.VMEM((B, TT, 8 * H), jnp.float32)],    # gin tile
    )

    return pl.pallas_call(
        kernel,
        out_shape=jax.ShapeDtypeStruct((B, C), jnp.float32),
        grid_spec=grid_spec,
        compiler_params=pltpu.CompilerParams(
            dimension_semantics=("arbitrary",)),    # time axis carries state -> sequential
    )(x, wih0s, wr, bs, wc, bc)


def init_params(key, in_dim, hidden_dim, n_class):
    """PyTorch-layout parameters mirroring the module's init:
    orthogonal LSTM weights, 0.01 LSTM biases, small-uniform classifier."""
    H = hidden_dim
    ks = jax.random.split(key, 5)
    ortho = jax.nn.initializers.orthogonal()
    return {
        "w_ih_l0": ortho(ks[0], (4 * H, in_dim), jnp.float32),
        "w_hh_l0": ortho(ks[1], (4 * H, H), jnp.float32),
        "b_ih_l0": jnp.full((4 * H,), 0.01, jnp.float32),
        "b_hh_l0": jnp.full((4 * H,), 0.01, jnp.float32),
        "w_ih_l1": ortho(ks[2], (4 * H, H), jnp.float32),
        "w_hh_l1": ortho(ks[3], (4 * H, H), jnp.float32),
        "b_ih_l1": jnp.full((4 * H,), 0.01, jnp.float32),
        "b_hh_l1": jnp.full((4 * H,), 0.01, jnp.float32),
        "w_fc": jax.random.uniform(ks[4], (n_class, H), jnp.float32, -0.1, 0.1),
        "b_fc": jnp.full((n_class,), 0.01, jnp.float32),
    }


def lstm_forward_ref(x, params):
    """Pure-JAX f32 reference of the PyTorch forward (gate order i,f,g,o)."""
    B = x.shape[0]
    H = params["w_hh_l0"].shape[1]

    def cell(x_t, h, c, w_ih, w_hh, b_ih, b_hh):
        gates = x_t @ w_ih.T + b_ih + h @ w_hh.T + b_hh
        i = jax.nn.sigmoid(gates[:, :H])
        f = jax.nn.sigmoid(gates[:, H:2 * H])
        g = jnp.tanh(gates[:, 2 * H:3 * H])
        o = jax.nn.sigmoid(gates[:, 3 * H:])
        c_new = f * c + i * g
        return o * jnp.tanh(c_new), c_new

    def scan_step(carry, x_t):
        h0, c0, h1, c1 = carry
        h0, c0 = cell(x_t, h0, c0, params["w_ih_l0"], params["w_hh_l0"],
                      params["b_ih_l0"], params["b_hh_l0"])
        h1, c1 = cell(h0, h1, c1, params["w_ih_l1"], params["w_hh_l1"],
                      params["b_ih_l1"], params["b_hh_l1"])
        return (h0, c0, h1, c1), None

    z = jnp.zeros((B, H), jnp.float32)
    (_, _, h1, _), _ = lax.scan(scan_step, (z, z, z, z), jnp.transpose(x, (1, 0, 2)))
    return h1 @ params["w_fc"].T + params["b_fc"]


if __name__ == "__main__":
    B, T, D = 8, 16, 16        # batch, seq_len, in_dim
    H, C = 32, 2               # hidden_dim, n_class

    key = jax.random.PRNGKey(0)
    kx, kp = jax.random.split(key)
    x = jax.random.normal(kx, (B, T, D), jnp.float32)
    params = init_params(kp, D, H, C)

    ref = jax.block_until_ready(lstm_forward_ref(x, params))

    # 1) auto time tile: whole sequence in one tile (B*TT = 128 MXU rows here)
    out1 = jax.block_until_ready(lstm_forward(x, params))
    assert out1.shape == (B, C), out1.shape
    assert jnp.allclose(out1, ref, atol=5e-2, rtol=5e-2), (out1, ref)

    # 2) multi-tile: exercises cross-tile state carry + skewed layer-1 catch-up
    out2 = jax.block_until_ready(lstm_forward(x, params, time_tile=8))
    assert jnp.allclose(out2, ref, atol=5e-2, rtol=5e-2), (out2, ref)

    # 3) padded tail: T not a multiple of the tile -> masked trailing steps
    T3 = 13
    x3 = jax.random.normal(jax.random.PRNGKey(1), (B, T3, D), jnp.float32)
    ref3 = jax.block_until_ready(lstm_forward_ref(x3, params))
    out3 = jax.block_until_ready(lstm_forward(x3, params, time_tile=8))
    assert jnp.allclose(out3, ref3, atol=5e-2, rtol=5e-2), (out3, ref3)

    print("KERNEL_OK")
</pallas_src>

<mosaic_0001>
module attributes {stable_mosaic.version = 11 : i64} {
  func.func @_lstm_kernel(%arg0: i32, %arg1: memref<8x16x16xf32, #tpu.memory_space<vmem>>, %arg2: memref<16x256xbf16, #tpu.memory_space<vmem>>, %arg3: memref<64x256xbf16, #tpu.memory_space<vmem>>, %arg4: memref<1x256xf32, #tpu.memory_space<vmem>>, %arg5: memref<32x2xbf16, #tpu.memory_space<vmem>>, %arg6: memref<1x2xf32, #tpu.memory_space<vmem>>, %arg7: memref<8x2xf32, #tpu.memory_space<vmem>>, %arg8: memref<8x64xf32, #tpu.memory_space<vmem>>, %arg9: memref<8x64xf32, #tpu.memory_space<vmem>>, %arg10: memref<8x16x256xf32, #tpu.memory_space<vmem>>) attributes {dimension_semantics = [#tpu.dimension_semantics<arbitrary>], iteration_bounds = array<i64: 1>, scalar_prefetch = 0 : i64, scratch_operands = 3 : i64, tpu.core_type = #tpu.core_type<tc>, window_params = [{transform_indices = @transform_0, window_bounds = array<i64: 8, 16, 16>}, {pipeline_mode = #tpu.pipeline_mode<synchronous>, transform_indices = @transform_1, window_bounds = array<i64: 16, 256>}, {pipeline_mode = #tpu.pipeline_mode<synchronous>, transform_indices = @transform_2, window_bounds = array<i64: 64, 256>}, {pipeline_mode = #tpu.pipeline_mode<synchronous>, transform_indices = @transform_3, window_bounds = array<i64: 1, 256>}, {pipeline_mode = #tpu.pipeline_mode<synchronous>, transform_indices = @transform_4, window_bounds = array<i64: 32, 2>}, {pipeline_mode = #tpu.pipeline_mode<synchronous>, transform_indices = @transform_5, window_bounds = array<i64: 1, 2>}, {pipeline_mode = #tpu.pipeline_mode<synchronous>, transform_indices = @transform_6, window_bounds = array<i64: 8, 2>}]} {
    %c0_i32 = arith.constant 0 : i32
    %0 = arith.cmpi eq, %arg0, %c0_i32 : i32
    %1 = arith.extui %0 : i1 to i32
    %c0_i32_0 = arith.constant 0 : i32
    %2 = arith.cmpi ne, %1, %c0_i32_0 : i32
    scf.if %2 {
      %cst_88 = arith.constant 0.000000e+00 : f32
      %365 = vector.broadcast %cst_88 : f32 to vector<8x64xf32>
      %c0_89 = arith.constant 0 : index
      %c0_90 = arith.constant 0 : index
      %366 = vector.load %arg8[%c0_89, %c0_90] : memref<8x64xf32, #tpu.memory_space<vmem>>, vector<8x64xf32>
      tpu.vector_store %arg8[%c0_89, %c0_90], %365 {strides = array<i32>} : memref<8x64xf32, #tpu.memory_space<vmem>>, vector<8x64xf32>,
      %cst_91 = arith.constant 0.000000e+00 : f32
      %367 = vector.broadcast %cst_91 : f32 to vector<8x64xf32>
      %c0_92 = arith.constant 0 : index
      %c0_93 = arith.constant 0 : index
      %368 = vector.load %arg9[%c0_92, %c0_93] : memref<8x64xf32, #tpu.memory_space<vmem>>, vector<8x64xf32>
      tpu.vector_store %arg9[%c0_92, %c0_93], %367 {strides = array<i32>} : memref<8x64xf32, #tpu.memory_space<vmem>>, vector<8x64xf32>,
    } else {
    }
    %c0 = arith.constant 0 : index
    %c0_1 = arith.constant 0 : index
    %3 = vector.load %arg3[%c0, %c0_1] : memref<64x256xbf16, #tpu.memory_space<vmem>>, vector<64x256xbf16>
    %c0_2 = arith.constant 0 : index
    %c0_3 = arith.constant 0 : index
    %c0_4 = arith.constant 0 : index
    %4 = vector.load %arg1[%c0_2, %c0_3, %c0_4] : memref<8x16x16xf32, #tpu.memory_space<vmem>>, vector<8x16x16xf32>
    %5 = arith.truncf %4 : vector<8x16x16xf32> to vector<8x16x16xbf16>
    %6 = vector.shape_cast %5 : vector<8x16x16xbf16> to vector<128x16xbf16>
    %c0_5 = arith.constant 0 : index
    %c0_6 = arith.constant 0 : index
    %7 = vector.load %arg2[%c0_5, %c0_6] : memref<16x256xbf16, #tpu.memory_space<vmem>>, vector<16x256xbf16>
    %cst = arith.constant dense<0.000000e+00> : vector<128x256xf32>
    %8 = tpu.matmul %6, %7, %cst {dimension_numbers = #tpu.dot_dimension_numbers<[1], [0], [0], [1], [0, 0, 1, 1], [], []>} : vector<128x16xbf16>, vector<16x256xbf16>, vector<128x256xf32> -> vector<128x256xf32>
    %c0_7 = arith.constant 0 : index
    %c0_8 = arith.constant 0 : index
    %9 = vector.load %arg4[%c0_7, %c0_8] : memref<1x256xf32, #tpu.memory_space<vmem>>, vector<1x256xf32>
    %10 = vector.broadcast %9 : vector<1x256xf32> to vector<128x256xf32>
    %11 = arith.addf %8, %10 : vector<128x256xf32>
    %12 = vector.shape_cast %11 : vector<128x256xf32> to vector<8x16x256xf32>
    %c0_9 = arith.constant 0 : index
    %c0_10 = arith.constant 0 : index
    %c0_11 = arith.constant 0 : index
    %13 = vector.load %arg10[%c0_9, %c0_10, %c0_11] : memref<8x16x256xf32, #tpu.memory_space<vmem>>, vector<8x16x256xf32>
    tpu.vector_store %arg10[%c0_9, %c0_10, %c0_11], %12 {strides = array<i32>} : memref<8x16x256xf32, #tpu.memory_space<vmem>>, vector<8x16x256xf32>,
    %c0_12 = arith.constant 0 : index
    %c0_13 = arith.constant 0 : index
    %14 = vector.load %arg8[%c0_12, %c0_13] : memref<8x64xf32, #tpu.memory_space<vmem>>, vector<8x64xf32>
    %c0_14 = arith.constant 0 : index
    %c0_15 = arith.constant 0 : index
    %15 = vector.load %arg9[%c0_14, %c0_15] : memref<8x64xf32, #tpu.memory_space<vmem>>, vector<8x64xf32>
    %16 = tpu.iota {dimensions = array<i32: 1>} : vector<8x64xi32>
    %c32_i32 = arith.constant 32 : i32
    %17 = vector.broadcast %c32_i32 : i32 to vector<8x64xi32>
    %18 = arith.cmpi slt, %16, %17 : vector<8x64xi32>
    %19 = arith.truncf %14 : vector<8x64xf32> to vector<8x64xbf16>
    %cst_16 = arith.constant dense<0.000000e+00> : vector<8x256xf32>
    %20 = tpu.matmul %19, %3, %cst_16 {dimension_numbers = #tpu.dot_dimension_numbers<[1], [0], [0], [1], [0, 0, 1, 1], [], []>} : vector<8x64xbf16>, vector<64x256xbf16>, vector<8x256xf32> -> vector<8x256xf32>
    %c0_17 = arith.constant 0 : index
    %c0_18 = arith.constant 0 : index
    %c0_19 = arith.constant 0 : index
    %21 = vector.load %arg10[%c0_17, %c0_18, %c0_19] : memref<8x16x256xf32, #tpu.memory_space<vmem>>, vector<8x1x256xf32>
    %22 = vector.shape_cast %21 : vector<8x1x256xf32> to vector<8x256xf32>
    %23 = arith.addf %22, %20 : vector<8x256xf32>
    %24 = vector.extract_strided_slice %23 {offsets = [0, 0], sizes = [8, 192], strides = [1, 1]} : vector<8x256xf32> to vector<8x192xf32>
    %25 = arith.negf %24 : vector<8x192xf32>
    %26 = math.exp %25 : vector<8x192xf32>
    %cst_20 = arith.constant 1.000000e+00 : f32
    %27 = vector.broadcast %cst_20 : f32 to vector<8x192xf32>
    %28 = arith.addf %27, %26 : vector<8x192xf32>
    %29 = arith.divf %27, %28 : vector<8x192xf32>
    %30 = vector.extract_strided_slice %23 {offsets = [0, 192], sizes = [8, 64], strides = [1, 1]} : vector<8x256xf32> to vector<8x64xf32>
    %31 = math.tanh %30 : vector<8x64xf32>
    %32 = vector.extract_strided_slice %29 {offsets = [0, 64], sizes = [8, 64], strides = [1, 1]} : vector<8x192xf32> to vector<8x64xf32>
    %33 = arith.mulf %32, %15 : vector<8x64xf32>
    %34 = vector.extract_strided_slice %29 {offsets = [0, 0], sizes = [8, 64], strides = [1, 1]} : vector<8x192xf32> to vector<8x64xf32>
    %35 = arith.mulf %34, %31 : vector<8x64xf32>
    %36 = arith.addf %33, %35 : vector<8x64xf32>
    %37 = vector.extract_strided_slice %29 {offsets = [0, 128], sizes = [8, 64], strides = [1, 1]} : vector<8x192xf32> to vector<8x64xf32>
    %38 = math.tanh %36 : vector<8x64xf32>
    %39 = arith.mulf %37, %38 : vector<8x64xf32>
    %c0_i32_21 = arith.constant 0 : i32
    %40 = arith.cmpi sgt, %arg0, %c0_i32_21 : i32
    %41 = vector.broadcast %40 : i1 to vector<8x64xi1>
    %42 = arith.ori %18, %41 : vector<8x64xi1>
    %43 = arith.select %42, %39, %14 : vector<8x64xi1>, vector<8x64xf32>
    %44 = arith.select %42, %36, %15 : vector<8x64xi1>, vector<8x64xf32>
    %45 = arith.truncf %43 : vector<8x64xf32> to vector<8x64xbf16>
    %cst_22 = arith.constant dense<0.000000e+00> : vector<8x256xf32>
    %46 = tpu.matmul %45, %3, %cst_22 {dimension_numbers = #tpu.dot_dimension_numbers<[1], [0], [0], [1], [0, 0, 1, 1], [], []>} : vector<8x64xbf16>, vector<64x256xbf16>, vector<8x256xf32> -> vector<8x256xf32>
    %c0_23 = arith.constant 0 : index
    %c1 = arith.constant 1 : index
    %c0_24 = arith.constant 0 : index
    %47 = vector.load %arg10[%c0_23, %c1, %c0_24] : memref<8x16x256xf32, #tpu.memory_space<vmem>>, vector<8x1x256xf32>
    %48 = vector.shape_cast %47 : vector<8x1x256xf32> to vector<8x256xf32>
    %49 = arith.addf %48, %46 : vector<8x256xf32>
    %50 = vector.extract_strided_slice %49 {offsets = [0, 0], sizes = [8, 192], strides = [1, 1]} : vector<8x256xf32> to vector<8x192xf32>
    %51 = arith.negf %50 : vector<8x192xf32>
    %52 = math.exp %51 : vector<8x192xf32>
    %cst_25 = arith.constant 1.000000e+00 : f32
    %53 = vector.broadcast %cst_25 : f32 to vector<8x192xf32>
    %54 = arith.addf %53, %52 : vector<8x192xf32>
    %55 = arith.divf %53, %54 : vector<8x192xf32>
    %56 = vector.extract_strided_slice %49 {offsets = [0, 192], sizes = [8, 64], strides = [1, 1]} : vector<8x256xf32> to vector<8x64xf32>
    %57 = math.tanh %56 : vector<8x64xf32>
    %58 = vector.extract_strided_slice %55 {offsets = [0, 64], sizes = [8, 64], strides = [1, 1]} : vector<8x192xf32> to vector<8x64xf32>
    %59 = arith.mulf %58, %44 : vector<8x64xf32>
    %60 = vector.extract_strided_slice %55 {offsets = [0, 0], sizes = [8, 64], strides = [1, 1]} : vector<8x192xf32> to vector<8x64xf32>
    %61 = arith.mulf %60, %57 : vector<8x64xf32>
    %62 = arith.addf %59, %61 : vector<8x64xf32>
    %63 = vector.extract_strided_slice %55 {offsets = [0, 128], sizes = [8, 64], strides = [1, 1]} : vector<8x192xf32> to vector<8x64xf32>
    %64 = math.tanh %62 : vector<8x64xf32>
    %65 = arith.mulf %63, %64 : vector<8x64xf32>
    %66 = arith.truncf %65 : vector<8x64xf32> to vector<8x64xbf16>
    %cst_26 = arith.constant dense<0.000000e+00> : vector<8x256xf32>
    %67 = tpu.matmul %66, %3, %cst_26 {dimension_numbers = #tpu.dot_dimension_numbers<[1], [0], [0], [1], [0, 0, 1, 1], [], []>} : vector<8x64xbf16>, vector<64x256xbf16>, vector<8x256xf32> -> vector<8x256xf32>
    %c0_27 = arith.constant 0 : index
    %c2 = arith.constant 2 : index
    %c0_28 = arith.constant 0 : index
    %68 = vector.load %arg10[%c0_27, %c2, %c0_28] : memref<8x16x256xf32, #tpu.memory_space<vmem>>, vector<8x1x256xf32>
    %69 = vector.shape_cast %68 : vector<8x1x256xf32> to vector<8x256xf32>
    %70 = arith.addf %69, %67 : vector<8x256xf32>
    %71 = vector.extract_strided_slice %70 {offsets = [0, 0], sizes = [8, 192], strides = [1, 1]} : vector<8x256xf32> to vector<8x192xf32>
    %72 = arith.negf %71 : vector<8x192xf32>
    %73 = math.exp %72 : vector<8x192xf32>
    %cst_29 = arith.constant 1.000000e+00 : f32
    %74 = vector.broadcast %cst_29 : f32 to vector<8x192xf32>
    %75 = arith.addf %74, %73 : vector<8x192xf32>
    %76 = arith.divf %74, %75 : vector<8x192xf32>
    %77 = vector.extract_strided_slice %70 {offsets = [0, 192], sizes = [8, 64], strides = [1, 1]} : vector<8x256xf32> to vector<8x64xf32>
    %78 = math.tanh %77 : vector<8x64xf32>
    %79 = vector.extract_strided_slice %76 {offsets = [0, 64], sizes = [8, 64], strides = [1, 1]} : vector<8x192xf32> to vector<8x64xf32>
    %80 = arith.mulf %79, %62 : vector<8x64xf32>
    %81 = vector.extract_strided_slice %76 {offsets = [0, 0], sizes = [8, 64], strides = [1, 1]} : vector<8x192xf32> to vector<8x64xf32>
    %82 = arith.mulf %81, %78 : vector<8x64xf32>
    %83 = arith.addf %80, %82 : vector<8x64xf32>
    %84 = vector.extract_strided_slice %76 {offsets = [0, 128], sizes = [8, 64], strides = [1, 1]} : vector<8x192xf32> to vector<8x64xf32>
    %85 = math.tanh %83 : vector<8x64xf32>
    %86 = arith.mulf %84, %85 : vector<8x64xf32>
    %87 = arith.truncf %86 : vector<8x64xf32> to vector<8x64xbf16>
    %cst_30 = arith.constant dense<0.000000e+00> : vector<8x256xf32>
    %88 = tpu.matmul %87, %3, %cst_30 {dimension_numbers = #tpu.dot_dimension_numbers<[1], [0], [0], [1], [0, 0, 1, 1], [], []>} : vector<8x64xbf16>, vector<64x256xbf16>, vector<8x256xf32> -> vector<8x256xf32>
    %c0_31 = arith.constant 0 : index
    %c3 = arith.constant 3 : index
    %c0_32 = arith.constant 0 : index
    %89 = vector.load %arg10[%c0_31, %c3, %c0_32] : memref<8x16x256xf32, #tpu.memory_space<vmem>>, vector<8x1x256xf32>
    %90 = vector.shape_cast %89 : vector<8x1x256xf32> to vector<8x256xf32>
    %91 = arith.addf %90, %88 : vector<8x256xf32>
    %92 = vector.extract_strided_slice %91 {offsets = [0, 0], sizes = [8, 192], strides = [1, 1]} : vector<8x256xf32> to vector<8x192xf32>
    %93 = arith.negf %92 : vector<8x192xf32>
    %94 = math.exp %93 : vector<8x192xf32>
    %cst_33 = arith.constant 1.000000e+00 : f32
    %95 = vector.broadcast %cst_33 : f32 to vector<8x192xf32>
    %96 = arith.addf %95, %94 : vector<8x192xf32>
    %97 = arith.divf %95, %96 : vector<8x192xf32>
    %98 = vector.extract_strided_slice %91 {offsets = [0, 192], sizes = [8, 64], strides = [1, 1]} : vector<8x256xf32> to vector<8x64xf32>
    %99 = math.tanh %98 : vector<8x64xf32>
    %100 = vector.extract_strided_slice %97 {offsets = [0, 64], sizes = [8, 64], strides = [1, 1]} : vector<8x192xf32> to vector<8x64xf32>
    %101 = arith.mulf %100, %83 : vector<8x64xf32>
    %102 = vector.extract_strided_slice %97 {offsets = [0, 0], sizes = [8, 64], strides = [1, 1]} : vector<8x192xf32> to vector<8x64xf32>
    %103 = arith.mulf %102, %99 : vector<8x64xf32>
    %104 = arith.addf %101, %103 : vector<8x64xf32>
    %105 = vector.extract_strided_slice %97 {offsets = [0, 128], sizes = [8, 64], strides = [1, 1]} : vector<8x192xf32> to vector<8x64xf32>
    %106 = math.tanh %104 : vector<8x64xf32>
    %107 = arith.mulf %105, %106 : vector<8x64xf32>
    %108 = arith.truncf %107 : vector<8x64xf32> to vector<8x64xbf16>
    %cst_34 = arith.constant dense<0.000000e+00> : vector<8x256xf32>
    %109 = tpu.matmul %108, %3, %cst_34 {dimension_numbers = #tpu.dot_dimension_numbers<[1], [0], [0], [1], [0, 0, 1, 1], [], []>} : vector<8x64xbf16>, vector<64x256xbf16>, vector<8x256xf32> -> vector<8x256xf32>
    %c0_35 = arith.constant 0 : index
    %c4 = arith.constant 4 : index
    %c0_36 = arith.constant 0 : index
    %110 = vector.load %arg10[%c0_35, %c4, %c0_36] : memref<8x16x256xf32, #tpu.memory_space<vmem>>, vector<8x1x256xf32>
    %111 = vector.shape_cast %110 : vector<8x1x256xf32> to vector<8x256xf32>
    %112 = arith.addf %111, %109 : vector<8x256xf32>
    %113 = vector.extract_strided_slice %112 {offsets = [0, 0], sizes = [8, 192], strides = [1, 1]} : vector<8x256xf32> to vector<8x192xf32>
    %114 = arith.negf %113 : vector<8x192xf32>
    %115 = math.exp %114 : vector<8x192xf32>
    %cst_37 = arith.constant 1.000000e+00 : f32
    %116 = vector.broadcast %cst_37 : f32 to vector<8x192xf32>
    %117 = arith.addf %116, %115 : vector<8x192xf32>
    %118 = arith.divf %116, %117 : vector<8x192xf32>
    %119 = vector.extract_strided_slice %112 {offsets = [0, 192], sizes = [8, 64], strides = [1, 1]} : vector<8x256xf32> to vector<8x64xf32>
    %120 = math.tanh %119 : vector<8x64xf32>
    %121 = vector.extract_strided_slice %118 {offsets = [0, 64], sizes = [8, 64], strides = [1, 1]} : vector<8x192xf32> to vector<8x64xf32>
    %122 = arith.mulf %121, %104 : vector<8x64xf32>
    %123 = vector.extract_strided_slice %118 {offsets = [0, 0], sizes = [8, 64], strides = [1, 1]} : vector<8x192xf32> to vector<8x64xf32>
    %124 = arith.mulf %123, %120 : vector<8x64xf32>
    %125 = arith.addf %122, %124 : vector<8x64xf32>
    %126 = vector.extract_strided_slice %118 {offsets = [0, 128], sizes = [8, 64], strides = [1, 1]} : vector<8x192xf32> to vector<8x64xf32>
    %127 = math.tanh %125 : vector<8x64xf32>
    %128 = arith.mulf %126, %127 : vector<8x64xf32>
    %129 = arith.truncf %128 : vector<8x64xf32> to vector<8x64xbf16>
    %cst_38 = arith.constant dense<0.000000e+00> : vector<8x256xf32>
    %130 = tpu.matmul %129, %3, %cst_38 {dimension_numbers = #tpu.dot_dimension_numbers<[1], [0], [0], [1], [0, 0, 1, 1], [], []>} : vector<8x64xbf16>, vector<64x256xbf16>, vector<8x256xf32> -> vector<8x256xf32>
    %c0_39 = arith.constant 0 : index
    %c5 = arith.constant 5 : index
    %c0_40 = arith.constant 0 : index
    %131 = vector.load %arg10[%c0_39, %c5, %c0_40] : memref<8x16x256xf32, #tpu.memory_space<vmem>>, vector<8x1x256xf32>
    %132 = vector.shape_cast %131 : vector<8x1x256xf32> to vector<8x256xf32>
    %133 = arith.addf %132, %130 : vector<8x256xf32>
    %134 = vector.extract_strided_slice %133 {offsets = [0, 0], sizes = [8, 192], strides = [1, 1]} : vector<8x256xf32> to vector<8x192xf32>
    %135 = arith.negf %134 : vector<8x192xf32>
    %136 = math.exp %135 : vector<8x192xf32>
    %cst_41 = arith.constant 1.000000e+00 : f32
    %137 = vector.broadcast %cst_41 : f32 to vector<8x192xf32>
    %138 = arith.addf %137, %136 : vector<8x192xf32>
    %139 = arith.divf %137, %138 : vector<8x192xf32>
    %140 = vector.extract_strided_slice %133 {offsets = [0, 192], sizes = [8, 64], strides = [1, 1]} : vector<8x256xf32> to vector<8x64xf32>
    %141 = math.tanh %140 : vector<8x64xf32>
    %142 = vector.extract_strided_slice %139 {offsets = [0, 64], sizes = [8, 64], strides = [1, 1]} : vector<8x192xf32> to vector<8x64xf32>
    %143 = arith.mulf %142, %125 : vector<8x64xf32>
    %144 = vector.extract_strided_slice %139 {offsets = [0, 0], sizes = [8, 64], strides = [1, 1]} : vector<8x192xf32> to vector<8x64xf32>
    %145 = arith.mulf %144, %141 : vector<8x64xf32>
    %146 = arith.addf %143, %145 : vector<8x64xf32>
    %147 = vector.extract_strided_slice %139 {offsets = [0, 128], sizes = [8, 64], strides = [1, 1]} : vector<8x192xf32> to vector<8x64xf32>
    %148 = math.tanh %146 : vector<8x64xf32>
    %149 = arith.mulf %147, %148 : vector<8x64xf32>
    %150 = arith.truncf %149 : vector<8x64xf32> to vector<8x64xbf16>
    %cst_42 = arith.constant dense<0.000000e+00> : vector<8x256xf32>
    %151 = tpu.matmul %150, %3, %cst_42 {dimension_numbers = #tpu.dot_dimension_numbers<[1], [0], [0], [1], [0, 0, 1, 1], [], []>} : vector<8x64xbf16>, vector<64x256xbf16>, vector<8x256xf32> -> vector<8x256xf32>
    %c0_43 = arith.constant 0 : index
    %c6 = arith.constant 6 : index
    %c0_44 = arith.constant 0 : index
    %152 = vector.load %arg10[%c0_43, %c6, %c0_44] : memref<8x16x256xf32, #tpu.memory_space<vmem>>, vector<8x1x256xf32>
    %153 = vector.shape_cast %152 : vector<8x1x256xf32> to vector<8x256xf32>
    %154 = arith.addf %153, %151 : vector<8x256xf32>
    %155 = vector.extract_strided_slice %154 {offsets = [0, 0], sizes = [8, 192], strides = [1, 1]} : vector<8x256xf32> to vector<8x192xf32>
    %156 = arith.negf %155 : vector<8x192xf32>
    %157 = math.exp %156 : vector<8x192xf32>
    %cst_45 = arith.constant 1.000000e+00 : f32
    %158 = vector.broadcast %cst_45 : f32 to vector<8x192xf32>
    %159 = arith.addf %158, %157 : vector<8x192xf32>
    %160 = arith.divf %158, %159 : vector<8x192xf32>
    %161 = vector.extract_strided_slice %154 {offsets = [0, 192], sizes = [8, 64], strides = [1, 1]} : vector<8x256xf32> to vector<8x64xf32>
    %162 = math.tanh %161 : vector<8x64xf32>
    %163 = vector.extract_strided_slice %160 {offsets = [0, 64], sizes = [8, 64], strides = [1, 1]} : vector<8x192xf32> to vector<8x64xf32>
    %164 = arith.mulf %163, %146 : vector<8x64xf32>
    %165 = vector.extract_strided_slice %160 {offsets = [0, 0], sizes = [8, 64], strides = [1, 1]} : vector<8x192xf32> to vector<8x64xf32>
    %166 = arith.mulf %165, %162 : vector<8x64xf32>
    %167 = arith.addf %164, %166 : vector<8x64xf32>
    %168 = vector.extract_strided_slice %160 {offsets = [0, 128], sizes = [8, 64], strides = [1, 1]} : vector<8x192xf32> to vector<8x64xf32>
    %169 = math.tanh %167 : vector<8x64xf32>
    %170 = arith.mulf %168, %169 : vector<8x64xf32>
    %171 = arith.truncf %170 : vector<8x64xf32> to vector<8x64xbf16>
    %cst_46 = arith.constant dense<0.000000e+00> : vector<8x256xf32>
    %172 = tpu.matmul %171, %3, %cst_46 {dimension_numbers = #tpu.dot_dimension_numbers<[1], [0], [0], [1], [0, 0, 1, 1], [], []>} : vector<8x64xbf16>, vector<64x256xbf16>, vector<8x256xf32> -> vector<8x256xf32>
    %c0_47 = arith.constant 0 : index
    %c7 = arith.constant 7 : index
    %c0_48 = arith.constant 0 : index
    %173 = vector.load %arg10[%c0_47, %c7, %c0_48] : memref<8x16x256xf32, #tpu.memory_space<vmem>>, vector<8x1x256xf32>
    %174 = vector.shape_cast %173 : vector<8x1x256xf32> to vector<8x256xf32>
    %175 = arith.addf %174, %172 : vector<8x256xf32>
    %176 = vector.extract_strided_slice %175 {offsets = [0, 0], sizes = [8, 192], strides = [1, 1]} : vector<8x256xf32> to vector<8x192xf32>
    %177 = arith.negf %176 : vector<8x192xf32>
    %178 = math.exp %177 : vector<8x192xf32>
    %cst_49 = arith.constant 1.000000e+00 : f32
    %179 = vector.broadcast %cst_49 : f32 to vector<8x192xf32>
    %180 = arith.addf %179, %178 : vector<8x192xf32>
    %181 = arith.divf %179, %180 : vector<8x192xf32>
    %182 = vector.extract_strided_slice %175 {offsets = [0, 192], sizes = [8, 64], strides = [1, 1]} : vector<8x256xf32> to vector<8x64xf32>
    %183 = math.tanh %182 : vector<8x64xf32>
    %184 = vector.extract_strided_slice %181 {offsets = [0, 64], sizes = [8, 64], strides = [1, 1]} : vector<8x192xf32> to vector<8x64xf32>
    %185 = arith.mulf %184, %167 : vector<8x64xf32>
    %186 = vector.extract_strided_slice %181 {offsets = [0, 0], sizes = [8, 64], strides = [1, 1]} : vector<8x192xf32> to vector<8x64xf32>
    %187 = arith.mulf %186, %183 : vector<8x64xf32>
    %188 = arith.addf %185, %187 : vector<8x64xf32>
    %189 = vector.extract_strided_slice %181 {offsets = [0, 128], sizes = [8, 64], strides = [1, 1]} : vector<8x192xf32> to vector<8x64xf32>
    %190 = math.tanh %188 : vector<8x64xf32>
    %191 = arith.mulf %189, %190 : vector<8x64xf32>
    %192 = arith.truncf %191 : vector<8x64xf32> to vector<8x64xbf16>
    %cst_50 = arith.constant dense<0.000000e+00> : vector<8x256xf32>
    %193 = tpu.matmul %192, %3, %cst_50 {dimension_numbers = #tpu.dot_dimension_numbers<[1], [0], [0], [1], [0, 0, 1, 1], [], []>} : vector<8x64xbf16>, vector<64x256xbf16>, vector<8x256xf32> -> vector<8x256xf32>
    %c0_51 = arith.constant 0 : index
    %c8 = arith.constant 8 : index
    %c0_52 = arith.constant 0 : index
    %194 = vector.load %arg10[%c0_51, %c8, %c0_52] : memref<8x16x256xf32, #tpu.memory_space<vmem>>, vector<8x1x256xf32>
    %195 = vector.shape_cast %194 : vector<8x1x256xf32> to vector<8x256xf32>
    %196 = arith.addf %195, %193 : vector<8x256xf32>
    %197 = vector.extract_strided_slice %196 {offsets = [0, 0], sizes = [8, 192], strides = [1, 1]} : vector<8x256xf32> to vector<8x192xf32>
    %198 = arith.negf %197 : vector<8x192xf32>
    %199 = math.exp %198 : vector<8x192xf32>
    %cst_53 = arith.constant 1.000000e+00 : f32
    %200 = vector.broadcast %cst_53 : f32 to vector<8x192xf32>
    %201 = arith.addf %200, %199 : vector<8x192xf32>
    %202 = arith.divf %200, %201 : vector<8x192xf32>
    %203 = vector.extract_strided_slice %196 {offsets = [0, 192], sizes = [8, 64], strides = [1, 1]} : vector<8x256xf32> to vector<8x64xf32>
    %204 = math.tanh %203 : vector<8x64xf32>
    %205 = vector.extract_strided_slice %202 {offsets = [0, 64], sizes = [8, 64], strides = [1, 1]} : vector<8x192xf32> to vector<8x64xf32>
    %206 = arith.mulf %205, %188 : vector<8x64xf32>
    %207 = vector.extract_strided_slice %202 {offsets = [0, 0], sizes = [8, 64], strides = [1, 1]} : vector<8x192xf32> to vector<8x64xf32>
    %208 = arith.mulf %207, %204 : vector<8x64xf32>
    %209 = arith.addf %206, %208 : vector<8x64xf32>
    %210 = vector.extract_strided_slice %202 {offsets = [0, 128], sizes = [8, 64], strides = [1, 1]} : vector<8x192xf32> to vector<8x64xf32>
    %211 = math.tanh %209 : vector<8x64xf32>
    %212 = arith.mulf %210, %211 : vector<8x64xf32>
    %213 = arith.truncf %212 : vector<8x64xf32> to vector<8x64xbf16>
    %cst_54 = arith.constant dense<0.000000e+00> : vector<8x256xf32>
    %214 = tpu.matmul %213, %3, %cst_54 {dimension_numbers = #tpu.dot_dimension_numbers<[1], [0], [0], [1], [0, 0, 1, 1], [], []>} : vector<8x64xbf16>, vector<64x256xbf16>, vector<8x256xf32> -> vector<8x256xf32>
    %c0_55 = arith.constant 0 : index
    %c9 = arith.constant 9 : index
    %c0_56 = arith.constant 0 : index
    %215 = vector.load %arg10[%c0_55, %c9, %c0_56] : memref<8x16x256xf32, #tpu.memory_space<vmem>>, vector<8x1x256xf32>
    %216 = vector.shape_cast %215 : vector<8x1x256xf32> to vector<8x256xf32>
    %217 = arith.addf %216, %214 : vector<8x256xf32>
    %218 = vector.extract_strided_slice %217 {offsets = [0, 0], sizes = [8, 192], strides = [1, 1]} : vector<8x256xf32> to vector<8x192xf32>
    %219 = arith.negf %218 : vector<8x192xf32>
    %220 = math.exp %219 : vector<8x192xf32>
    %cst_57 = arith.constant 1.000000e+00 : f32
    %221 = vector.broadcast %cst_57 : f32 to vector<8x192xf32>
    %222 = arith.addf %221, %220 : vector<8x192xf32>
    %223 = arith.divf %221, %222 : vector<8x192xf32>
    %224 = vector.extract_strided_slice %217 {offsets = [0, 192], sizes = [8, 64], strides = [1, 1]} : vector<8x256xf32> to vector<8x64xf32>
    %225 = math.tanh %224 : vector<8x64xf32>
    %226 = vector.extract_strided_slice %223 {offsets = [0, 64], sizes = [8, 64], strides = [1, 1]} : vector<8x192xf32> to vector<8x64xf32>
    %227 = arith.mulf %226, %209 : vector<8x64xf32>
    %228 = vector.extract_strided_slice %223 {offsets = [0, 0], sizes = [8, 64], strides = [1, 1]} : vector<8x192xf32> to vector<8x64xf32>
    %229 = arith.mulf %228, %225 : vector<8x64xf32>
    %230 = arith.addf %227, %229 : vector<8x64xf32>
    %231 = vector.extract_strided_slice %223 {offsets = [0, 128], sizes = [8, 64], strides = [1, 1]} : vector<8x192xf32> to vector<8x64xf32>
    %232 = math.tanh %230 : vector<8x64xf32>
    %233 = arith.mulf %231, %232 : vector<8x64xf32>
    %234 = arith.truncf %233 : vector<8x64xf32> to vector<8x64xbf16>
    %cst_58 = arith.constant dense<0.000000e+00> : vector<8x256xf32>
    %235 = tpu.matmul %234, %3, %cst_58 {dimension_numbers = #tpu.dot_dimension_numbers<[1], [0], [0], [1], [0, 0, 1, 1], [], []>} : vector<8x64xbf16>, vector<64x256xbf16>, vector<8x256xf32> -> vector<8x256xf32>
    %c0_59 = arith.constant 0 : index
    %c10 = arith.constant 10 : index
    %c0_60 = arith.constant 0 : index
    %236 = vector.load %arg10[%c0_59, %c10, %c0_60] : memref<8x16x256xf32, #tpu.memory_space<vmem>>, vector<8x1x256xf32>
    %237 = vector.shape_cast %236 : vector<8x1x256xf32> to vector<8x256xf32>
    %238 = arith.addf %237, %235 : vector<8x256xf32>
    %239 = vector.extract_strided_slice %238 {offsets = [0, 0], sizes = [8, 192], strides = [1, 1]} : vector<8x256xf32> to vector<8x192xf32>
    %240 = arith.negf %239 : vector<8x192xf32>
    %241 = math.exp %240 : vector<8x192xf32>
    %cst_61 = arith.constant 1.000000e+00 : f32
    %242 = vector.broadcast %cst_61 : f32 to vector<8x192xf32>
    %243 = arith.addf %242, %241 : vector<8x192xf32>
    %244 = arith.divf %242, %243 : vector<8x192xf32>
    %245 = vector.extract_strided_slice %238 {offsets = [0, 192], sizes = [8, 64], strides = [1, 1]} : vector<8x256xf32> to vector<8x64xf32>
    %246 = math.tanh %245 : vector<8x64xf32>
    %247 = vector.extract_strided_slice %244 {offsets = [0, 64], sizes = [8, 64], strides = [1, 1]} : vector<8x192xf32> to vector<8x64xf32>
    %248 = arith.mulf %247, %230 : vector<8x64xf32>
    %249 = vector.extract_strided_slice %244 {offsets = [0, 0], sizes = [8, 64], strides = [1, 1]} : vector<8x192xf32> to vector<8x64xf32>
    %250 = arith.mulf %249, %246 : vector<8x64xf32>
    %251 = arith.addf %248, %250 : vector<8x64xf32>
    %252 = vector.extract_strided_slice %244 {offsets = [0, 128], sizes = [8, 64], strides = [1, 1]} : vector<8x192xf32> to vector<8x64xf32>
    %253 = math.tanh %251 : vector<8x64xf32>
    %254 = arith.mulf %252, %253 : vector<8x64xf32>
    %255 = arith.truncf %254 : vector<8x64xf32> to vector<8x64xbf16>
    %cst_62 = arith.constant dense<0.000000e+00> : vector<8x256xf32>
    %256 = tpu.matmul %255, %3, %cst_62 {dimension_numbers = #tpu.dot_dimension_numbers<[1], [0], [0], [1], [0, 0, 1, 1], [], []>} : vector<8x64xbf16>, vector<64x256xbf16>, vector<8x256xf32> -> vector<8x256xf32>
    %c0_63 = arith.constant 0 : index
    %c11 = arith.constant 11 : index
    %c0_64 = arith.constant 0 : index
    %257 = vector.load %arg10[%c0_63, %c11, %c0_64] : memref<8x16x256xf32, #tpu.memory_space<vmem>>, vector<8x1x256xf32>
    %258 = vector.shape_cast %257 : vector<8x1x256xf32> to vector<8x256xf32>
    %259 = arith.addf %258, %256 : vector<8x256xf32>
    %260 = vector.extract_strided_slice %259 {offsets = [0, 0], sizes = [8, 192], strides = [1, 1]} : vector<8x256xf32> to vector<8x192xf32>
    %261 = arith.negf %260 : vector<8x192xf32>
    %262 = math.exp %261 : vector<8x192xf32>
    %cst_65 = arith.constant 1.000000e+00 : f32
    %263 = vector.broadcast %cst_65 : f32 to vector<8x192xf32>
    %264 = arith.addf %263, %262 : vector<8x192xf32>
    %265 = arith.divf %263, %264 : vector<8x192xf32>
    %266 = vector.extract_strided_slice %259 {offsets = [0, 192], sizes = [8, 64], strides = [1, 1]} : vector<8x256xf32> to vector<8x64xf32>
    %267 = math.tanh %266 : vector<8x64xf32>
    %268 = vector.extract_strided_slice %265 {offsets = [0, 64], sizes = [8, 64], strides = [1, 1]} : vector<8x192xf32> to vector<8x64xf32>
    %269 = arith.mulf %268, %251 : vector<8x64xf32>
    %270 = vector.extract_strided_slice %265 {offsets = [0, 0], sizes = [8, 64], strides = [1, 1]} : vector<8x192xf32> to vector<8x64xf32>
    %271 = arith.mulf %270, %267 : vector<8x64xf32>
    %272 = arith.addf %269, %271 : vector<8x64xf32>
    %273 = vector.extract_strided_slice %265 {offsets = [0, 128], sizes = [8, 64], strides = [1, 1]} : vector<8x192xf32> to vector<8x64xf32>
    %274 = math.tanh %272 : vector<8x64xf32>
    %275 = arith.mulf %273, %274 : vector<8x64xf32>
    %276 = arith.truncf %275 : vector<8x64xf32> to vector<8x64xbf16>
    %cst_66 = arith.constant dense<0.000000e+00> : vector<8x256xf32>
    %277 = tpu.matmul %276, %3, %cst_66 {dimension_numbers = #tpu.dot_dimension_numbers<[1], [0], [0], [1], [0, 0, 1, 1], [], []>} : vector<8x64xbf16>, vector<64x256xbf16>, vector<8x256xf32> -> vector<8x256xf32>
    %c0_67 = arith.constant 0 : index
    %c12 = arith.constant 12 : index
    %c0_68 = arith.constant 0 : index
    %278 = vector.load %arg10[%c0_67, %c12, %c0_68] : memref<8x16x256xf32, #tpu.memory_space<vmem>>, vector<8x1x256xf32>
    %279 = vector.shape_cast %278 : vector<8x1x256xf32> to vector<8x256xf32>
    %280 = arith.addf %279, %277 : vector<8x256xf32>
    %281 = vector.extract_strided_slice %280 {offsets = [0, 0], sizes = [8, 192], strides = [1, 1]} : vector<8x256xf32> to vector<8x192xf32>
    %282 = arith.negf %281 : vector<8x192xf32>
    %283 = math.exp %282 : vector<8x192xf32>
    %cst_69 = arith.constant 1.000000e+00 : f32
    %284 = vector.broadcast %cst_69 : f32 to vector<8x192xf32>
    %285 = arith.addf %284, %283 : vector<8x192xf32>
    %286 = arith.divf %284, %285 : vector<8x192xf32>
    %287 = vector.extract_strided_slice %280 {offsets = [0, 192], sizes = [8, 64], strides = [1, 1]} : vector<8x256xf32> to vector<8x64xf32>
    %288 = math.tanh %287 : vector<8x64xf32>
    %289 = vector.extract_strided_slice %286 {offsets = [0, 64], sizes = [8, 64], strides = [1, 1]} : vector<8x192xf32> to vector<8x64xf32>
    %290 = arith.mulf %289, %272 : vector<8x64xf32>
    %291 = vector.extract_strided_slice %286 {offsets = [0, 0], sizes = [8, 64], strides = [1, 1]} : vector<8x192xf32> to vector<8x64xf32>
    %292 = arith.mulf %291, %288 : vector<8x64xf32>
    %293 = arith.addf %290, %292 : vector<8x64xf32>
    %294 = vector.extract_strided_slice %286 {offsets = [0, 128], sizes = [8, 64], strides = [1, 1]} : vector<8x192xf32> to vector<8x64xf32>
    %295 = math.tanh %293 : vector<8x64xf32>
    %296 = arith.mulf %294, %295 : vector<8x64xf32>
    %297 = arith.truncf %296 : vector<8x64xf32> to vector<8x64xbf16>
    %cst_70 = arith.constant dense<0.000000e+00> : vector<8x256xf32>
    %298 = tpu.matmul %297, %3, %cst_70 {dimension_numbers = #tpu.dot_dimension_numbers<[1], [0], [0], [1], [0, 0, 1, 1], [], []>} : vector<8x64xbf16>, vector<64x256xbf16>, vector<8x256xf32> -> vector<8x256xf32>
    %c0_71 = arith.constant 0 : index
    %c13 = arith.constant 13 : index
    %c0_72 = arith.constant 0 : index
    %299 = vector.load %arg10[%c0_71, %c13, %c0_72] : memref<8x16x256xf32, #tpu.memory_space<vmem>>, vector<8x1x256xf32>
    %300 = vector.shape_cast %299 : vector<8x1x256xf32> to vector<8x256xf32>
    %301 = arith.addf %300, %298 : vector<8x256xf32>
    %302 = vector.extract_strided_slice %301 {offsets = [0, 0], sizes = [8, 192], strides = [1, 1]} : vector<8x256xf32> to vector<8x192xf32>
    %303 = arith.negf %302 : vector<8x192xf32>
    %304 = math.exp %303 : vector<8x192xf32>
    %cst_73 = arith.constant 1.000000e+00 : f32
    %305 = vector.broadcast %cst_73 : f32 to vector<8x192xf32>
    %306 = arith.addf %305, %304 : vector<8x192xf32>
    %307 = arith.divf %305, %306 : vector<8x192xf32>
    %308 = vector.extract_strided_slice %301 {offsets = [0, 192], sizes = [8, 64], strides = [1, 1]} : vector<8x256xf32> to vector<8x64xf32>
    %309 = math.tanh %308 : vector<8x64xf32>
    %310 = vector.extract_strided_slice %307 {offsets = [0, 64], sizes = [8, 64], strides = [1, 1]} : vector<8x192xf32> to vector<8x64xf32>
    %311 = arith.mulf %310, %293 : vector<8x64xf32>
    %312 = vector.extract_strided_slice %307 {offsets = [0, 0], sizes = [8, 64], strides = [1, 1]} : vector<8x192xf32> to vector<8x64xf32>
    %313 = arith.mulf %312, %309 : vector<8x64xf32>
    %314 = arith.addf %311, %313 : vector<8x64xf32>
    %315 = vector.extract_strided_slice %307 {offsets = [0, 128], sizes = [8, 64], strides = [1, 1]} : vector<8x192xf32> to vector<8x64xf32>
    %316 = math.tanh %314 : vector<8x64xf32>
    %317 = arith.mulf %315, %316 : vector<8x64xf32>
    %318 = arith.truncf %317 : vector<8x64xf32> to vector<8x64xbf16>
    %cst_74 = arith.constant dense<0.000000e+00> : vector<8x256xf32>
    %319 = tpu.matmul %318, %3, %cst_74 {dimension_numbers = #tpu.dot_dimension_numbers<[1], [0], [0], [1], [0, 0, 1, 1], [], []>} : vector<8x64xbf16>, vector<64x256xbf16>, vector<8x256xf32> -> vector<8x256xf32>
    %c0_75 = arith.constant 0 : index
    %c14 = arith.constant 14 : index
    %c0_76 = arith.constant 0 : index
    %320 = vector.load %arg10[%c0_75, %c14, %c0_76] : memref<8x16x256xf32, #tpu.memory_space<vmem>>, vector<8x1x256xf32>
    %321 = vector.shape_cast %320 : vector<8x1x256xf32> to vector<8x256xf32>
    %322 = arith.addf %321, %319 : vector<8x256xf32>
    %323 = vector.extract_strided_slice %322 {offsets = [0, 0], sizes = [8, 192], strides = [1, 1]} : vector<8x256xf32> to vector<8x192xf32>
    %324 = arith.negf %323 : vector<8x192xf32>
    %325 = math.exp %324 : vector<8x192xf32>
    %cst_77 = arith.constant 1.000000e+00 : f32
    %326 = vector.broadcast %cst_77 : f32 to vector<8x192xf32>
    %327 = arith.addf %326, %325 : vector<8x192xf32>
    %328 = arith.divf %326, %327 : vector<8x192xf32>
    %329 = vector.extract_strided_slice %322 {offsets = [0, 192], sizes = [8, 64], strides = [1, 1]} : vector<8x256xf32> to vector<8x64xf32>
    %330 = math.tanh %329 : vector<8x64xf32>
    %331 = vector.extract_strided_slice %328 {offsets = [0, 64], sizes = [8, 64], strides = [1, 1]} : vector<8x192xf32> to vector<8x64xf32>
    %332 = arith.mulf %331, %314 : vector<8x64xf32>
    %333 = vector.extract_strided_slice %328 {offsets = [0, 0], sizes = [8, 64], strides = [1, 1]} : vector<8x192xf32> to vector<8x64xf32>
    %334 = arith.mulf %333, %330 : vector<8x64xf32>
    %335 = arith.addf %332, %334 : vector<8x64xf32>
    %336 = vector.extract_strided_slice %328 {offsets = [0, 128], sizes = [8, 64], strides = [1, 1]} : vector<8x192xf32> to vector<8x64xf32>
    %337 = math.tanh %335 : vector<8x64xf32>
    %338 = arith.mulf %336, %337 : vector<8x64xf32>
    %339 = arith.truncf %338 : vector<8x64xf32> to vector<8x64xbf16>
    %cst_78 = arith.constant dense<0.000000e+00> : vector<8x256xf32>
    %340 = tpu.matmul %339, %3, %cst_78 {dimension_numbers = #tpu.dot_dimension_numbers<[1], [0], [0], [1], [0, 0, 1, 1], [], []>} : vector<8x64xbf16>, vector<64x256xbf16>, vector<8x256xf32> -> vector<8x256xf32>
    %c0_79 = arith.constant 0 : index
    %c15 = arith.constant 15 : index
    %c0_80 = arith.constant 0 : index
    %341 = vector.load %arg10[%c0_79, %c15, %c0_80] : memref<8x16x256xf32, #tpu.memory_space<vmem>>, vector<8x1x256xf32>
    %342 = vector.shape_cast %341 : vector<8x1x256xf32> to vector<8x256xf32>
    %343 = arith.addf %342, %340 : vector<8x256xf32>
    %344 = vector.extract_strided_slice %343 {offsets = [0, 0], sizes = [8, 192], strides = [1, 1]} : vector<8x256xf32> to vector<8x192xf32>
    %345 = arith.negf %344 : vector<8x192xf32>
    %346 = math.exp %345 : vector<8x192xf32>
    %cst_81 = arith.constant 1.000000e+00 : f32
    %347 = vector.broadcast %cst_81 : f32 to vector<8x192xf32>
    %348 = arith.addf %347, %346 : vector<8x192xf32>
    %349 = arith.divf %347, %348 : vector<8x192xf32>
    %350 = vector.extract_strided_slice %343 {offsets = [0, 192], sizes = [8, 64], strides = [1, 1]} : vector<8x256xf32> to vector<8x64xf32>
    %351 = math.tanh %350 : vector<8x64xf32>
    %352 = vector.extract_strided_slice %349 {offsets = [0, 64], sizes = [8, 64], strides = [1, 1]} : vector<8x192xf32> to vector<8x64xf32>
    %353 = arith.mulf %352, %335 : vector<8x64xf32>
    %354 = vector.extract_strided_slice %349 {offsets = [0, 0], sizes = [8, 64], strides = [1, 1]} : vector<8x192xf32> to vector<8x64xf32>
    %355 = arith.mulf %354, %351 : vector<8x64xf32>
    %356 = arith.addf %353, %355 : vector<8x64xf32>
    %357 = vector.extract_strided_slice %349 {offsets = [0, 128], sizes = [8, 64], strides = [1, 1]} : vector<8x192xf32> to vector<8x64xf32>
    %358 = math.tanh %356 : vector<8x64xf32>
    %359 = arith.mulf %357, %358 : vector<8x64xf32>
    %c0_82 = arith.constant 0 : index
    %c0_83 = arith.constant 0 : index
    %360 = vector.load %arg8[%c0_82, %c0_83] : memref<8x64xf32, #tpu.memory_space<vmem>>, vector<8x64xf32>
    tpu.vector_store %arg8[%c0_82, %c0_83], %359 {strides = array<i32>} : memref<8x64xf32, #tpu.memory_space<vmem>>, vector<8x64xf32>,
    %c0_84 = arith.constant 0 : index
    %c0_85 = arith.constant 0 : index
    %361 = vector.load %arg9[%c0_84, %c0_85] : memref<8x64xf32, #tpu.memory_space<vmem>>, vector<8x64xf32>
    tpu.vector_store %arg9[%c0_84, %c0_85], %356 {strides = array<i32>} : memref<8x64xf32, #tpu.memory_space<vmem>>, vector<8x64xf32>,
    %c0_i32_86 = arith.constant 0 : i32
    %362 = arith.cmpi eq, %arg0, %c0_i32_86 : i32
    %363 = arith.extui %362 : i1 to i32
    %c0_i32_87 = arith.constant 0 : i32
    %364 = arith.cmpi ne, %363, %c0_i32_87 : i32
    scf.if %364 {
      %365 = arith.truncf %359 : vector<8x64xf32> to vector<8x64xbf16>
      %cst_88 = arith.constant dense<0.000000e+00> : vector<8x256xf32>
      %366 = tpu.matmul %365, %3, %cst_88 {dimension_numbers = #tpu.dot_dimension_numbers<[1], [0], [0], [1], [0, 0, 1, 1], [], []>} : vector<8x64xbf16>, vector<64x256xbf16>, vector<8x256xf32> -> vector<8x256xf32>
      %c0_89 = arith.constant 0 : index
      %c0_90 = arith.constant 0 : index
      %367 = vector.load %arg4[%c0_89, %c0_90] : memref<1x256xf32, #tpu.memory_space<vmem>>, vector<1x256xf32>
      %368 = vector.broadcast %367 : vector<1x256xf32> to vector<8x256xf32>
      %369 = arith.addf %366, %368 : vector<8x256xf32>
      %370 = vector.extract_strided_slice %369 {offsets = [0, 0], sizes = [8, 192], strides = [1, 1]} : vector<8x256xf32> to vector<8x192xf32>
      %371 = arith.negf %370 : vector<8x192xf32>
      %372 = math.exp %371 : vector<8x192xf32>
      %cst_91 = arith.constant 1.000000e+00 : f32
      %373 = vector.broadcast %cst_91 : f32 to vector<8x192xf32>
      %374 = arith.addf %373, %372 : vector<8x192xf32>
      %375 = arith.divf %373, %374 : vector<8x192xf32>
      %376 = vector.extract_strided_slice %369 {offsets = [0, 192], sizes = [8, 64], strides = [1, 1]} : vector<8x256xf32> to vector<8x64xf32>
      %377 = math.tanh %376 : vector<8x64xf32>
      %378 = vector.extract_strided_slice %375 {offsets = [0, 64], sizes = [8, 64], strides = [1, 1]} : vector<8x192xf32> to vector<8x64xf32>
      %379 = arith.mulf %378, %356 : vector<8x64xf32>
      %380 = vector.extract_strided_slice %375 {offsets = [0, 0], sizes = [8, 64], strides = [1, 1]} : vector<8x192xf32> to vector<8x64xf32>
      %381 = arith.mulf %380, %377 : vector<8x64xf32>
      %382 = arith.addf %379, %381 : vector<8x64xf32>
      %383 = vector.extract_strided_slice %375 {offsets = [0, 128], sizes = [8, 64], strides = [1, 1]} : vector<8x192xf32> to vector<8x64xf32>
      %384 = math.tanh %382 : vector<8x64xf32>
      %385 = arith.mulf %383, %384 : vector<8x64xf32>
      %386 = vector.extract_strided_slice %385 {offsets = [0, 32], sizes = [8, 32], strides = [1, 1]} : vector<8x64xf32> to vector<8x32xf32>
      %387 = arith.truncf %386 : vector<8x32xf32> to vector<8x32xbf16>
      %c0_92 = arith.constant 0 : index
      %c0_93 = arith.constant 0 : index
      %388 = vector.load %arg5[%c0_92, %c0_93] : memref<32x2xbf16, #tpu.memory_space<vmem>>, vector<32x2xbf16>
      %cst_94 = arith.constant dense<0.000000e+00> : vector<8x2xf32>
      %389 = tpu.matmul %387, %388, %cst_94 {dimension_numbers = #tpu.dot_dimension_numbers<[1], [0], [0], [1], [0, 0, 1, 1], [], []>} : vector<8x32xbf16>, vector<32x2xbf16>, vector<8x2xf32> -> vector<8x2xf32>
      %c0_95 = arith.constant 0 : index
      %c0_96 = arith.constant 0 : index
      %390 = vector.load %arg6[%c0_95, %c0_96] : memref<1x2xf32, #tpu.memory_space<vmem>>, vector<1x2xf32>
      %391 = vector.broadcast %390 : vector<1x2xf32> to vector<8x2xf32>
      %392 = arith.addf %389, %391 : vector<8x2xf32>
      %c0_97 = arith.constant 0 : index
      %c0_98 = arith.constant 0 : index
      %393 = vector.load %arg7[%c0_97, %c0_98] : memref<8x2xf32, #tpu.memory_space<vmem>>, vector<8x2xf32>
      tpu.vector_store %arg7[%c0_97, %c0_98], %392 {strides = array<i32>} : memref<8x2xf32, #tpu.memory_space<vmem>>, vector<8x2xf32>,
    } else {
    }
    return
  }
  func.func @transform_0(%arg0: i32) -> (i32, i32, i32) {
    %c0_i32 = arith.constant 0 : i32
    %c0_i32_0 = arith.constant 0 : i32
    %c0_i32_1 = arith.constant 0 : i32
    return %c0_i32, %arg0, %c0_i32_0 : i32, i32, i32
  }
  func.func @transform_1(%arg0: i32) -> (i32, i32) {
    %c0_i32 = arith.constant 0 : i32
    %c0_i32_0 = arith.constant 0 : i32
    %c0_i32_1 = arith.constant 0 : i32
    return %c0_i32, %c0_i32_0 : i32, i32
  }
  func.func @transform_2(%arg0: i32) -> (i32, i32) {
    %c0_i32 = arith.constant 0 : i32
    %c0_i32_0 = arith.constant 0 : i32
    %c0_i32_1 = arith.constant 0 : i32
    return %c0_i32, %c0_i32_0 : i32, i32
  }
  func.func @transform_3(%arg0: i32) -> (i32, i32) {
    %c0_i32 = arith.constant 0 : i32
    %c0_i32_0 = arith.constant 0 : i32
    %c0_i32_1 = arith.constant 0 : i32
    return %c0_i32, %c0_i32_0 : i32, i32
  }
  func.func @transform_4(%arg0: i32) -> (i32, i32) {
    %c0_i32 = arith.constant 0 : i32
    %c0_i32_0 = arith.constant 0 : i32
    %c0_i32_1 = arith.constant 0 : i32
    return %c0_i32, %c0_i32_0 : i32, i32
  }
  func.func @transform_5(%arg0: i32) -> (i32, i32) {
    %c0_i32 = arith.constant 0 : i32
    %c0_i32_0 = arith.constant 0 : i32
    %c0_i32_1 = arith.constant 0 : i32
    return %c0_i32, %c0_i32_0 : i32, i32
  }
  func.func @transform_6(%arg0: i32) -> (i32, i32) {
    %c0_i32 = arith.constant 0 : i32
    %c0_i32_0 = arith.constant 0 : i32
    %c0_i32_1 = arith.constant 0 : i32
    return %c0_i32, %c0_i32_0 : i32, i32
  }
}

</mosaic_0001>

<llo_original>
// kernel: tpu_custom_call.1
$region0: #{tpu_custom_call.1}
  #allocation0 [shape = 'u32[]', space=smem, size = 0x4, offset = 0x4, fixed_abs, tag = 'smem constant byte address 0x4 - core index']
  #allocation1 [shape = 'u32[144,128]{1,0:T(1,128)}', space=vmem, size = 0x12000, scoped, tag = 'internal scratch']
  #allocation2 [shape = 'f32[8,64]{1,0:T(8,128)}', space=vmem, size = 0x1000, scoped, tag = 'scratch operand']
  #allocation3 [shape = 'f32[8,64]{1,0:T(8,128)}', space=vmem, size = 0x1000, scoped, tag = 'scratch operand']
  #allocation4 [shape = 'f32[8,16,256]{2,1,0:T(8,128)}', space=vmem, size = 0x20000, scoped, tag = 'scratch operand']
  %s0 = inlined_call_operand.hbm [shape: f32[8,16,16], index: 0, kind: input, shape index: {}]
  %s1 = inlined_call_operand.vmem [shape: bf16[16,256], index: 1, kind: input, shape index: {}]
  %s2 = inlined_call_operand.hbm [shape: bf16[64,256], index: 2, kind: input, shape index: {}]
  %s3 = inlined_call_operand.vmem [shape: f32[1,256], index: 3, kind: input, shape index: {}]
  %s4 = inlined_call_operand.vmem [shape: bf16[32,2], index: 4, kind: input, shape index: {}]
  %s5 = inlined_call_operand.vmem [shape: f32[1,2], index: 5, kind: input, shape index: {}]
  %s6 = inlined_call_operand.vmem [shape: f32[8,2], index: 6, kind: output, shape index: {}]
  %s7 = sld [smem:[#allocation0]]
  $region50: #{tpu_custom_call.1} parent=0
    _
  %s9 = ssub.s32 1, %s7
  %s10 = scalar_select 0, %s9, %s7
  $region1: #{tpu_custom_call.1} parent=0
    #allocation5 [shape = 'u8[65536]{0}', space=vmem, size = 0x10000, scoped, tag = 'input window, operand 0, single buffered']
    #allocation6 [shape = 's32[1]{0}', space=sflag, size = 0x4, scoped, tag = 'scoped memory for tpu_custom_call.1']
    #allocation7 [shape = 'u8[32768]{0}', space=vmem, size = 0x8000, scoped, tag = 'input window, operand 2, single buffered']
    #allocation8 [shape = 's32[1]{0}', space=sflag, size = 0x4, scoped, tag = 'scoped memory for tpu_custom_call.1']
    %11 = vsyncpa [#allocation6], 0
    %12 = vsyncpa [#allocation8], 0
    // Predicated region
    $region2: #{tpu_custom_call.1} parent=1 // pred_check
      _
    $region3: #{tpu_custom_call.1} parent=1 // pred_check_branch
      %14 = sbr.rel (0) target = $region5
    $region4: #{tpu_custom_call.1} parent=1 // pred_region
      %s16 = ssub.s32 2048, 2048
      %17 = vsyncadd [#allocation6], %s16
      %s18 = sshll.u32 [#allocation5], 4
      %s19 = int_to_ptr.vmem [resolvable:$true] %s18
      %24 = dma.hbm_to_vmem [thread:$0]  %s0, 2048, %s19, [#allocation6], 128, 128, 8
    $region5: #{tpu_custom_call.1} parent=1 // pred_fallthru
      _
    // Predicated region
    $region6: #{tpu_custom_call.1} parent=1 // pred_check
      _
    $region7: #{tpu_custom_call.1} parent=1 // pred_check_branch
      %26 = sbr.rel (0) target = $region9
    $region8: #{tpu_custom_call.1} parent=1 // pred_region
      _
    $region9: #{tpu_custom_call.1} parent=1 // pred_fallthru
      _
    // Predicated region
    $region10: #{tpu_custom_call.1} parent=1 // pred_check
      _
    $region11: #{tpu_custom_call.1} parent=1 // pred_check_branch
      %28 = sbr.rel (0) target = $region13
    $region12: #{tpu_custom_call.1} parent=1 // pred_region
      %s30 = ssub.s32 1024, 1024
      %31 = vsyncadd [#allocation8], %s30
      %s32 = sshll.u32 [#allocation7], 4
      %s33 = int_to_ptr.vmem [resolvable:$true] %s32
      %38 = dma.hbm_to_vmem [thread:$0]  %s2, 1024, %s33, [#allocation8], 128, 128, 8
    $region13: #{tpu_custom_call.1} parent=1 // pred_fallthru
      _
    // Predicated region
    $region14: #{tpu_custom_call.1} parent=1 // pred_check
      _
    $region15: #{tpu_custom_call.1} parent=1 // pred_check_branch
      %40 = sbr.rel (0) target = $region17
    $region16: #{tpu_custom_call.1} parent=1 // pred_region
      _
    $region17: #{tpu_custom_call.1} parent=1 // pred_fallthru
      _
    // Predicated region
    $region18: #{tpu_custom_call.1} parent=1 // pred_check
      _
    $region19: #{tpu_custom_call.1} parent=1 // pred_check_branch
      %42 = sbr.rel (0) target = $region21
    $region20: #{tpu_custom_call.1} parent=1 // pred_region
      _
    $region21: #{tpu_custom_call.1} parent=1 // pred_fallthru
      _
    // Predicated region
    $region22: #{tpu_custom_call.1} parent=1 // pred_check
      _
    $region23: #{tpu_custom_call.1} parent=1 // pred_check_branch
      %44 = sbr.rel (0) target = $region25
    $region24: #{tpu_custom_call.1} parent=1 // pred_region
      _
    $region25: #{tpu_custom_call.1} parent=1 // pred_fallthru
      _
    // Predicated region
    $region26: #{tpu_custom_call.1} parent=1 // pred_check
      _
    $region27: #{tpu_custom_call.1} parent=1 // pred_check_branch
      %46 = sbr.rel (0) target = $region29
    $region28: #{tpu_custom_call.1} parent=1 // pred_region
      %47 = dma.done [#allocation6], 2048
    $region29: #{tpu_custom_call.1} parent=1 // pred_fallthru
      _
    // Predicated region
    $region30: #{tpu_custom_call.1} parent=1 // pred_check
      _
    $region31: #{tpu_custom_call.1} parent=1 // pred_check_branch
      %49 = sbr.rel (0) target = $region33
    $region32: #{tpu_custom_call.1} parent=1 // pred_region
      %50 = dma.done [#allocation8], 1024
    $region33: #{tpu_custom_call.1} parent=1 // pred_fallthru
      _
    %p52 = scmp.eq.s32.totalorder 0, 0
    // Predicated region
    $region34: #{tpu_custom_call.1} parent=1 // pred_check
      %p53 = pneg %p52
    $region35: #{tpu_custom_call.1} parent=1 // pred_check_branch
      %55 = sbr.rel (%p53) target = $region37
    $region36: #{tpu_custom_call.1} parent=1 // pred_region
      %vm56 = vcmask 523264
      %57 = vst.msk [vmem:[#allocation2] sm:$0xff] %vm56, 0.0
      %58 = vst.msk [vmem:[#allocation3] sm:$0xff] %vm56, 0.0
    $region37: #{tpu_custom_call.1} parent=1 // pred_fallthru
      _
    %v59 = vld [vmem:[#allocation7] sm:$0xff]
    %v60 = vld [vmem:[#allocation7 + $0x8] sm:$0xff]
    %v61 = vld [vmem:[#allocation7 + $0x10] sm:$0xff]
    %v62 = vld [vmem:[#allocation7 + $0x18] sm:$0xff]
    %v63 = vld [vmem:[#allocation7 + $0x20] sm:$0xff]
    %v64 = vld [vmem:[#allocation7 + $0x28] sm:$0xff]
    %v65 = vld [vmem:[#allocation7 + $0x30] sm:$0xff]
    %v66 = vld [vmem:[#allocation7 + $0x38] sm:$0xff]
    %v67 = vld [vmem:[#allocation5] sm:$0xff]
    %v68 = vld [vmem:[#allocation5 + $0x8] sm:$0xff]
    %v69 = vld [vmem:[#allocation5 + $0x10] sm:$0xff]
    %v70 = vld [vmem:[#allocation5 + $0x18] sm:$0xff]
    %v71 = vld [vmem:[#allocation5 + $0x20] sm:$0xff]
    %v72 = vld [vmem:[#allocation5 + $0x28] sm:$0xff]
    %v73 = vld [vmem:[#allocation5 + $0x30] sm:$0xff]
    %v74 = vld [vmem:[#allocation5 + $0x38] sm:$0xff]
    %v75 = vld [vmem:[#allocation5 + $0x40] sm:$0xff]
    %v76 = vld [vmem:[#allocation5 + $0x48] sm:$0xff]
    %v77 = vld [vmem:[#allocation5 + $0x50] sm:$0xff]
    %v78 = vld [vmem:[#allocation5 + $0x58] sm:$0xff]
    %v79 = vld [vmem:[#allocation5 + $0x60] sm:$0xff]
    %v80 = vld [vmem:[#allocation5 + $0x68] sm:$0xff]
    %v81 = vld [vmem:[#allocation5 + $0x70] sm:$0xff]
    %v82 = vld [vmem:[#allocation5 + $0x78] sm:$0xff]
    %v83 = vpack.c.bf16 %v68, %v67
    %v84 = vpack.c.bf16 %v70, %v69
    %v85 = vpack.c.bf16 %v72, %v71
    %v86 = vpack.c.bf16 %v74, %v73
    %v87 = vpack.c.bf16 %v76, %v75
    %v88 = vpack.c.bf16 %v78, %v77
    %v89 = vpack.c.bf16 %v80, %v79
    %v90 = vpack.c.bf16 %v82, %v81
    %v91 = vld [vmem:[%s1] sm:$0xff]
    %v92 = vld [vmem:[%s1 + $0x8] sm:$0xff]
    %v93 = vld [vmem:[%s3] sm:$0x3]
    %v95 = vlaneseq
    %v96 = vshrl.u32 %v95, 7
    %v97 = vsub.s32 0, %v96
    %v98 = vrot.slane %v93, %v97
    %v99 = vlaneseq
    %v100 = vshrl.u32 %v99, 7
    %v101 = vsub.s32 1, %v100
    %v102 = vrot.slane %v93, %v101
    %v107 = vunpack.c.l.b16 %v91
    %v108 = vunpack.c.h.b16 %v91
    %v109 = vunpack.c.l.b16 %v92
    %v110 = vunpack.c.h.b16 %v92
    %v111 = vpack.c.b16 %v109, %v107
    %v112 = vpack.c.b16 %v110, %v108
    %vm115 = vcmask 130048
    %v117 = vsel %vm115, %v83, 0
    %v120 = vsel %vm115, %v84, 0
    %v123 = vsel %vm115, %v85, 0
    %v126 = vsel %vm115, %v86, 0
    %v129 = vsel %vm115, %v87, 0
    %v132 = vsel %vm115, %v88, 0
    %v135 = vsel %vm115, %v89, 0
    %v138 = vsel %vm115, %v90, 0
    %140 = vmatprep.subr.bf16.mxu0 %v112
    %141 = vmatpush1.bf16.msra.mxu0 %v111
    %142 = vmatprep.subr.bf16.mxu0 0
    %143 = vmatpush1.bf16.msra.mxu0 0
    %144 = vmatprep.subr.bf16.mxu0 0
    %145 = vmatpush1.bf16.msra.mxu0 0
    %146 = vmatprep.subr.bf16.mxu0 0
    %147 = vmatpush1.bf16.msra.mxu0 0
    %148 = vmatprep.subr.bf16.mxu0 0
    %149 = vmatpush1.bf16.msra.mxu0 0
    %150 = vmatprep.subr.bf16.mxu0 0
    %151 = vmatpush1.bf16.msra.mxu0 0
    %152 = vmatprep.subr.bf16.mxu0 0
    %153 = vmatpush1.bf16.msra.mxu0 0
    %154 = vmatprep.subr.bf16.mxu0 0
    %155 = vmatpush1.bf16.msra.mxu0 0
    %156 = vmatprep.subr.bf16.mxu0 0
    %157 = vmatpush1.bf16.msra.mxu0 0
    %158 = vmatprep.subr.bf16.mxu0 0
    %159 = vmatpush1.bf16.msra.mxu0 0
    %160 = vmatprep.subr.bf16.mxu0 0
    %161 = vmatpush1.bf16.msra.mxu0 0
    %162 = vmatprep.subr.bf16.mxu0 0
    %163 = vmatpush1.bf16.msra.mxu0 0
    %164 = vmatprep.subr.bf16.mxu0 0
    %165 = vmatpush1.bf16.msra.mxu0 0
    %166 = vmatprep.subr.bf16.mxu0 0
    %167 = vmatpush1.bf16.msra.mxu0 0
    %168 = vmatprep.subr.bf16.mxu0 0
    %169 = vmatpush1.bf16.msra.mxu0 0
    %170 = vmatprep.subr.bf16.mxu0 0
    %171 = vmatpush1.bf16.msra.mxu0 0
    %172 = vmatprep.mubr.bf16.mxu0 0
    %173 = vmatmul.mubr.bf16.gmra.mrb[0].mxu0 %v117
    %v174 = vpop.f32.mrb[0].mxu0
    %v175 = vadd.f32 %v98, %v174
    %v176 = vpop.f32.mrb[0].mxu0
    %v177 = vadd.f32 %v102, %v176
    %v178 = vpop.f32.mrb[0].mxu0
    %v179 = vadd.f32 %v98, %v178
    %v180 = vpop.f32.mrb[0].mxu0
    %v181 = vadd.f32 %v102, %v180
    %182 = vmatprep.mubr.bf16.mxu0 0
    %183 = vmatmul.mubr.bf16.gmra.mrb[0].mxu0 %v120
    %v184 = vpop.f32.mrb[0].mxu0
    %v185 = vadd.f32 %v98, %v184
    %v186 = vpop.f32.mrb[0].mxu0
    %v187 = vadd.f32 %v102, %v186
    %v188 = vpop.f32.mrb[0].mxu0
    %v189 = vadd.f32 %v98, %v188
    %v190 = vpop.f32.mrb[0].mxu0
    %v191 = vadd.f32 %v102, %v190
    %192 = vmatprep.mubr.bf16.mxu0 0
    %193 = vmatmul.mubr.bf16.gmra.mrb[0].mxu0 %v123
    %v194 = vpop.f32.mrb[0].mxu0
    %v195 = vadd.f32 %v98, %v194
    %v196 = vpop.f32.mrb[0].mxu0
    %v197 = vadd.f32 %v102, %v196
    %v198 = vpop.f32.mrb[0].mxu0
    %v199 = vadd.f32 %v98, %v198
    %v200 = vpop.f32.mrb[0].mxu0
    %v201 = vadd.f32 %v102, %v200
    %202 = vmatprep.mubr.bf16.mxu0 0
    %203 = vmatmul.mubr.bf16.gmra.mrb[0].mxu0 %v126
    %v204 = vpop.f32.mrb[0].mxu0
    %v205 = vadd.f32 %v98, %v204
    %v206 = vpop.f32.mrb[0].mxu0
    %v207 = vadd.f32 %v102, %v206
    %v208 = vpop.f32.mrb[0].mxu0
    %v209 = vadd.f32 %v98, %v208
    %v210 = vpop.f32.mrb[0].mxu0
    %v211 = vadd.f32 %v102, %v210
    %212 = vmatprep.mubr.bf16.mxu0 0
    %213 = vmatmul.mubr.bf16.gmra.mrb[0].mxu0 %v129
    %v214 = vpop.f32.mrb[0].mxu0
    %v215 = vadd.f32 %v98, %v214
    %v216 = vpop.f32.mrb[0].mxu0
    %v217 = vadd.f32 %v102, %v216
    %v218 = vpop.f32.mrb[0].mxu0
    %v219 = vadd.f32 %v98, %v218
    %v220 = vpop.f32.mrb[0].mxu0
    %v221 = vadd.f32 %v102, %v220
    %222 = vmatprep.mubr.bf16.mxu0 0
    %223 = vmatmul.mubr.bf16.gmra.mrb[0].mxu0 %v132
    %v224 = vpop.f32.mrb[0].mxu0
    %v225 = vadd.f32 %v98, %v224
    %v226 = vpop.f32.mrb[0].mxu0
    %v227 = vadd.f32 %v102, %v226
    %v228 = vpop.f32.mrb[0].mxu0
    %v229 = vadd.f32 %v98, %v228
    %v230 = vpop.f32.mrb[0].mxu0
    %v231 = vadd.f32 %v102, %v230
    %232 = vmatprep.mubr.bf16.mxu0 0
    %233 = vmatmul.mubr.bf16.gmra.mrb[0].mxu0 %v135
    %v234 = vpop.f32.mrb[0].mxu0
    %v235 = vadd.f32 %v98, %v234
    %v236 = vpop.f32.mrb[0].mxu0
    %v237 = vadd.f32 %v102, %v236
    %v238 = vpop.f32.mrb[0].mxu0
    %v239 = vadd.f32 %v98, %v238
    %v240 = vpop.f32.mrb[0].mxu0
    %v241 = vadd.f32 %v102, %v240
    %242 = vmatprep.mubr.bf16.mxu0 0
    %243 = vmatmul.mubr.bf16.gmra.mrb[0].mxu0 %v138
    %v244 = vpop.f32.mrb[0].mxu0
    %v245 = vadd.f32 %v98, %v244
    %v246 = vpop.f32.mrb[0].mxu0
    %v247 = vadd.f32 %v102, %v246
    %v248 = vpop.f32.mrb[0].mxu0
    %v249 = vadd.f32 %v98, %v248
    %v250 = vpop.f32.mrb[0].mxu0
    %v251 = vadd.f32 %v102, %v250
    %252 = vdwg.mxu0
    %253 = vst [vmem:[#allocation4] sm:$0xff] %v175
    %254 = vst [vmem:[#allocation4 + $0x8] sm:$0xff] %v177
    %255 = vst [vmem:[#allocation4 + $0x10] sm:$0xff] %v179
    %256 = vst [vmem:[#allocation4 + $0x18] sm:$0xff] %v181
    %257 = vst [vmem:[#allocation4 + $0x20] sm:$0xff] %v185
    %258 = vst [vmem:[#allocation4 + $0x28] sm:$0xff] %v187
    %259 = vst [vmem:[#allocation4 + $0x30] sm:$0xff] %v189
    %260 = vst [vmem:[#allocation4 + $0x38] sm:$0xff] %v191
    %261 = vst [vmem:[#allocation4 + $0x40] sm:$0xff] %v195
    %262 = vst [vmem:[#allocation4 + $0x48] sm:$0xff] %v197
    %263 = vst [vmem:[#allocation4 + $0x50] sm:$0xff] %v199
    %264 = vst [vmem:[#allocation4 + $0x58] sm:$0xff] %v201
    %265 = vst [vmem:[#allocation4 + $0x60] sm:$0xff] %v205
    %266 = vst [vmem:[#allocation4 + $0x68] sm:$0xff] %v207
    %267 = vst [vmem:[#allocation4 + $0x70] sm:$0xff] %v209
    %268 = vst [vmem:[#allocation4 + $0x78] sm:$0xff] %v211
    %269 = vst [vmem:[#allocation4 + $0x80] sm:$0xff] %v215
    %270 = vst [vmem:[#allocation4 + $0x88] sm:$0xff] %v217
    %271 = vst [vmem:[#allocation4 + $0x90] sm:$0xff] %v219
    %272 = vst [vmem:[#allocation4 + $0x98] sm:$0xff] %v221
    %273 = vst [vmem:[#allocation4 + $0xa0] sm:$0xff] %v225
    %274 = vst [vmem:[#allocation4 + $0xa8] sm:$0xff] %v227
    %275 = vst [vmem:[#allocation4 + $0xb0] sm:$0xff] %v229
    %276 = vst [vmem:[#allocation4 + $0xb8] sm:$0xff] %v231
    %277 = vst [vmem:[#allocation4 + $0xc0] sm:$0xff] %v235
    %278 = vst [vmem:[#allocation4 + $0xc8] sm:$0xff] %v237
    %279 = vst [vmem:[#allocation4 + $0xd0] sm:$0xff] %v239
    %280 = vst [vmem:[#allocation4 + $0xd8] sm:$0xff] %v241
    %281 = vst [vmem:[#allocation4 + $0xe0] sm:$0xff] %v245
    %282 = vst [vmem:[#allocation4 + $0xe8] sm:$0xff] %v247
    %283 = vst [vmem:[#allocation4 + $0xf0] sm:$0xff] %v249
    %284 = vst [vmem:[#allocation4 + $0xf8] sm:$0xff] %v251
    %v285 = vld [vmem:[#allocation2] sm:$0xff]
    %v286 = vld [vmem:[#allocation3] sm:$0xff]
    %v287 = vlaneseq
    %v288 = vand.u32 %v287, 127
    %vm289 = vcmp.lt.s32.totalorder %v288, 32
    %v290 = vpack.c.bf16 %v285, %v285
    %v299 = vunpack.c.l.b16 %v59
    %v300 = vunpack.c.h.b16 %v59
    %v301 = vunpack.c.l.b16 %v60
    %v302 = vunpack.c.h.b16 %v60
    %v303 = vunpack.c.l.b16 %v61
    %v304 = vunpack.c.h.b16 %v61
    %v305 = vunpack.c.l.b16 %v62
    %v306 = vunpack.c.h.b16 %v62
    %v307 = vunpack.c.l.b16 %v63
    %v308 = vunpack.c.h.b16 %v63
    %v309 = vunpack.c.l.b16 %v64
    %v310 = vunpack.c.h.b16 %v64
    %v311 = vunpack.c.l.b16 %v65
    %v312 = vunpack.c.h.b16 %v65
    %v313 = vunpack.c.l.b16 %v66
    %v314 = vunpack.c.h.b16 %v66
    %v315 = vpack.c.b16 %v301, %v299
    %v316 = vpack.c.b16 %v302, %v300
    %v317 = vpack.c.b16 %v305, %v303
    %v318 = vpack.c.b16 %v306, %v304
    %v319 = vpack.c.b16 %v309, %v307
    %v320 = vpack.c.b16 %v310, %v308
    %v321 = vpack.c.b16 %v313, %v311
    %v322 = vpack.c.b16 %v314, %v312
    %vm331 = vcmask 523264
    %v333 = vsel %vm331, %v290, 0
    %335 = vmatprep.subr.bf16.mxu0 %v316
    %336 = vmatpush1.bf16.msra.mxu0 %v315
    %337 = vmatprep.subr.bf16.mxu0 %v318
    %338 = vmatpush1.bf16.msra.mxu0 %v317
    %339 = vmatprep.subr.bf16.mxu0 %v320
    %340 = vmatpush1.bf16.msra.mxu0 %v319
    %341 = vmatprep.subr.bf16.mxu0 %v322
    %342 = vmatpush1.bf16.msra.mxu0 %v321
    %343 = vmatprep.subr.bf16.mxu0 0
    %344 = vmatpush1.bf16.msra.mxu0 0
    %345 = vmatprep.subr.bf16.mxu0 0
    %346 = vmatpush1.bf16.msra.mxu0 0
    %347 = vmatprep.subr.bf16.mxu0 0
    %348 = vmatpush1.bf16.msra.mxu0 0
    %349 = vmatprep.subr.bf16.mxu0 0
    %350 = vmatpush1.bf16.msra.mxu0 0
    %351 = vmatprep.subr.bf16.mxu0 0
    %352 = vmatpush1.bf16.msra.mxu0 0
    %353 = vmatprep.subr.bf16.mxu0 0
    %354 = vmatpush1.bf16.msra.mxu0 0
    %355 = vmatprep.subr.bf16.mxu0 0
    %356 = vmatpush1.bf16.msra.mxu0 0
    %357 = vmatprep.subr.bf16.mxu0 0
    %358 = vmatpush1.bf16.msra.mxu0 0
    %359 = vmatprep.subr.bf16.mxu0 0
    %360 = vmatpush1.bf16.msra.mxu0 0
    %361 = vmatprep.subr.bf16.mxu0 0
    %362 = vmatpush1.bf16.msra.mxu0 0
    %363 = vmatprep.subr.bf16.mxu0 0
    %364 = vmatpush1.bf16.msra.mxu0 0
    %365 = vmatprep.subr.bf16.mxu0 0
    %366 = vmatpush1.bf16.msra.mxu0 0
    %367 = vmatprep.mubr.bf16.mxu0 0
    %368 = vmatmul.mubr.bf16.gmra.mrb[0].mxu0 %v333
    %v369 = vpop.f32.mrb[0].mxu0
    %v370 = vadd.f32 0.0, %v369
    %v371 = vpop.f32.mrb[0].mxu0
    %v372 = vadd.f32 0.0, %v371
    %v373 = vpop.f32.mrb[0].mxu0
    %v374 = vpop.f32.mrb[0].mxu0
    %375 = vdwg.mxu0
    %v376 = vld [vmem:[#allocation4] ss:$8 sm:$0x3]
    %s377 = scalar_lea.vmem [#allocation4], 32
    %v378 = vld [vmem:[%s377] ss:$8 sm:$0x3]
    %s379 = scalar_lea.vmem [#allocation4], 64
    %v380 = vld [vmem:[%s379] ss:$8 sm:$0x3]
    %s381 = scalar_lea.vmem [#allocation4], 96
    %v382 = vld [vmem:[%s381] ss:$8 sm:$0x3]
    %s383 = scalar_lea.vmem [#allocation4], 128
    %v384 = vld [vmem:[%s383] ss:$8 sm:$0x3]
    %s385 = scalar_lea.vmem [#allocation4], 160
    %v386 = vld [vmem:[%s385] ss:$8 sm:$0x3]
    %s387 = scalar_lea.vmem [#allocation4], 192
    %v388 = vld [vmem:[%s387] ss:$8 sm:$0x3]
    %s389 = scalar_lea.vmem [#allocation4], 224
    %v390 = vld [vmem:[%s389] ss:$8 sm:$0x3]
    %v393 = vcombine.low %v370, %v372
    %v394 = vcombine.high %v370, %v372
    %v396 = vunpack.c.l.s4 1966171168
    %v397 = vunpack.c.0.s8 %v396
    %v398 = vlaneseq
    %v399 = vshrl.u32 %v398, 7
    %v400 = vsub.s32 %v397, %v399
    %v401 = vrot.slane %v393, %v400
    %v403 = vunpack.c.l.s4 1966171168
    %v404 = vunpack.c.0.s8 %v403
    %v405 = vlaneseq
    %v406 = vshrl.u32 %v405, 7
    %v407 = vsub.s32 %v404, %v406
    %v408 = vrot.slane %v394, %v407
    %v409 = vcombine.high %v401, %v401
    %v410 = vcombine.high %v408, %v408
    %v412 = vunpack.c.l.s4 1966171168
    %v413 = vunpack.c.0.s8 %v412
    %v414 = vlaneseq
    %v415 = vshrl.u32 %v414, 7
    %v416 = vsub.s32 %v413, %v415
    %v417 = vrot.slane %v401, %v416
    %v419 = vunpack.c.l.s4 1966171168
    %v420 = vunpack.c.0.s8 %v419
    %v421 = vlaneseq
    %v422 = vshrl.u32 %v421, 7
    %v423 = vsub.s32 %v420, %v422
    %v424 = vrot.slane %v408, %v423
    %v426 = vunpack.c.l.s4 1966171168
    %v427 = vunpack.c.0.s8 %v426
    %v428 = vlaneseq
    %v429 = vshrl.u32 %v428, 7
    %v430 = vsub.s32 %v427, %v429
    %v431 = vrot.slane %v409, %v430
    %v433 = vunpack.c.l.s4 1966171168
    %v434 = vunpack.c.0.s8 %v433
    %v435 = vlaneseq
    %v436 = vshrl.u32 %v435, 7
    %v437 = vsub.s32 %v434, %v436
    %v438 = vrot.slane %v410, %v437
    %v439 = vcombine.high %v417, %v417
    %v440 = vcombine.high %v424, %v424
    %v441 = vcombine.high %v431, %v431
    %v442 = vcombine.high %v438, %v438
    %v451 = vadd.f32 %v376, %v417
    %v452 = vadd.f32 %v378, %v431
    %v453 = vadd.f32 %v380, %v439
    %v454 = vadd.f32 %v382, %v441
    %v455 = vadd.f32 %v384, %v424
    %v456 = vadd.f32 %v386, %v438
    %v457 = vadd.f32 %v388, %v440
    %v458 = vadd.f32 %v390, %v442
    %v459 = vxor.u32 %v451, 2147483648
    %v460 = vxor.u32 %v452, 2147483648
    %v461 = vxor.u32 %v453, 2147483648
    %v462 = vxor.u32 %v454, 2147483648
    %v463 = vxor.u32 %v455, 2147483648
    %v464 = vxor.u32 %v456, 2147483648
    %v465 = vxor.u32 %v457, 2147483648
    %v466 = vxor.u32 %v458, 2147483648
    %v467 = vmul.f32 %v459, 1.442695
    %v468 = vpow.pop %v467
    %v469 = vmul.f32 %v460, 1.442695
    %v470 = vpow.pop %v469
    %v471 = vmul.f32 %v461, 1.442695
    %v472 = vpow.pop %v471
    %v473 = vmul.f32 %v462, 1.442695
    %v474 = vpow.pop %v473
    %v475 = vmul.f32 %v463, 1.442695
    %v476 = vpow.pop %v475
    %v477 = vmul.f32 %v464, 1.442695
    %v478 = vpow.pop %v477
    %v479 = vmul.f32 %v465, 1.442695
    %v480 = vpow.pop %v479
    %v481 = vmul.f32 %v466, 1.442695
    %v482 = vpow.pop %v481
    %v483 = vadd.f32 %v468, 1.0
    %v484 = vadd.f32 %v470, 1.0
    %v485 = vadd.f32 %v472, 1.0
    %v486 = vadd.f32 %v474, 1.0
    %v487 = vadd.f32 %v476, 1.0
    %v488 = vadd.f32 %v478, 1.0
    %v489 = vadd.f32 %v480, 1.0
    %v490 = vadd.f32 %v482, 1.0
    %v491 = vrcp.pop %v483
    %v492 = vmul.f32 1.0, %v491
    %v493 = vrcp.pop %v484
    %v494 = vmul.f32 1.0, %v493
    %v495 = vrcp.pop %v485
    %v496 = vmul.f32 1.0, %v495
    %v497 = vrcp.pop %v486
    %v498 = vmul.f32 1.0, %v497
    %v499 = vrcp.pop %v487
    %v500 = vmul.f32 1.0, %v499
    %v501 = vrcp.pop %v488
    %v502 = vmul.f32 1.0, %v501
    %v503 = vrcp.pop %v489
    %v504 = vmul.f32 1.0, %v503
    %v505 = vrcp.pop %v490
    %v506 = vmul.f32 1.0, %v505
    %515 = vrot.lane.b32.xlu0 %v451, 64
    %v516 = vpop.permute.xlu0 %515
    %517 = vrot.lane.b32.xlu0 %v452, 64
    %v518 = vpop.permute.xlu0 %517
    %519 = vrot.lane.b32.xlu0 %v453, 64
    %v520 = vpop.permute.xlu0 %519
    %521 = vrot.lane.b32.xlu0 %v454, 64
    %v522 = vpop.permute.xlu0 %521
    %523 = vrot.lane.b32.xlu0 %v455, 64
    %v524 = vpop.permute.xlu0 %523
    %525 = vrot.lane.b32.xlu0 %v456, 64
    %v526 = vpop.permute.xlu0 %525
    %527 = vrot.lane.b32.xlu0 %v457, 64
    %v528 = vpop.permute.xlu0 %527
    %529 = vrot.lane.b32.xlu0 %v458, 64
    %v530 = vpop.permute.xlu0 %529
    %v531 = vrot.slane %v516, 1
    %v532 = vrot.slane %v518, 1
    %v533 = vrot.slane %v520, 1
    %v534 = vrot.slane %v522, 1
    %v535 = vrot.slane %v524, 1
    %v536 = vrot.slane %v526, 1
    %v537 = vrot.slane %v528, 1
    %v538 = vrot.slane %v530, 1
    %v547 = vtanh.pop %v531
    %v548 = vtanh.pop %v532
    %v549 = vtanh.pop %v533
    %v550 = vtanh.pop %v534
    %v551 = vtanh.pop %v535
    %v552 = vtanh.pop %v536
    %v553 = vtanh.pop %v537
    %v554 = vtanh.pop %v538
    %v556 = vcombine.high %v286, %v286
    %v558 = vunpack.c.l.s4 1966171168
    %v559 = vunpack.c.0.s8 %v558
    %v560 = vlaneseq
    %v561 = vshrl.u32 %v560, 7
    %v562 = vsub.s32 %v559, %v561
    %v563 = vrot.slane %v286, %v562
    %v565 = vunpack.c.l.s4 1966171168
    %v566 = vunpack.c.0.s8 %v565
    %v567 = vlaneseq
    %v568 = vshrl.u32 %v567, 7
    %v569 = vsub.s32 %v566, %v568
    %v570 = vrot.slane %v556, %v569
    %v571 = vcombine.high %v563, %v563
    %v572 = vcombine.high %v570, %v570
    %v574 = vunpack.c.l.s4 1966171168
    %v575 = vunpack.c.0.s8 %v574
    %v576 = vlaneseq
    %v577 = vshrl.u32 %v576, 7
    %v578 = vsub.s32 %v575, %v577
    %v579 = vrot.slane %v563, %v578
    %v581 = vunpack.c.l.s4 1966171168
    %v582 = vunpack.c.0.s8 %v581
    %v583 = vlaneseq
    %v584 = vshrl.u32 %v583, 7
    %v585 = vsub.s32 %v582, %v584
    %v586 = vrot.slane %v570, %v585
    %v588 = vunpack.c.l.s4 1966171168
    %v589 = vunpack.c.0.s8 %v588
    %v590 = vlaneseq
    %v591 = vshrl.u32 %v590, 7
    %v592 = vsub.s32 %v589, %v591
    %v593 = vrot.slane %v571, %v592
    %v595 = vunpack.c.l.s4 1966171168
    %v596 = vunpack.c.0.s8 %v595
    %v597 = vlaneseq
    %v598 = vshrl.u32 %v597, 7
    %v599 = vsub.s32 %v596, %v598
    %v600 = vrot.slane %v572, %v599
    %v601 = vcombine.high %v579, %v579
    %v602 = vcombine.high %v586, %v586
    %v603 = vcombine.high %v593, %v593
    %v604 = vcombine.high %v600, %v600
    %605 = vrot.lane.b32.xlu0 %v579, 64
    %v606 = vpop.permute.xlu0 %605
    %607 = vrot.lane.b32.xlu0 %v593, 64
    %v608 = vpop.permute.xlu0 %607
    %609 = vrot.lane.b32.xlu0 %v601, 64
    %v610 = vpop.permute.xlu0 %609
    %611 = vrot.lane.b32.xlu0 %v603, 64
    %v612 = vpop.permute.xlu0 %611
    %613 = vrot.lane.b32.xlu0 %v586, 64
    %v614 = vpop.permute.xlu0 %613
    %615 = vrot.lane.b32.xlu0 %v600, 64
    %v616 = vpop.permute.xlu0 %615
    %617 = vrot.lane.b32.xlu0 %v602, 64
    %v618 = vpop.permute.xlu0 %617
    %619 = vrot.lane.b32.xlu0 %v604, 64
    %v620 = vpop.permute.xlu0 %619
    %v629 = vmul.f32 %v492, %v606
    %v630 = vmul.f32 %v494, %v608
    %v631 = vmul.f32 %v496, %v610
    %v632 = vmul.f32 %v498, %v612
    %v633 = vmul.f32 %v500, %v614
    %v634 = vmul.f32 %v502, %v616
    %v635 = vmul.f32 %v504, %v618
    %v636 = vmul.f32 %v506, %v620
    %v637 = vmul.f32 %v492, %v547
    %v638 = vmul.f32 %v494, %v548
    %v639 = vmul.f32 %v496, %v549
    %v640 = vmul.f32 %v498, %v550
    %v641 = vmul.f32 %v500, %v551
    %v642 = vmul.f32 %v502, %v552
    %v643 = vmul.f32 %v504, %v553
    %v644 = vmul.f32 %v506, %v554
    %653 = vrot.lane.b32.xlu0 %v637, 64
    %v654 = vpop.permute.xlu0 %653
    %655 = vrot.lane.b32.xlu0 %v638, 64
    %v656 = vpop.permute.xlu0 %655
    %657 = vrot.lane.b32.xlu0 %v639, 64
    %v658 = vpop.permute.xlu0 %657
    %659 = vrot.lane.b32.xlu0 %v640, 64
    %v660 = vpop.permute.xlu0 %659
    %661 = vrot.lane.b32.xlu0 %v641, 64
    %v662 = vpop.permute.xlu0 %661
    %663 = vrot.lane.b32.xlu0 %v642, 64
    %v664 = vpop.permute.xlu0 %663
    %665 = vrot.lane.b32.xlu0 %v643, 64
    %v666 = vpop.permute.xlu0 %665
    %667 = vrot.lane.b32.xlu0 %v644, 64
    %v668 = vpop.permute.xlu0 %667
    %v677 = vadd.f32 %v629, %v654
    %v678 = vadd.f32 %v630, %v656
    %v679 = vadd.f32 %v631, %v658
    %v680 = vadd.f32 %v632, %v660
    %v681 = vadd.f32 %v633, %v662
    %v682 = vadd.f32 %v634, %v664
    %v683 = vadd.f32 %v635, %v666
    %v684 = vadd.f32 %v636, %v668
    %v685 = vtanh.pop %v677
    %v686 = vtanh.pop %v678
    %v687 = vtanh.pop %v679
    %v688 = vtanh.pop %v680
    %v689 = vtanh.pop %v681
    %v690 = vtanh.pop %v682
    %v691 = vtanh.pop %v683
    %v692 = vtanh.pop %v684
    %v701 = vrot.slane %v492, 1
    %v702 = vrot.slane %v494, 1
    %v703 = vrot.slane %v496, 1
    %v704 = vrot.slane %v498, 1
    %v705 = vrot.slane %v500, 1
    %v706 = vrot.slane %v502, 1
    %v707 = vrot.slane %v504, 1
    %v708 = vrot.slane %v506, 1
    %725 = vrot.lane.b32.xlu0 %v685, 64
    %v726 = vpop.permute.xlu0 %725
    %727 = vrot.lane.b32.xlu0 %v686, 64
    %v728 = vpop.permute.xlu0 %727
    %729 = vrot.lane.b32.xlu0 %v687, 64
    %v730 = vpop.permute.xlu0 %729
    %731 = vrot.lane.b32.xlu0 %v688, 64
    %v732 = vpop.permute.xlu0 %731
    %733 = vrot.lane.b32.xlu0 %v689, 64
    %v734 = vpop.permute.xlu0 %733
    %735 = vrot.lane.b32.xlu0 %v690, 64
    %v736 = vpop.permute.xlu0 %735
    %737 = vrot.lane.b32.xlu0 %v691, 64
    %v738 = vpop.permute.xlu0 %737
    %739 = vrot.lane.b32.xlu0 %v692, 64
    %v740 = vpop.permute.xlu0 %739
    %v749 = vmul.f32 %v701, %v726
    %v750 = vmul.f32 %v702, %v728
    %v751 = vmul.f32 %v703, %v730
    %v752 = vmul.f32 %v704, %v732
    %v753 = vmul.f32 %v705, %v734
    %v754 = vmul.f32 %v706, %v736
    %v755 = vmul.f32 %v707, %v738
    %v756 = vmul.f32 %v708, %v740
    %p757 = scmp.gt.s32.totalorder 0, 0
    %s758 = scalar_select %p757, 1, 0
    %v759 = vstv %s758
    %vm760 = vcmp.eq.s32.totalorder %v759, 1
    %vm761 = vmor %vm289, %vm760
    %v770 = vcombine.low %v749, %v750
    %v771 = vcombine.low %v751, %v752
    %v772 = vcombine.low %v753, %v754
    %v773 = vcombine.low %v755, %v756
    %v775 = vunpack.c.l.s4 1966171168
    %v776 = vunpack.c.0.s8 %v775
    %v777 = vlaneseq
    %v778 = vshrl.u32 %v777, 7
    %v779 = vsub.s32 %v776, %v778
    %v780 = vrot.slane %v770, %v779
    %v782 = vunpack.c.l.s4 1966171168
    %v783 = vunpack.c.0.s8 %v782
    %v784 = vlaneseq
    %v785 = vshrl.u32 %v784, 7
    %v786 = vsub.s32 %v783, %v785
    %v787 = vrot.slane %v771, %v786
    %v789 = vunpack.c.l.s4 1966171168
    %v790 = vunpack.c.0.s8 %v789
    %v791 = vlaneseq
    %v792 = vshrl.u32 %v791, 7
    %v793 = vsub.s32 %v790, %v792
    %v794 = vrot.slane %v772, %v793
    %v796 = vunpack.c.l.s4 1966171168
    %v797 = vunpack.c.0.s8 %v796
    %v798 = vlaneseq
    %v799 = vshrl.u32 %v798, 7
    %v800 = vsub.s32 %v797, %v799
    %v801 = vrot.slane %v773, %v800
    %v802 = vcombine.low %v780, %v787
    %v803 = vcombine.low %v794, %v801
    %v805 = vunpack.c.l.s4 1966171168
    %v806 = vunpack.c.0.s8 %v805
    %v807 = vlaneseq
    %v808 = vshrl.u32 %v807, 7
    %v809 = vsub.s32 %v806, %v808
    %v810 = vrot.slane %v802, %v809
    %v812 = vunpack.c.l.s4 1966171168
    %v813 = vunpack.c.0.s8 %v812
    %v814 = vlaneseq
    %v815 = vshrl.u32 %v814, 7
    %v816 = vsub.s32 %v813, %v815
    %v817 = vrot.slane %v803, %v816
    %v818 = vcombine.low %v810, %v817
    %v820 = vsel %vm761, %v818, %v285
    %v829 = vcombine.low %v677, %v678
    %v830 = vcombine.low %v679, %v680
    %v831 = vcombine.low %v681, %v682
    %v832 = vcombine.low %v683, %v684
    %v834 = vunpack.c.l.s4 1966171168
    %v835 = vunpack.c.0.s8 %v834
    %v836 = vlaneseq
    %v837 = vshrl.u32 %v836, 7
    %v838 = vsub.s32 %v835, %v837
    %v839 = vrot.slane %v829, %v838
    %v841 = vunpack.c.l.s4 1966171168
    %v842 = vunpack.c.0.s8 %v841
    %v843 = vlaneseq
    %v844 = vshrl.u32 %v843, 7
    %v845 = vsub.s32 %v842, %v844
    %v846 = vrot.slane %v830, %v845
    %v848 = vunpack.c.l.s4 1966171168
    %v849 = vunpack.c.0.s8 %v848
    %v850 = vlaneseq
    %v851 = vshrl.u32 %v850, 7
    %v852 = vsub.s32 %v849, %v851
    %v853 = vrot.slane %v831, %v852
    %v855 = vunpack.c.l.s4 1966171168
    %v856 = vunpack.c.0.s8 %v855
    %v857 = vlaneseq
    %v858 = vshrl.u32 %v857, 7
    %v859 = vsub.s32 %v856, %v858
    %v860 = vrot.slane %v832, %v859
    %v861 = vcombine.low %v839, %v846
    %v862 = vcombine.low %v853, %v860
    %v864 = vunpack.c.l.s4 1966171168
    %v865 = vunpack.c.0.s8 %v864
    %v866 = vlaneseq
    %v867 = vshrl.u32 %v866, 7
    %v868 = vsub.s32 %v865, %v867
    %v869 = vrot.slane %v861, %v868
    %v871 = vunpack.c.l.s4 1966171168
    %v872 = vunpack.c.0.s8 %v871
    %v873 = vlaneseq
    %v874 = vshrl.u32 %v873, 7
    %v875 = vsub.s32 %v872, %v874
    %v876 = vrot.slane %v862, %v875
    %v877 = vcombine.low %v869, %v876
    %878 = vrot.lane.b32.xlu0 %v877, 64
    %v879 = vpop.permute.xlu0 %878
    %v881 = vsel %vm761, %v879, %v286
    %v882 = vpack.c.bf16 %v820, %v820
    %v884 = vsel %vm331, %v882, 0
    %886 = vmatprep.subr.bf16.mxu0 %v316
    %887 = vmatpush1.bf16.msra.mxu0 %v315
    %888 = vmatprep.subr.bf16.mxu0 %v318
    %889 = vmatpush1.bf16.msra.mxu0 %v317
    %890 = vmatprep.subr.bf16.mxu0 %v320
    %891 = vmatpush1.bf16.msra.mxu0 %v319
    %892 = vmatprep.subr.bf16.mxu0 %v322
    %893 = vmatpush1.bf16.msra.mxu0 %v321
    %894 = vmatprep.subr.bf16.mxu0 0
    %895 = vmatpush1.bf16.msra.mxu0 0
    %896 = vmatprep.subr.bf16.mxu0 0
    %897 = vmatpush1.bf16.msra.mxu0 0
    %898 = vmatprep.subr.bf16.mxu0 0
    %899 = vmatpush1.bf16.msra.mxu0 0
    %900 = vmatprep.subr.bf16.mxu0 0
    %901 = vmatpush1.bf16.msra.mxu0 0
    %902 = vmatprep.subr.bf16.mxu0 0
    %903 = vmatpush1.bf16.msra.mxu0 0
    %904 = vmatprep.subr.bf16.mxu0 0
    %905 = vmatpush1.bf16.msra.mxu0 0
    %906 = vmatprep.subr.bf16.mxu0 0
    %907 = vmatpush1.bf16.msra.mxu0 0
    %908 = vmatprep.subr.bf16.mxu0 0
    %909 = vmatpush1.bf16.msra.mxu0 0
    %910 = vmatprep.subr.bf16.mxu0 0
    %911 = vmatpush1.bf16.msra.mxu0 0
    %912 = vmatprep.subr.bf16.mxu0 0
    %913 = vmatpush1.bf16.msra.mxu0 0
    %914 = vmatprep.subr.bf16.mxu0 0
    %915 = vmatpush1.bf16.msra.mxu0 0
    %916 = vmatprep.subr.bf16.mxu0 0
    %917 = vmatpush1.bf16.msra.mxu0 0
    %918 = vmatprep.mubr.bf16.mxu0 0
    %919 = vmatmul.mubr.bf16.gmra.mrb[0].mxu0 %v884
    %v920 = vpop.f32.mrb[0].mxu0
    %v921 = vadd.f32 0.0, %v920
    %v922 = vpop.f32.mrb[0].mxu0
    %v923 = vadd.f32 0.0, %v922
    %v924 = vpop.f32.mrb[0].mxu0
    %v925 = vpop.f32.mrb[0].mxu0
    %926 = vdwg.mxu0
    %s927 = scalar_lea.vmem [#allocation4], 1
    %v928 = vld [vmem:[%s927] ss:$8 sm:$0x3]
    %s929 = scalar_lea.vmem [#allocation4], 33
    %v930 = vld [vmem:[%s929] ss:$8 sm:$0x3]
    %s931 = scalar_lea.vmem [#allocation4], 65
    %v932 = vld [vmem:[%s931] ss:$8 sm:$0x3]
    %s933 = scalar_lea.vmem [#allocation4], 97
    %v934 = vld [vmem:[%s933] ss:$8 sm:$0x3]
    %s935 = scalar_lea.vmem [#allocation4], 129
    %v936 = vld [vmem:[%s935] ss:$8 sm:$0x3]
    %s937 = scalar_lea.vmem [#allocation4], 161
    %v938 = vld [vmem:[%s937] ss:$8 sm:$0x3]
    %s939 = scalar_lea.vmem [#allocation4], 193
    %v940 = vld [vmem:[%s939] ss:$8 sm:$0x3]
    %s941 = scalar_lea.vmem [#allocation4], 225
    %v942 = vld [vmem:[%s941] ss:$8 sm:$0x3]
    %v945 = vcombine.low %v921, %v923
    %v946 = vcombine.high %v921, %v923
    %v948 = vunpack.c.l.s4 1966171168
    %v949 = vunpack.c.0.s8 %v948
    %v950 = vlaneseq
    %v951 = vshrl.u32 %v950, 7
    %v952 = vsub.s32 %v949, %v951
    %v953 = vrot.slane %v945, %v952
    %v955 = vunpack.c.l.s4 1966171168
    %v956 = vunpack.c.0.s8 %v955
    %v957 = vlaneseq
    %v958 = vshrl.u32 %v957, 7
    %v959 = vsub.s32 %v956, %v958
    %v960 = vrot.slane %v946, %v959
    %v961 = vcombine.high %v953, %v953
    %v962 = vcombine.high %v960, %v960
    %v964 = vunpack.c.l.s4 1966171168
    %v965 = vunpack.c.0.s8 %v964
    %v966 = vlaneseq
    %v967 = vshrl.u32 %v966, 7
    %v968 = vsub.s32 %v965, %v967
    %v969 = vrot.slane %v953, %v968
    %v971 = vunpack.c.l.s4 1966171168
    %v972 = vunpack.c.0.s8 %v971
    %v973 = vlaneseq
    %v974 = vshrl.u32 %v973, 7
    %v975 = vsub.s32 %v972, %v974
    %v976 = vrot.slane %v960, %v975
    %v978 = vunpack.c.l.s4 1966171168
    %v979 = vunpack.c.0.s8 %v978
    %v980 = vlaneseq
    %v981 = vshrl.u32 %v980, 7
    %v982 = vsub.s32 %v979, %v981
    %v983 = vrot.slane %v961, %v982
    %v985 = vunpack.c.l.s4 1966171168
    %v986 = vunpack.c.0.s8 %v985
    %v987 = vlaneseq
    %v988 = vshrl.u32 %v987, 7
    %v989 = vsub.s32 %v986, %v988
    %v990 = vrot.slane %v962, %v989
    %v991 = vcombine.high %v969, %v969
    %v992 = vcombine.high %v976, %v976
    %v993 = vcombine.high %v983, %v983
    %v994 = vcombine.high %v990, %v990
    %v1003 = vadd.f32 %v928, %v969
    %v1004 = vadd.f32 %v930, %v983
    %v1005 = vadd.f32 %v932, %v991
    %v1006 = vadd.f32 %v934, %v993
    %v1007 = vadd.f32 %v936, %v976
    %v1008 = vadd.f32 %v938, %v990
    %v1009 = vadd.f32 %v940, %v992
    %v1010 = vadd.f32 %v942, %v994
    %v1011 = vxor.u32 %v1003, 2147483648
    %v1012 = vxor.u32 %v1004, 2147483648
    %v1013 = vxor.u32 %v1005, 2147483648
    %v1014 = vxor.u32 %v1006, 2147483648
    %v1015 = vxor.u32 %v1007, 2147483648
    %v1016 = vxor.u32 %v1008, 2147483648
    %v1017 = vxor.u32 %v1009, 2147483648
    %v1018 = vxor.u32 %v1010, 2147483648
    %v1019 = vmul.f32 %v1011, 1.442695
    %v1020 = vpow.pop %v1019
    %v1021 = vmul.f32 %v1012, 1.442695
    %v1022 = vpow.pop %v1021
    %v1023 = vmul.f32 %v1013, 1.442695
    %v1024 = vpow.pop %v1023
    %v1025 = vmul.f32 %v1014, 1.442695
    %v1026 = vpow.pop %v1025
    %v1027 = vmul.f32 %v1015, 1.442695
    %v1028 = vpow.pop %v1027
    %v1029 = vmul.f32 %v1016, 1.442695
    %v1030 = vpow.pop %v1029
    %v1031 = vmul.f32 %v1017, 1.442695
    %v1032 = vpow.pop %v1031
    %v1033 = vmul.f32 %v1018, 1.442695
    %v1034 = vpow.pop %v1033
    %v1035 = vadd.f32 %v1020, 1.0
    %v1036 = vadd.f32 %v1022, 1.0
    %v1037 = vadd.f32 %v1024, 1.0
    %v1038 = vadd.f32 %v1026, 1.0
    %v1039 = vadd.f32 %v1028, 1.0
    %v1040 = vadd.f32 %v1030, 1.0
    %v1041 = vadd.f32 %v1032, 1.0
    %v1042 = vadd.f32 %v1034, 1.0
    %v1043 = vrcp.pop %v1035
    %v1044 = vmul.f32 1.0, %v1043
    %v1045 = vrcp.pop %v1036
    %v1046 = vmul.f32 1.0, %v1045
    %v1047 = vrcp.pop %v1037
    %v1048 = vmul.f32 1.0, %v1047
    %v1049 = vrcp.pop %v1038
    %v1050 = vmul.f32 1.0, %v1049
    %v1051 = vrcp.pop %v1039
    %v1052 = vmul.f32 1.0, %v1051
    %v1053 = vrcp.pop %v1040
    %v1054 = vmul.f32 1.0, %v1053
    %v1055 = vrcp.pop %v1041
    %v1056 = vmul.f32 1.0, %v1055
    %v1057 = vrcp.pop %v1042
    %v1058 = vmul.f32 1.0, %v1057
    %1067 = vrot.lane.b32.xlu0 %v1003, 64
    %v1068 = vpop.permute.xlu0 %1067
    %1069 = vrot.lane.b32.xlu0 %v1004, 64
    %v1070 = vpop.permute.xlu0 %1069
    %1071 = vrot.lane.b32.xlu0 %v1005, 64
    %v1072 = vpop.permute.xlu0 %1071
    %1073 = vrot.lane.b32.xlu0 %v1006, 64
    %v1074 = vpop.permute.xlu0 %1073
    %1075 = vrot.lane.b32.xlu0 %v1007, 64
    %v1076 = vpop.permute.xlu0 %1075
    %1077 = vrot.lane.b32.xlu0 %v1008, 64
    %v1078 = vpop.permute.xlu0 %1077
    %1079 = vrot.lane.b32.xlu0 %v1009, 64
    %v1080 = vpop.permute.xlu0 %1079
    %1081 = vrot.lane.b32.xlu0 %v1010, 64
    %v1082 = vpop.permute.xlu0 %1081
    %v1083 = vrot.slane %v1068, 1
    %v1084 = vrot.slane %v1070, 1
    %v1085 = vrot.slane %v1072, 1
    %v1086 = vrot.slane %v1074, 1
    %v1087 = vrot.slane %v1076, 1
    %v1088 = vrot.slane %v1078, 1
    %v1089 = vrot.slane %v1080, 1
    %v1090 = vrot.slane %v1082, 1
    %v1099 = vtanh.pop %v1083
    %v1100 = vtanh.pop %v1084
    %v1101 = vtanh.pop %v1085
    %v1102 = vtanh.pop %v1086
    %v1103 = vtanh.pop %v1087
    %v1104 = vtanh.pop %v1088
    %v1105 = vtanh.pop %v1089
    %v1106 = vtanh.pop %v1090
    %v1108 = vcombine.high %v881, %v881
    %v1110 = vunpack.c.l.s4 1966171168
    %v1111 = vunpack.c.0.s8 %v1110
    %v1112 = vlaneseq
    %v1113 = vshrl.u32 %v1112, 7
    %v1114 = vsub.s32 %v1111, %v1113
    %v1115 = vrot.slane %v881, %v1114
    %v1117 = vunpack.c.l.s4 1966171168
    %v1118 = vunpack.c.0.s8 %v1117
    %v1119 = vlaneseq
    %v1120 = vshrl.u32 %v1119, 7
    %v1121 = vsub.s32 %v1118, %v1120
    %v1122 = vrot.slane %v1108, %v1121
    %v1123 = vcombine.high %v1115, %v1115
    %v1124 = vcombine.high %v1122, %v1122
    %v1126 = vunpack.c.l.s4 1966171168
    %v1127 = vunpack.c.0.s8 %v1126
    %v1128 = vlaneseq
    %v1129 = vshrl.u32 %v1128, 7
    %v1130 = vsub.s32 %v1127, %v1129
    %v1131 = vrot.slane %v1115, %v1130
    %v1133 = vunpack.c.l.s4 1966171168
    %v1134 = vunpack.c.0.s8 %v1133
    %v1135 = vlaneseq
    %v1136 = vshrl.u32 %v1135, 7
    %v1137 = vsub.s32 %v1134, %v1136
    %v1138 = vrot.slane %v1122, %v1137
    %v1140 = vunpack.c.l.s4 1966171168
    %v1141 = vunpack.c.0.s8 %v1140
    %v1142 = vlaneseq
    %v1143 = vshrl.u32 %v1142, 7
    %v1144 = vsub.s32 %v1141, %v1143
    %v1145 = vrot.slane %v1123, %v1144
    %v1147 = vunpack.c.l.s4 1966171168
    %v1148 = vunpack.c.0.s8 %v1147
    %v1149 = vlaneseq
    %v1150 = vshrl.u32 %v1149, 7
    %v1151 = vsub.s32 %v1148, %v1150
    %v1152 = vrot.slane %v1124, %v1151
    %v1153 = vcombine.high %v1131, %v1131
    %v1154 = vcombine.high %v1138, %v1138
    %v1155 = vcombine.high %v1145, %v1145
    %v1156 = vcombine.high %v1152, %v1152
    %1157 = vrot.lane.b32.xlu0 %v1131, 64
    %v1158 = vpop.permute.xlu0 %1157
    %1159 = vrot.lane.b32.xlu0 %v1145, 64
    %v1160 = vpop.permute.xlu0 %1159
    %1161 = vrot.lane.b32.xlu0 %v1153, 64
    %v1162 = vpop.permute.xlu0 %1161
    %1163 = vrot.lane.b32.xlu0 %v1155, 64
    %v1164 = vpop.permute.xlu0 %1163
    %1165 = vrot.lane.b32.xlu0 %v1138, 64
    %v1166 = vpop.permute.xlu0 %1165
    %1167 = vrot.lane.b32.xlu0 %v1152, 64
    %v1168 = vpop.permute.xlu0 %1167
    %1169 = vrot.lane.b32.xlu0 %v1154, 64
    %v1170 = vpop.permute.xlu0 %1169
    %1171 = vrot.lane.b32.xlu0 %v1156, 64
    %v1172 = vpop.permute.xlu0 %1171
    %v1181 = vmul.f32 %v1044, %v1158
    %v1182 = vmul.f32 %v1046, %v1160
    %v1183 = vmul.f32 %v1048, %v1162
    %v1184 = vmul.f32 %v1050, %v1164
    %v1185 = vmul.f32 %v1052, %v1166
    %v1186 = vmul.f32 %v1054, %v1168
    %v1187 = vmul.f32 %v1056, %v1170
    %v1188 = vmul.f32 %v1058, %v1172
    %v1189 = vmul.f32 %v1044, %v1099
    %v1190 = vmul.f32 %v1046, %v1100
    %v1191 = vmul.f32 %v1048, %v1101
    %v1192 = vmul.f32 %v1050, %v1102
    %v1193 = vmul.f32 %v1052, %v1103
    %v1194 = vmul.f32 %v1054, %v1104
    %v1195 = vmul.f32 %v1056, %v1105
    %v1196 = vmul.f32 %v1058, %v1106
    %1205 = vrot.lane.b32.xlu0 %v1189, 64
    %v1206 = vpop.permute.xlu0 %1205
    %1207 = vrot.lane.b32.xlu0 %v1190, 64
    %v1208 = vpop.permute.xlu0 %1207
    %1209 = vrot.lane.b32.xlu0 %v1191, 64
    %v1210 = vpop.permute.xlu0 %1209
    %1211 = vrot.lane.b32.xlu0 %v1192, 64
    %v1212 = vpop.permute.xlu0 %1211
    %1213 = vrot.lane.b32.xlu0 %v1193, 64
    %v1214 = vpop.permute.xlu0 %1213
    %1215 = vrot.lane.b32.xlu0 %v1194, 64
    %v1216 = vpop.permute.xlu0 %1215
    %1217 = vrot.lane.b32.xlu0 %v1195, 64
    %v1218 = vpop.permute.xlu0 %1217
    %1219 = vrot.lane.b32.xlu0 %v1196, 64
    %v1220 = vpop.permute.xlu0 %1219
    %v1229 = vadd.f32 %v1181, %v1206
    %v1230 = vadd.f32 %v1182, %v1208
    %v1231 = vadd.f32 %v1183, %v1210
    %v1232 = vadd.f32 %v1184, %v1212
    %v1233 = vadd.f32 %v1185, %v1214
    %v1234 = vadd.f32 %v1186, %v1216
    %v1235 = vadd.f32 %v1187, %v1218
    %v1236 = vadd.f32 %v1188, %v1220
    %v1237 = vtanh.pop %v1229
    %v1238 = vtanh.pop %v1230
    %v1239 = vtanh.pop %v1231
    %v1240 = vtanh.pop %v1232
    %v1241 = vtanh.pop %v1233
    %v1242 = vtanh.pop %v1234
    %v1243 = vtanh.pop %v1235
    %v1244 = vtanh.pop %v1236
    %v1253 = vrot.slane %v1044, 1
    %v1254 = vrot.slane %v1046, 1
    %v1255 = vrot.slane %v1048, 1
    %v1256 = vrot.slane %v1050, 1
    %v1257 = vrot.slane %v1052, 1
    %v1258 = vrot.slane %v1054, 1
    %v1259 = vrot.slane %v1056, 1
    %v1260 = vrot.slane %v1058, 1
    %1277 = vrot.lane.b32.xlu0 %v1237, 64
    %v1278 = vpop.permute.xlu0 %1277
    %1279 = vrot.lane.b32.xlu0 %v1238, 64
    %v1280 = vpop.permute.xlu0 %1279
    %1281 = vrot.lane.b32.xlu0 %v1239, 64
    %v1282 = vpop.permute.xlu0 %1281
    %1283 = vrot.lane.b32.xlu0 %v1240, 64
    %v1284 = vpop.permute.xlu0 %1283
    %1285 = vrot.lane.b32.xlu0 %v1241, 64
    %v1286 = vpop.permute.xlu0 %1285
    %1287 = vrot.lane.b32.xlu0 %v1242, 64
    %v1288 = vpop.permute.xlu0 %1287
    %1289 = vrot.lane.b32.xlu0 %v1243, 64
    %v1290 = vpop.permute.xlu0 %1289
    %1291 = vrot.lane.b32.xlu0 %v1244, 64
    %v1292 = vpop.permute.xlu0 %1291
    %v1301 = vmul.f32 %v1253, %v1278
    %v1302 = vmul.f32 %v1254, %v1280
    %v1303 = vmul.f32 %v1255, %v1282
    %v1304 = vmul.f32 %v1256, %v1284
    %v1305 = vmul.f32 %v1257, %v1286
    %v1306 = vmul.f32 %v1258, %v1288
    %v1307 = vmul.f32 %v1259, %v1290
    %v1308 = vmul.f32 %v1260, %v1292
    %v1309 = vpack.c.bf16 %v1301, %v1301
    %v1310 = vpack.c.bf16 %v1302, %v1302
    %v1311 = vpack.c.bf16 %v1303, %v1303
    %v1312 = vpack.c.bf16 %v1304, %v1304
    %v1313 = vpack.c.bf16 %v1305, %v1305
    %v1314 = vpack.c.bf16 %v1306, %v1306
    %v1315 = vpack.c.bf16 %v1307, %v1307
    %v1316 = vpack.c.bf16 %v1308, %v1308
    %v1325 = vunpack.c.l.b16 %v1309
    %v1326 = vunpack.c.l.b16 %v1310
    %v1327 = vunpack.c.l.b16 %v1311
    %v1328 = vunpack.c.l.b16 %v1312
    %v1329 = vunpack.c.l.b16 %v1313
    %v1330 = vunpack.c.l.b16 %v1314
    %v1331 = vunpack.c.l.b16 %v1315
    %v1332 = vunpack.c.l.b16 %v1316
    %v1333 = vrot.slane %v1326, 7
    %vm1334 = vcmask 1041409
    %v1335 = vsel %vm1334, %v1333, %v1325
    %v1336 = vrot.slane %v1327, 6
    %vm1337 = vcmask 1042434
    %v1338 = vsel %vm1337, %v1336, %v1335
    %v1339 = vrot.slane %v1328, 5
    %vm1340 = vcmask 1043459
    %v1341 = vsel %vm1340, %v1339, %v1338
    %v1342 = vrot.slane %v1329, 4
    %vm1343 = vcmask 1044484
    %v1344 = vsel %vm1343, %v1342, %v1341
    %v1345 = vrot.slane %v1330, 3
    %vm1346 = vcmask 1045509
    %v1347 = vsel %vm1346, %v1345, %v1344
    %v1348 = vrot.slane %v1331, 2
    %vm1349 = vcmask 1046534
    %v1350 = vsel %vm1349, %v1348, %v1347
    %v1351 = vrot.slane %v1332, 1
    %vm1352 = vcmask 1047559
    %v1353 = vsel %vm1352, %v1351, %v1350
    %v1354 = vpack.c.b16 %v1353, %v1353
    %v1356 = vsel %vm331, %v1354, 0
    %1358 = vmatprep.subr.bf16.mxu0 %v316
    %1359 = vmatpush1.bf16.msra.mxu0 %v315
    %1360 = vmatprep.subr.bf16.mxu0 %v318
    %1361 = vmatpush1.bf16.msra.mxu0 %v317
    %1362 = vmatprep.subr.bf16.mxu0 %v320
    %1363 = vmatpush1.bf16.msra.mxu0 %v319
    %1364 = vmatprep.subr.bf16.mxu0 %v322
    %1365 = vmatpush1.bf16.msra.mxu0 %v321
    %1366 = vmatprep.subr.bf16.mxu0 0
    %1367 = vmatpush1.bf16.msra.mxu0 0
    %1368 = vmatprep.subr.bf16.mxu0 0
    %1369 = vmatpush1.bf16.msra.mxu0 0
    %1370 = vmatprep.subr.bf16.mxu0 0
    %1371 = vmatpush1.bf16.msra.mxu0 0
    %1372 = vmatprep.subr.bf16.mxu0 0
    %1373 = vmatpush1.bf16.msra.mxu0 0
    %1374 = vmatprep.subr.bf16.mxu0 0
    %1375 = vmatpush1.bf16.msra.mxu0 0
    %1376 = vmatprep.subr.bf16.mxu0 0
    %1377 = vmatpush1.bf16.msra.mxu0 0
    %1378 = vmatprep.subr.bf16.mxu0 0
    %1379 = vmatpush1.bf16.msra.mxu0 0
    %1380 = vmatprep.subr.bf16.mxu0 0
    %1381 = vmatpush1.bf16.msra.mxu0 0
    %1382 = vmatprep.subr.bf16.mxu0 0
    %1383 = vmatpush1.bf16.msra.mxu0 0
    %1384 = vmatprep.subr.bf16.mxu0 0
    %1385 = vmatpush1.bf16.msra.mxu0 0
    %1386 = vmatprep.subr.bf16.mxu0 0
    %1387 = vmatpush1.bf16.msra.mxu0 0
    %1388 = vmatprep.subr.bf16.mxu0 0
    %1389 = vmatpush1.bf16.msra.mxu0 0
    %1390 = vmatprep.mubr.bf16.mxu0 0
    %1391 = vmatmul.mubr.bf16.gmra.mrb[0].mxu0 %v1356
    %v1392 = vpop.f32.mrb[0].mxu0
    %v1393 = vadd.f32 0.0, %v1392
    %v1394 = vpop.f32.mrb[0].mxu0
    %v1395 = vadd.f32 0.0, %v1394
    %v1396 = vpop.f32.mrb[0].mxu0
    %v1397 = vpop.f32.mrb[0].mxu0
    %1398 = vdwg.mxu0
    %s1399 = scalar_lea.vmem [#allocation4], 2
    %v1400 = vld [vmem:[%s1399] ss:$8 sm:$0x3]
    %s1401 = scalar_lea.vmem [#allocation4], 34
    %v1402 = vld [vmem:[%s1401] ss:$8 sm:$0x3]
    %s1403 = scalar_lea.vmem [#allocation4], 66
    %v1404 = vld [vmem:[%s1403] ss:$8 sm:$0x3]
    %s1405 = scalar_lea.vmem [#allocation4], 98
    %v1406 = vld [vmem:[%s1405] ss:$8 sm:$0x3]
    %s1407 = scalar_lea.vmem [#allocation4], 130
    %v1408 = vld [vmem:[%s1407] ss:$8 sm:$0x3]
    %s1409 = scalar_lea.vmem [#allocation4], 162
    %v1410 = vld [vmem:[%s1409] ss:$8 sm:$0x3]
    %s1411 = scalar_lea.vmem [#allocation4], 194
    %v1412 = vld [vmem:[%s1411] ss:$8 sm:$0x3]
    %s1413 = scalar_lea.vmem [#allocation4], 226
    %v1414 = vld [vmem:[%s1413] ss:$8 sm:$0x3]
    %v1417 = vcombine.low %v1393, %v1395
    %v1418 = vcombine.high %v1393, %v1395
    %v1420 = vunpack.c.l.s4 1966171168
    %v1421 = vunpack.c.0.s8 %v1420
    %v1422 = vlaneseq
    %v1423 = vshrl.u32 %v1422, 7
    %v1424 = vsub.s32 %v1421, %v1423
    %v1425 = vrot.slane %v1417, %v1424
    %v1427 = vunpack.c.l.s4 1966171168
    %v1428 = vunpack.c.0.s8 %v1427
    %v1429 = vlaneseq
    %v1430 = vshrl.u32 %v1429, 7
    %v1431 = vsub.s32 %v1428, %v1430
    %v1432 = vrot.slane %v1418, %v1431
    %v1433 = vcombine.high %v1425, %v1425
    %v1434 = vcombine.high %v1432, %v1432
    %v1436 = vunpack.c.l.s4 1966171168
    %v1437 = vunpack.c.0.s8 %v1436
    %v1438 = vlaneseq
    %v1439 = vshrl.u32 %v1438, 7
    %v1440 = vsub.s32 %v1437, %v1439
    %v1441 = vrot.slane %v1425, %v1440
    %v1443 = vunpack.c.l.s4 1966171168
    %v1444 = vunpack.c.0.s8 %v1443
    %v1445 = vlaneseq
    %v1446 = vshrl.u32 %v1445, 7
    %v1447 = vsub.s32 %v1444, %v1446
    %v1448 = vrot.slane %v1432, %v1447
    %v1450 = vunpack.c.l.s4 1966171168
    %v1451 = vunpack.c.0.s8 %v1450
    %v1452 = vlaneseq
    %v1453 = vshrl.u32 %v1452, 7
    %v1454 = vsub.s32 %v1451, %v1453
    %v1455 = vrot.slane %v1433, %v1454
    %v1457 = vunpack.c.l.s4 1966171168
    %v1458 = vunpack.c.0.s8 %v1457
    %v1459 = vlaneseq
    %v1460 = vshrl.u32 %v1459, 7
    %v1461 = vsub.s32 %v1458, %v1460
    %v1462 = vrot.slane %v1434, %v1461
    %v1463 = vcombine.high %v1441, %v1441
    %v1464 = vcombine.high %v1448, %v1448
    %v1465 = vcombine.high %v1455, %v1455
    %v1466 = vcombine.high %v1462, %v1462
    %v1475 = vadd.f32 %v1400, %v1441
    %v1476 = vadd.f32 %v1402, %v1455
    %v1477 = vadd.f32 %v1404, %v1463
    %v1478 = vadd.f32 %v1406, %v1465
    %v1479 = vadd.f32 %v1408, %v1448
    %v1480 = vadd.f32 %v1410, %v1462
    %v1481 = vadd.f32 %v1412, %v1464
    %v1482 = vadd.f32 %v1414, %v1466
    %v1483 = vxor.u32 %v1475, 2147483648
    %v1484 = vxor.u32 %v1476, 2147483648
    %v1485 = vxor.u32 %v1477, 2147483648
    %v1486 = vxor.u32 %v1478, 2147483648
    %v1487 = vxor.u32 %v1479, 2147483648
    %v1488 = vxor.u32 %v1480, 2147483648
    %v1489 = vxor.u32 %v1481, 2147483648
    %v1490 = vxor.u32 %v1482, 2147483648
    %v1491 = vmul.f32 %v1483, 1.442695
    %v1492 = vpow.pop %v1491
    %v1493 = vmul.f32 %v1484, 1.442695
    %v1494 = vpow.pop %v1493
    %v1495 = vmul.f32 %v1485, 1.442695
    %v1496 = vpow.pop %v1495
    %v1497 = vmul.f32 %v1486, 1.442695
    %v1498 = vpow.pop %v1497
    %v1499 = vmul.f32 %v1487, 1.442695
    %v1500 = vpow.pop %v1499
    %v1501 = vmul.f32 %v1488, 1.442695
    %v1502 = vpow.pop %v1501
    %v1503 = vmul.f32 %v1489, 1.442695
    %v1504 = vpow.pop %v1503
    %v1505 = vmul.f32 %v1490, 1.442695
    %v1506 = vpow.pop %v1505
    %v1507 = vadd.f32 %v1492, 1.0
    %v1508 = vadd.f32 %v1494, 1.0
    %v1509 = vadd.f32 %v1496, 1.0
    %v1510 = vadd.f32 %v1498, 1.0
    %v1511 = vadd.f32 %v1500, 1.0
    %v1512 = vadd.f32 %v1502, 1.0
    %v1513 = vadd.f32 %v1504, 1.0
    %v1514 = vadd.f32 %v1506, 1.0
    %v1515 = vrcp.pop %v1507
    %v1516 = vmul.f32 1.0, %v1515
    %v1517 = vrcp.pop %v1508
    %v1518 = vmul.f32 1.0, %v1517
    %v1519 = vrcp.pop %v1509
    %v1520 = vmul.f32 1.0, %v1519
    %v1521 = vrcp.pop %v1510
    %v1522 = vmul.f32 1.0, %v1521
    %v1523 = vrcp.pop %v1511
    %v1524 = vmul.f32 1.0, %v1523
    %v1525 = vrcp.pop %v1512
    %v1526 = vmul.f32 1.0, %v1525
    %v1527 = vrcp.pop %v1513
    %v1528 = vmul.f32 1.0, %v1527
    %v1529 = vrcp.pop %v1514
    %v1530 = vmul.f32 1.0, %v1529
    %1539 = vrot.lane.b32.xlu0 %v1475, 64
    %v1540 = vpop.permute.xlu0 %1539
    %1541 = vrot.lane.b32.xlu0 %v1476, 64
    %v1542 = vpop.permute.xlu0 %1541
    %1543 = vrot.lane.b32.xlu0 %v1477, 64
    %v1544 = vpop.permute.xlu0 %1543
    %1545 = vrot.lane.b32.xlu0 %v1478, 64
    %v1546 = vpop.permute.xlu0 %1545
    %1547 = vrot.lane.b32.xlu0 %v1479, 64
    %v1548 = vpop.permute.xlu0 %1547
    %1549 = vrot.lane.b32.xlu0 %v1480, 64
    %v1550 = vpop.permute.xlu0 %1549
    %1551 = vrot.lane.b32.xlu0 %v1481, 64
    %v1552 = vpop.permute.xlu0 %1551
    %1553 = vrot.lane.b32.xlu0 %v1482, 64
    %v1554 = vpop.permute.xlu0 %1553
    %v1555 = vrot.slane %v1540, 1
    %v1556 = vrot.slane %v1542, 1
    %v1557 = vrot.slane %v1544, 1
    %v1558 = vrot.slane %v1546, 1
    %v1559 = vrot.slane %v1548, 1
    %v1560 = vrot.slane %v1550, 1
    %v1561 = vrot.slane %v1552, 1
    %v1562 = vrot.slane %v1554, 1
    %v1571 = vtanh.pop %v1555
    %v1572 = vtanh.pop %v1556
    %v1573 = vtanh.pop %v1557
    %v1574 = vtanh.pop %v1558
    %v1575 = vtanh.pop %v1559
    %v1576 = vtanh.pop %v1560
    %v1577 = vtanh.pop %v1561
    %v1578 = vtanh.pop %v1562
    %v1579 = vmul.f32 %v1516, %v1229
    %v1580 = vmul.f32 %v1518, %v1230
    %v1581 = vmul.f32 %v1520, %v1231
    %v1582 = vmul.f32 %v1522, %v1232
    %v1583 = vmul.f32 %v1524, %v1233
    %v1584 = vmul.f32 %v1526, %v1234
    %v1585 = vmul.f32 %v1528, %v1235
    %v1586 = vmul.f32 %v1530, %v1236
    %v1587 = vmul.f32 %v1516, %v1571
    %v1588 = vmul.f32 %v1518, %v1572
    %v1589 = vmul.f32 %v1520, %v1573
    %v1590 = vmul.f32 %v1522, %v1574
    %v1591 = vmul.f32 %v1524, %v1575
    %v1592 = vmul.f32 %v1526, %v1576
    %v1593 = vmul.f32 %v1528, %v1577
    %v1594 = vmul.f32 %v1530, %v1578
    %1603 = vrot.lane.b32.xlu0 %v1587, 64
    %v1604 = vpop.permute.xlu0 %1603
    %1605 = vrot.lane.b32.xlu0 %v1588, 64
    %v1606 = vpop.permute.xlu0 %1605
    %1607 = vrot.lane.b32.xlu0 %v1589, 64
    %v1608 = vpop.permute.xlu0 %1607
    %1609 = vrot.lane.b32.xlu0 %v1590, 64
    %v1610 = vpop.permute.xlu0 %1609
    %1611 = vrot.lane.b32.xlu0 %v1591, 64
    %v1612 = vpop.permute.xlu0 %1611
    %1613 = vrot.lane.b32.xlu0 %v1592, 64
    %v1614 = vpop.permute.xlu0 %1613
    %1615 = vrot.lane.b32.xlu0 %v1593, 64
    %v1616 = vpop.permute.xlu0 %1615
    %1617 = vrot.lane.b32.xlu0 %v1594, 64
    %v1618 = vpop.permute.xlu0 %1617
    %v1627 = vadd.f32 %v1579, %v1604
    %v1628 = vadd.f32 %v1580, %v1606
    %v1629 = vadd.f32 %v1581, %v1608
    %v1630 = vadd.f32 %v1582, %v1610
    %v1631 = vadd.f32 %v1583, %v1612
    %v1632 = vadd.f32 %v1584, %v1614
    %v1633 = vadd.f32 %v1585, %v1616
    %v1634 = vadd.f32 %v1586, %v1618
    %v1635 = vtanh.pop %v1627
    %v1636 = vtanh.pop %v1628
    %v1637 = vtanh.pop %v1629
    %v1638 = vtanh.pop %v1630
    %v1639 = vtanh.pop %v1631
    %v1640 = vtanh.pop %v1632
    %v1641 = vtanh.pop %v1633
    %v1642 = vtanh.pop %v1634
    %v1651 = vrot.slane %v1516, 1
    %v1652 = vrot.slane %v1518, 1
    %v1653 = vrot.slane %v1520, 1
    %v1654 = vrot.slane %v1522, 1
    %v1655 = vrot.slane %v1524, 1
    %v1656 = vrot.slane %v1526, 1
    %v1657 = vrot.slane %v1528, 1
    %v1658 = vrot.slane %v1530, 1
    %1675 = vrot.lane.b32.xlu0 %v1635, 64
    %v1676 = vpop.permute.xlu0 %1675
    %1677 = vrot.lane.b32.xlu0 %v1636, 64
    %v1678 = vpop.permute.xlu0 %1677
    %1679 = vrot.lane.b32.xlu0 %v1637, 64
    %v1680 = vpop.permute.xlu0 %1679
    %1681 = vrot.lane.b32.xlu0 %v1638, 64
    %v1682 = vpop.permute.xlu0 %1681
    %1683 = vrot.lane.b32.xlu0 %v1639, 64
    %v1684 = vpop.permute.xlu0 %1683
    %1685 = vrot.lane.b32.xlu0 %v1640, 64
    %v1686 = vpop.permute.xlu0 %1685
    %1687 = vrot.lane.b32.xlu0 %v1641, 64
    %v1688 = vpop.permute.xlu0 %1687
    %1689 = vrot.lane.b32.xlu0 %v1642, 64
    %v1690 = vpop.permute.xlu0 %1689
    %v1699 = vmul.f32 %v1651, %v1676
    %v1700 = vmul.f32 %v1652, %v1678
    %v1701 = vmul.f32 %v1653, %v1680
    %v1702 = vmul.f32 %v1654, %v1682
    %v1703 = vmul.f32 %v1655, %v1684
    %v1704 = vmul.f32 %v1656, %v1686
    %v1705 = vmul.f32 %v1657, %v1688
    %v1706 = vmul.f32 %v1658, %v1690
    %v1707 = vpack.c.bf16 %v1699, %v1699
    %v1708 = vpack.c.bf16 %v1700, %v1700
    %v1709 = vpack.c.bf16 %v1701, %v1701
    %v1710 = vpack.c.bf16 %v1702, %v1702
    %v1711 = vpack.c.bf16 %v1703, %v1703
    %v1712 = vpack.c.bf16 %v1704, %v1704
    %v1713 = vpack.c.bf16 %v1705, %v1705
    %v1714 = vpack.c.bf16 %v1706, %v1706
    %v1723 = vunpack.c.l.b16 %v1707
    %v1724 = vunpack.c.l.b16 %v1708
    %v1725 = vunpack.c.l.b16 %v1709
    %v1726 = vunpack.c.l.b16 %v1710
    %v1727 = vunpack.c.l.b16 %v1711
    %v1728 = vunpack.c.l.b16 %v1712
    %v1729 = vunpack.c.l.b16 %v1713
    %v1730 = vunpack.c.l.b16 %v1714
    %v1731 = vrot.slane %v1724, 7
    %v1732 = vsel %vm1334, %v1731, %v1723
    %v1733 = vrot.slane %v1725, 6
    %v1734 = vsel %vm1337, %v1733, %v1732
    %v1735 = vrot.slane %v1726, 5
    %v1736 = vsel %vm1340, %v1735, %v1734
    %v1737 = vrot.slane %v1727, 4
    %v1738 = vsel %vm1343, %v1737, %v1736
    %v1739 = vrot.slane %v1728, 3
    %v1740 = vsel %vm1346, %v1739, %v1738
    %v1741 = vrot.slane %v1729, 2
    %v1742 = vsel %vm1349, %v1741, %v1740
    %v1743 = vrot.slane %v1730, 1
    %v1744 = vsel %vm1352, %v1743, %v1742
    %v1745 = vpack.c.b16 %v1744, %v1744
    %v1747 = vsel %vm331, %v1745, 0
    %1749 = vmatprep.subr.bf16.mxu0 %v316
    %1750 = vmatpush1.bf16.msra.mxu0 %v315
    %1751 = vmatprep.subr.bf16.mxu0 %v318
    %1752 = vmatpush1.bf16.msra.mxu0 %v317
    %1753 = vmatprep.subr.bf16.mxu0 %v320
    %1754 = vmatpush1.bf16.msra.mxu0 %v319
    %1755 = vmatprep.subr.bf16.mxu0 %v322
    %1756 = vmatpush1.bf16.msra.mxu0 %v321
    %1757 = vmatprep.subr.bf16.mxu0 0
    %1758 = vmatpush1.bf16.msra.mxu0 0
    %1759 = vmatprep.subr.bf16.mxu0 0
    %1760 = vmatpush1.bf16.msra.mxu0 0
    %1761 = vmatprep.subr.bf16.mxu0 0
    %1762 = vmatpush1.bf16.msra.mxu0 0
    %1763 = vmatprep.subr.bf16.mxu0 0
    %1764 = vmatpush1.bf16.msra.mxu0 0
    %1765 = vmatprep.subr.bf16.mxu0 0
    %1766 = vmatpush1.bf16.msra.mxu0 0
    %1767 = vmatprep.subr.bf16.mxu0 0
    %1768 = vmatpush1.bf16.msra.mxu0 0
    %1769 = vmatprep.subr.bf16.mxu0 0
    %1770 = vmatpush1.bf16.msra.mxu0 0
    %1771 = vmatprep.subr.bf16.mxu0 0
    %1772 = vmatpush1.bf16.msra.mxu0 0
    %1773 = vmatprep.subr.bf16.mxu0 0
    %1774 = vmatpush1.bf16.msra.mxu0 0
    %1775 = vmatprep.subr.bf16.mxu0 0
    %1776 = vmatpush1.bf16.msra.mxu0 0
    %1777 = vmatprep.subr.bf16.mxu0 0
    %1778 = vmatpush1.bf16.msra.mxu0 0
    %1779 = vmatprep.subr.bf16.mxu0 0
    %1780 = vmatpush1.bf16.msra.mxu0 0
    %1781 = vmatprep.mubr.bf16.mxu0 0
    %1782 = vmatmul.mubr.bf16.gmra.mrb[0].mxu0 %v1747
    %v1783 = vpop.f32.mrb[0].mxu0
    %v1784 = vadd.f32 0.0, %v1783
    %v1785 = vpop.f32.mrb[0].mxu0
    %v1786 = vadd.f32 0.0, %v1785
    %v1787 = vpop.f32.mrb[0].mxu0
    %v1788 = vpop.f32.mrb[0].mxu0
    %1789 = vdwg.mxu0
    %s1790 = scalar_lea.vmem [#allocation4], 3
    %v1791 = vld [vmem:[%s1790] ss:$8 sm:$0x3]
    %s1792 = scalar_lea.vmem [#allocation4], 35
    %v1793 = vld [vmem:[%s1792] ss:$8 sm:$0x3]
    %s1794 = scalar_lea.vmem [#allocation4], 67
    %v1795 = vld [vmem:[%s1794] ss:$8 sm:$0x3]
    %s1796 = scalar_lea.vmem [#allocation4], 99
    %v1797 = vld [vmem:[%s1796] ss:$8 sm:$0x3]
    %s1798 = scalar_lea.vmem [#allocation4], 131
    %v1799 = vld [vmem:[%s1798] ss:$8 sm:$0x3]
    %s1800 = scalar_lea.vmem [#allocation4], 163
    %v1801 = vld [vmem:[%s1800] ss:$8 sm:$0x3]
    %s1802 = scalar_lea.vmem [#allocation4], 195
    %v1803 = vld [vmem:[%s1802] ss:$8 sm:$0x3]
    %s1804 = scalar_lea.vmem [#allocation4], 227
    %v1805 = vld [vmem:[%s1804] ss:$8 sm:$0x3]
    %v1808 = vcombine.low %v1784, %v1786
    %v1809 = vcombine.high %v1784, %v1786
    %v1811 = vunpack.c.l.s4 1966171168
    %v1812 = vunpack.c.0.s8 %v1811
    %v1813 = vlaneseq
    %v1814 = vshrl.u32 %v1813, 7
    %v1815 = vsub.s32 %v1812, %v1814
    %v1816 = vrot.slane %v1808, %v1815
    %v1818 = vunpack.c.l.s4 1966171168
    %v1819 = vunpack.c.0.s8 %v1818
    %v1820 = vlaneseq
    %v1821 = vshrl.u32 %v1820, 7
    %v1822 = vsub.s32 %v1819, %v1821
    %v1823 = vrot.slane %v1809, %v1822
    %v1824 = vcombine.high %v1816, %v1816
    %v1825 = vcombine.high %v1823, %v1823
    %v1827 = vunpack.c.l.s4 1966171168
    %v1828 = vunpack.c.0.s8 %v1827
    %v1829 = vlaneseq
    %v1830 = vshrl.u32 %v1829, 7
    %v1831 = vsub.s32 %v1828, %v1830
    %v1832 = vrot.slane %v1816, %v1831
    %v1834 = vunpack.c.l.s4 1966171168
    %v1835 = vunpack.c.0.s8 %v1834
    %v1836 = vlaneseq
    %v1837 = vshrl.u32 %v1836, 7
    %v1838 = vsub.s32 %v1835, %v1837
    %v1839 = vrot.slane %v1823, %v1838
    %v1841 = vunpack.c.l.s4 1966171168
    %v1842 = vunpack.c.0.s8 %v1841
    %v1843 = vlaneseq
    %v1844 = vshrl.u32 %v1843, 7
    %v1845 = vsub.s32 %v1842, %v1844
    %v1846 = vrot.slane %v1824, %v1845
    %v1848 = vunpack.c.l.s4 1966171168
    %v1849 = vunpack.c.0.s8 %v1848
    %v1850 = vlaneseq
    %v1851 = vshrl.u32 %v1850, 7
    %v1852 = vsub.s32 %v1849, %v1851
    %v1853 = vrot.slane %v1825, %v1852
    %v1854 = vcombine.high %v1832, %v1832
    %v1855 = vcombine.high %v1839, %v1839
    %v1856 = vcombine.high %v1846, %v1846
    %v1857 = vcombine.high %v1853, %v1853
    %v1866 = vadd.f32 %v1791, %v1832
    %v1867 = vadd.f32 %v1793, %v1846
    %v1868 = vadd.f32 %v1795, %v1854
    %v1869 = vadd.f32 %v1797, %v1856
    %v1870 = vadd.f32 %v1799, %v1839
    %v1871 = vadd.f32 %v1801, %v1853
    %v1872 = vadd.f32 %v1803, %v1855
    %v1873 = vadd.f32 %v1805, %v1857
    %v1874 = vxor.u32 %v1866, 2147483648
    %v1875 = vxor.u32 %v1867, 2147483648
    %v1876 = vxor.u32 %v1868, 2147483648
    %v1877 = vxor.u32 %v1869, 2147483648
    %v1878 = vxor.u32 %v1870, 2147483648
    %v1879 = vxor.u32 %v1871, 2147483648
    %v1880 = vxor.u32 %v1872, 2147483648
    %v1881 = vxor.u32 %v1873, 2147483648
    %v1882 = vmul.f32 %v1874, 1.442695
    %v1883 = vpow.pop %v1882
    %v1884 = vmul.f32 %v1875, 1.442695
    %v1885 = vpow.pop %v1884
    %v1886 = vmul.f32 %v1876, 1.442695
    %v1887 = vpow.pop %v1886
    %v1888 = vmul.f32 %v1877, 1.442695
    %v1889 = vpow.pop %v1888
    %v1890 = vmul.f32 %v1878, 1.442695
    %v1891 = vpow.pop %v1890
    %v1892 = vmul.f32 %v1879, 1.442695
    %v1893 = vpow.pop %v1892
    %v1894 = vmul.f32 %v1880, 1.442695
    %v1895 = vpow.pop %v1894
    %v1896 = vmul.f32 %v1881, 1.442695
    %v1897 = vpow.pop %v1896
    %v1898 = vadd.f32 %v1883, 1.0
    %v1899 = vadd.f32 %v1885, 1.0
    %v1900 = vadd.f32 %v1887, 1.0
    %v1901 = vadd.f32 %v1889, 1.0
    %v1902 = vadd.f32 %v1891, 1.0
    %v1903 = vadd.f32 %v1893, 1.0
    %v1904 = vadd.f32 %v1895, 1.0
    %v1905 = vadd.f32 %v1897, 1.0
    %v1906 = vrcp.pop %v1898
    %v1907 = vmul.f32 1.0, %v1906
    %v1908 = vrcp.pop %v1899
    %v1909 = vmul.f32 1.0, %v1908
    %v1910 = vrcp.pop %v1900
    %v1911 = vmul.f32 1.0, %v1910
    %v1912 = vrcp.pop %v1901
    %v1913 = vmul.f32 1.0, %v1912
    %v1914 = vrcp.pop %v1902
    %v1915 = vmul.f32 1.0, %v1914
    %v1916 = vrcp.pop %v1903
    %v1917 = vmul.f32 1.0, %v1916
    %v1918 = vrcp.pop %v1904
    %v1919 = vmul.f32 1.0, %v1918
    %v1920 = vrcp.pop %v1905
    %v1921 = vmul.f32 1.0, %v1920
    %1930 = vrot.lane.b32.xlu0 %v1866, 64
    %v1931 = vpop.permute.xlu0 %1930
    %1932 = vrot.lane.b32.xlu0 %v1867, 64
    %v1933 = vpop.permute.xlu0 %1932
    %1934 = vrot.lane.b32.xlu0 %v1868, 64
    %v1935 = vpop.permute.xlu0 %1934
    %1936 = vrot.lane.b32.xlu0 %v1869, 64
    %v1937 = vpop.permute.xlu0 %1936
    %1938 = vrot.lane.b32.xlu0 %v1870, 64
    %v1939 = vpop.permute.xlu0 %1938
    %1940 = vrot.lane.b32.xlu0 %v1871, 64
    %v1941 = vpop.permute.xlu0 %1940
    %1942 = vrot.lane.b32.xlu0 %v1872, 64
    %v1943 = vpop.permute.xlu0 %1942
    %1944 = vrot.lane.b32.xlu0 %v1873, 64
    %v1945 = vpop.permute.xlu0 %1944
    %v1946 = vrot.slane %v1931, 1
    %v1947 = vrot.slane %v1933, 1
    %v1948 = vrot.slane %v1935, 1
    %v1949 = vrot.slane %v1937, 1
    %v1950 = vrot.slane %v1939, 1
    %v1951 = vrot.slane %v1941, 1
    %v1952 = vrot.slane %v1943, 1
    %v1953 = vrot.slane %v1945, 1
    %v1962 = vtanh.pop %v1946
    %v1963 = vtanh.pop %v1947
    %v1964 = vtanh.pop %v1948
    %v1965 = vtanh.pop %v1949
    %v1966 = vtanh.pop %v1950
    %v1967 = vtanh.pop %v1951
    %v1968 = vtanh.pop %v1952
    %v1969 = vtanh.pop %v1953
    %v1970 = vmul.f32 %v1907, %v1627
    %v1971 = vmul.f32 %v1909, %v1628
    %v1972 = vmul.f32 %v1911, %v1629
    %v1973 = vmul.f32 %v1913, %v1630
    %v1974 = vmul.f32 %v1915, %v1631
    %v1975 = vmul.f32 %v1917, %v1632
    %v1976 = vmul.f32 %v1919, %v1633
    %v1977 = vmul.f32 %v1921, %v1634
    %v1978 = vmul.f32 %v1907, %v1962
    %v1979 = vmul.f32 %v1909, %v1963
    %v1980 = vmul.f32 %v1911, %v1964
    %v1981 = vmul.f32 %v1913, %v1965
    %v1982 = vmul.f32 %v1915, %v1966
    %v1983 = vmul.f32 %v1917, %v1967
    %v1984 = vmul.f32 %v1919, %v1968
    %v1985 = vmul.f32 %v1921, %v1969
    %1994 = vrot.lane.b32.xlu0 %v1978, 64
    %v1995 = vpop.permute.xlu0 %1994
    %1996 = vrot.lane.b32.xlu0 %v1979, 64
    %v1997 = vpop.permute.xlu0 %1996
    %1998 = vrot.lane.b32.xlu0 %v1980, 64
    %v1999 = vpop.permute.xlu0 %1998
    %2000 = vrot.lane.b32.xlu0 %v1981, 64
    %v2001 = vpop.permute.xlu0 %2000
    %2002 = vrot.lane.b32.xlu0 %v1982, 64
    %v2003 = vpop.permute.xlu0 %2002
    %2004 = vrot.lane.b32.xlu0 %v1983, 64
    %v2005 = vpop.permute.xlu0 %2004
    %2006 = vrot.lane.b32.xlu0 %v1984, 64
    %v2007 = vpop.permute.xlu0 %2006
    %2008 = vrot.lane.b32.xlu0 %v1985, 64
    %v2009 = vpop.permute.xlu0 %2008
    %v2018 = vadd.f32 %v1970, %v1995
    %v2019 = vadd.f32 %v1971, %v1997
    %v2020 = vadd.f32 %v1972, %v1999
    %v2021 = vadd.f32 %v1973, %v2001
    %v2022 = vadd.f32 %v1974, %v2003
    %v2023 = vadd.f32 %v1975, %v2005
    %v2024 = vadd.f32 %v1976, %v2007
    %v2025 = vadd.f32 %v1977, %v2009
    %v2026 = vtanh.pop %v2018
    %v2027 = vtanh.pop %v2019
    %v2028 = vtanh.pop %v2020
    %v2029 = vtanh.pop %v2021
    %v2030 = vtanh.pop %v2022
    %v2031 = vtanh.pop %v2023
    %v2032 = vtanh.pop %v2024
    %v2033 = vtanh.pop %v2025
    %v2042 = vrot.slane %v1907, 1
    %v2043 = vrot.slane %v1909, 1
    %v2044 = vrot.slane %v1911, 1
    %v2045 = vrot.slane %v1913, 1
    %v2046 = vrot.slane %v1915, 1
    %v2047 = vrot.slane %v1917, 1
    %v2048 = vrot.slane %v1919, 1
    %v2049 = vrot.slane %v1921, 1
    %2066 = vrot.lane.b32.xlu0 %v2026, 64
    %v2067 = vpop.permute.xlu0 %2066
    %2068 = vrot.lane.b32.xlu0 %v2027, 64
    %v2069 = vpop.permute.xlu0 %2068
    %2070 = vrot.lane.b32.xlu0 %v2028, 64
    %v2071 = vpop.permute.xlu0 %2070
    %2072 = vrot.lane.b32.xlu0 %v2029, 64
    %v2073 = vpop.permute.xlu0 %2072
    %2074 = vrot.lane.b32.xlu0 %v2030, 64
    %v2075 = vpop.permute.xlu0 %2074
    %2076 = vrot.lane.b32.xlu0 %v2031, 64
    %v2077 = vpop.permute.xlu0 %2076
    %2078 = vrot.lane.b32.xlu0 %v2032, 64
    %v2079 = vpop.permute.xlu0 %2078
    %2080 = vrot.lane.b32.xlu0 %v2033, 64
    %v2081 = vpop.permute.xlu0 %2080
    %v2090 = vmul.f32 %v2042, %v2067
    %v2091 = vmul.f32 %v2043, %v2069
    %v2092 = vmul.f32 %v2044, %v2071
    %v2093 = vmul.f32 %v2045, %v2073
    %v2094 = vmul.f32 %v2046, %v2075
    %v2095 = vmul.f32 %v2047, %v2077
    %v2096 = vmul.f32 %v2048, %v2079
    %v2097 = vmul.f32 %v2049, %v2081
    %v2098 = vpack.c.bf16 %v2090, %v2090
    %v2099 = vpack.c.bf16 %v2091, %v2091
    %v2100 = vpack.c.bf16 %v2092, %v2092
    %v2101 = vpack.c.bf16 %v2093, %v2093
    %v2102 = vpack.c.bf16 %v2094, %v2094
    %v2103 = vpack.c.bf16 %v2095, %v2095
    %v2104 = vpack.c.bf16 %v2096, %v2096
    %v2105 = vpack.c.bf16 %v2097, %v2097
    %v2114 = vunpack.c.l.b16 %v2098
    %v2115 = vunpack.c.l.b16 %v2099
    %v2116 = vunpack.c.l.b16 %v2100
    %v2117 = vunpack.c.l.b16 %v2101
    %v2118 = vunpack.c.l.b16 %v2102
    %v2119 = vunpack.c.l.b16 %v2103
    %v2120 = vunpack.c.l.b16 %v2104
    %v2121 = vunpack.c.l.b16 %v2105
    %v2122 = vrot.slane %v2115, 7
    %v2123 = vsel %vm1334, %v2122, %v2114
    %v2124 = vrot.slane %v2116, 6
    %v2125 = vsel %vm1337, %v2124, %v2123
    %v2126 = vrot.slane %v2117, 5
    %v2127 = vsel %vm1340, %v2126, %v2125
    %v2128 = vrot.slane %v2118, 4
    %v2129 = vsel %vm1343, %v2128, %v2127
    %v2130 = vrot.slane %v2119, 3
    %v2131 = vsel %vm1346, %v2130, %v2129
    %v2132 = vrot.slane %v2120, 2
    %v2133 = vsel %vm1349, %v2132, %v2131
    %v2134 = vrot.slane %v2121, 1
    %v2135 = vsel %vm1352, %v2134, %v2133
    %v2136 = vpack.c.b16 %v2135, %v2135
    %v2138 = vsel %vm331, %v2136, 0
    %2140 = vmatprep.subr.bf16.mxu0 %v316
    %2141 = vmatpush1.bf16.msra.mxu0 %v315
    %2142 = vmatprep.subr.bf16.mxu0 %v318
    %2143 = vmatpush1.bf16.msra.mxu0 %v317
    %2144 = vmatprep.subr.bf16.mxu0 %v320
    %2145 = vmatpush1.bf16.msra.mxu0 %v319
    %2146 = vmatprep.subr.bf16.mxu0 %v322
    %2147 = vmatpush1.bf16.msra.mxu0 %v321
    %2148 = vmatprep.subr.bf16.mxu0 0
    %2149 = vmatpush1.bf16.msra.mxu0 0
    %2150 = vmatprep.subr.bf16.mxu0 0
    %2151 = vmatpush1.bf16.msra.mxu0 0
    %2152 = vmatprep.subr.bf16.mxu0 0
    %2153 = vmatpush1.bf16.msra.mxu0 0
    %2154 = vmatprep.subr.bf16.mxu0 0
    %2155 = vmatpush1.bf16.msra.mxu0 0
    %2156 = vmatprep.subr.bf16.mxu0 0
    %2157 = vmatpush1.bf16.msra.mxu0 0
    %2158 = vmatprep.subr.bf16.mxu0 0
    %2159 = vmatpush1.bf16.msra.mxu0 0
    %2160 = vmatprep.subr.bf16.mxu0 0
    %2161 = vmatpush1.bf16.msra.mxu0 0
    %2162 = vmatprep.subr.bf16.mxu0 0
    %2163 = vmatpush1.bf16.msra.mxu0 0
    %2164 = vmatprep.subr.bf16.mxu0 0
    %2165 = vmatpush1.bf16.msra.mxu0 0
    %2166 = vmatprep.subr.bf16.mxu0 0
    %2167 = vmatpush1.bf16.msra.mxu0 0
    %2168 = vmatprep.subr.bf16.mxu0 0
    %2169 = vmatpush1.bf16.msra.mxu0 0
    %2170 = vmatprep.subr.bf16.mxu0 0
    %2171 = vmatpush1.bf16.msra.mxu0 0
    %2172 = vmatprep.mubr.bf16.mxu0 0
    %2173 = vmatmul.mubr.bf16.gmra.mrb[0].mxu0 %v2138
    %v2174 = vpop.f32.mrb[0].mxu0
    %v2175 = vadd.f32 0.0, %v2174
    %v2176 = vpop.f32.mrb[0].mxu0
    %v2177 = vadd.f32 0.0, %v2176
    %v2178 = vpop.f32.mrb[0].mxu0
    %v2179 = vpop.f32.mrb[0].mxu0
    %2180 = vdwg.mxu0
    %s2181 = scalar_lea.vmem [#allocation4], 4
    %v2182 = vld [vmem:[%s2181] ss:$8 sm:$0x3]
    %s2183 = scalar_lea.vmem [#allocation4], 36
    %v2184 = vld [vmem:[%s2183] ss:$8 sm:$0x3]
    %s2185 = scalar_lea.vmem [#allocation4], 68
    %v2186 = vld [vmem:[%s2185] ss:$8 sm:$0x3]
    %s2187 = scalar_lea.vmem [#allocation4], 100
    %v2188 = vld [vmem:[%s2187] ss:$8 sm:$0x3]
    %s2189 = scalar_lea.vmem [#allocation4], 132
    %v2190 = vld [vmem:[%s2189] ss:$8 sm:$0x3]
    %s2191 = scalar_lea.vmem [#allocation4], 164
    %v2192 = vld [vmem:[%s2191] ss:$8 sm:$0x3]
    %s2193 = scalar_lea.vmem [#allocation4], 196
    %v2194 = vld [vmem:[%s2193] ss:$8 sm:$0x3]
    %s2195 = scalar_lea.vmem [#allocation4], 228
    %v2196 = vld [vmem:[%s2195] ss:$8 sm:$0x3]
    %v2199 = vcombine.low %v2175, %v2177
    %v2200 = vcombine.high %v2175, %v2177
    %v2202 = vunpack.c.l.s4 1966171168
    %v2203 = vunpack.c.0.s8 %v2202
    %v2204 = vlaneseq
    %v2205 = vshrl.u32 %v2204, 7
    %v2206 = vsub.s32 %v2203, %v2205
    %v2207 = vrot.slane %v2199, %v2206
    %v2209 = vunpack.c.l.s4 1966171168
    %v2210 = vunpack.c.0.s8 %v2209
    %v2211 = vlaneseq
    %v2212 = vshrl.u32 %v2211, 7
    %v2213 = vsub.s32 %v2210, %v2212
    %v2214 = vrot.slane %v2200, %v2213
    %v2215 = vcombine.high %v2207, %v2207
    %v2216 = vcombine.high %v2214, %v2214
    %v2218 = vunpack.c.l.s4 1966171168
    %v2219 = vunpack.c.0.s8 %v2218
    %v2220 = vlaneseq
    %v2221 = vshrl.u32 %v2220, 7
    %v2222 = vsub.s32 %v2219, %v2221
    %v2223 = vrot.slane %v2207, %v2222
    %v2225 = vunpack.c.l.s4 1966171168
    %v2226 = vunpack.c.0.s8 %v2225
    %v2227 = vlaneseq
    %v2228 = vshrl.u32 %v2227, 7
    %v2229 = vsub.s32 %v2226, %v2228
    %v2230 = vrot.slane %v2214, %v2229
    %v2232 = vunpack.c.l.s4 1966171168
    %v2233 = vunpack.c.0.s8 %v2232
    %v2234 = vlaneseq
    %v2235 = vshrl.u32 %v2234, 7
    %v2236 = vsub.s32 %v2233, %v2235
    %v2237 = vrot.slane %v2215, %v2236
    %v2239 = vunpack.c.l.s4 1966171168
    %v2240 = vunpack.c.0.s8 %v2239
    %v2241 = vlaneseq
    %v2242 = vshrl.u32 %v2241, 7
    %v2243 = vsub.s32 %v2240, %v2242
    %v2244 = vrot.slane %v2216, %v2243
    %v2245 = vcombine.high %v2223, %v2223
    %v2246 = vcombine.high %v2230, %v2230
    %v2247 = vcombine.high %v2237, %v2237
    %v2248 = vcombine.high %v2244, %v2244
    %v2257 = vadd.f32 %v2182, %v2223
    %v2258 = vadd.f32 %v2184, %v2237
    %v2259 = vadd.f32 %v2186, %v2245
    %v2260 = vadd.f32 %v2188, %v2247
    %v2261 = vadd.f32 %v2190, %v2230
    %v2262 = vadd.f32 %v2192, %v2244
    %v2263 = vadd.f32 %v2194, %v2246
    %v2264 = vadd.f32 %v2196, %v2248
    %v2265 = vxor.u32 %v2257, 2147483648
    %v2266 = vxor.u32 %v2258, 2147483648
    %v2267 = vxor.u32 %v2259, 2147483648
    %v2268 = vxor.u32 %v2260, 2147483648
    %v2269 = vxor.u32 %v2261, 2147483648
    %v2270 = vxor.u32 %v2262, 2147483648
    %v2271 = vxor.u32 %v2263, 2147483648
    %v2272 = vxor.u32 %v2264, 2147483648
    %v2273 = vmul.f32 %v2265, 1.442695
    %v2274 = vpow.pop %v2273
    %v2275 = vmul.f32 %v2266, 1.442695
    %v2276 = vpow.pop %v2275
    %v2277 = vmul.f32 %v2267, 1.442695
    %v2278 = vpow.pop %v2277
    %v2279 = vmul.f32 %v2268, 1.442695
    %v2280 = vpow.pop %v2279
    %v2281 = vmul.f32 %v2269, 1.442695
    %v2282 = vpow.pop %v2281
    %v2283 = vmul.f32 %v2270, 1.442695
    %v2284 = vpow.pop %v2283
    %v2285 = vmul.f32 %v2271, 1.442695
    %v2286 = vpow.pop %v2285
    %v2287 = vmul.f32 %v2272, 1.442695
    %v2288 = vpow.pop %v2287
    %v2289 = vadd.f32 %v2274, 1.0
    %v2290 = vadd.f32 %v2276, 1.0
    %v2291 = vadd.f32 %v2278, 1.0
    %v2292 = vadd.f32 %v2280, 1.0
    %v2293 = vadd.f32 %v2282, 1.0
    %v2294 = vadd.f32 %v2284, 1.0
    %v2295 = vadd.f32 %v2286, 1.0
    %v2296 = vadd.f32 %v2288, 1.0
    %v2297 = vrcp.pop %v2289
    %v2298 = vmul.f32 1.0, %v2297
    %v2299 = vrcp.pop %v2290
    %v2300 = vmul.f32 1.0, %v2299
    %v2301 = vrcp.pop %v2291
    %v2302 = vmul.f32 1.0, %v2301
    %v2303 = vrcp.pop %v2292
    %v2304 = vmul.f32 1.0, %v2303
    %v2305 = vrcp.pop %v2293
    %v2306 = vmul.f32 1.0, %v2305
    %v2307 = vrcp.pop %v2294
    %v2308 = vmul.f32 1.0, %v2307
    %v2309 = vrcp.pop %v2295
    %v2310 = vmul.f32 1.0, %v2309
    %v2311 = vrcp.pop %v2296
    %v2312 = vmul.f32 1.0, %v2311
    %2321 = vrot.lane.b32.xlu0 %v2257, 64
    %v2322 = vpop.permute.xlu0 %2321
    %2323 = vrot.lane.b32.xlu0 %v2258, 64
    %v2324 = vpop.permute.xlu0 %2323
    %2325 = vrot.lane.b32.xlu0 %v2259, 64
    %v2326 = vpop.permute.xlu0 %2325
    %2327 = vrot.lane.b32.xlu0 %v2260, 64
    %v2328 = vpop.permute.xlu0 %2327
    %2329 = vrot.lane.b32.xlu0 %v2261, 64
    %v2330 = vpop.permute.xlu0 %2329
    %2331 = vrot.lane.b32.xlu0 %v2262, 64
    %v2332 = vpop.permute.xlu0 %2331
    %2333 = vrot.lane.b32.xlu0 %v2263, 64
    %v2334 = vpop.permute.xlu0 %2333
    %2335 = vrot.lane.b32.xlu0 %v2264, 64
    %v2336 = vpop.permute.xlu0 %2335
    %v2337 = vrot.slane %v2322, 1
    %v2338 = vrot.slane %v2324, 1
    %v2339 = vrot.slane %v2326, 1
    %v2340 = vrot.slane %v2328, 1
    %v2341 = vrot.slane %v2330, 1
    %v2342 = vrot.slane %v2332, 1
    %v2343 = vrot.slane %v2334, 1
    %v2344 = vrot.slane %v2336, 1
    %v2353 = vtanh.pop %v2337
    %v2354 = vtanh.pop %v2338
    %v2355 = vtanh.pop %v2339
    %v2356 = vtanh.pop %v2340
    %v2357 = vtanh.pop %v2341
    %v2358 = vtanh.pop %v2342
    %v2359 = vtanh.pop %v2343
    %v2360 = vtanh.pop %v2344
    %v2361 = vmul.f32 %v2298, %v2018
    %v2362 = vmul.f32 %v2300, %v2019
    %v2363 = vmul.f32 %v2302, %v2020
    %v2364 = vmul.f32 %v2304, %v2021
    %v2365 = vmul.f32 %v2306, %v2022
    %v2366 = vmul.f32 %v2308, %v2023
    %v2367 = vmul.f32 %v2310, %v2024
    %v2368 = vmul.f32 %v2312, %v2025
    %v2369 = vmul.f32 %v2298, %v2353
    %v2370 = vmul.f32 %v2300, %v2354
    %v2371 = vmul.f32 %v2302, %v2355
    %v2372 = vmul.f32 %v2304, %v2356
    %v2373 = vmul.f32 %v2306, %v2357
    %v2374 = vmul.f32 %v2308, %v2358
    %v2375 = vmul.f32 %v2310, %v2359
    %v2376 = vmul.f32 %v2312, %v2360
    %2385 = vrot.lane.b32.xlu0 %v2369, 64
    %v2386 = vpop.permute.xlu0 %2385
    %2387 = vrot.lane.b32.xlu0 %v2370, 64
    %v2388 = vpop.permute.xlu0 %2387
    %2389 = vrot.lane.b32.xlu0 %v2371, 64
    %v2390 = vpop.permute.xlu0 %2389
    %2391 = vrot.lane.b32.xlu0 %v2372, 64
    %v2392 = vpop.permute.xlu0 %2391
    %2393 = vrot.lane.b32.xlu0 %v2373, 64
    %v2394 = vpop.permute.xlu0 %2393
    %2395 = vrot.lane.b32.xlu0 %v2374, 64
    %v2396 = vpop.permute.xlu0 %2395
    %2397 = vrot.lane.b32.xlu0 %v2375, 64
    %v2398 = vpop.permute.xlu0 %2397
    %2399 = vrot.lane.b32.xlu0 %v2376, 64
    %v2400 = vpop.permute.xlu0 %2399
    %v2409 = vadd.f32 %v2361, %v2386
    %v2410 = vadd.f32 %v2362, %v2388
    %v2411 = vadd.f32 %v2363, %v2390
    %v2412 = vadd.f32 %v2364, %v2392
    %v2413 = vadd.f32 %v2365, %v2394
    %v2414 = vadd.f32 %v2366, %v2396
    %v2415 = vadd.f32 %v2367, %v2398
    %v2416 = vadd.f32 %v2368, %v2400
    %v2417 = vtanh.pop %v2409
    %v2418 = vtanh.pop %v2410
    %v2419 = vtanh.pop %v2411
    %v2420 = vtanh.pop %v2412
    %v2421 = vtanh.pop %v2413
    %v2422 = vtanh.pop %v2414
    %v2423 = vtanh.pop %v2415
    %v2424 = vtanh.pop %v2416
    %v2433 = vrot.slane %v2298, 1
    %v2434 = vrot.slane %v2300, 1
    %v2435 = vrot.slane %v2302, 1
    %v2436 = vrot.slane %v2304, 1
    %v2437 = vrot.slane %v2306, 1
    %v2438 = vrot.slane %v2308, 1
    %v2439 = vrot.slane %v2310, 1
    %v2440 = vrot.slane %v2312, 1
    %2457 = vrot.lane.b32.xlu0 %v2417, 64
    %v2458 = vpop.permute.xlu0 %2457
    %2459 = vrot.lane.b32.xlu0 %v2418, 64
    %v2460 = vpop.permute.xlu0 %2459
    %2461 = vrot.lane.b32.xlu0 %v2419, 64
    %v2462 = vpop.permute.xlu0 %2461
    %2463 = vrot.lane.b32.xlu0 %v2420, 64
    %v2464 = vpop.permute.xlu0 %2463
    %2465 = vrot.lane.b32.xlu0 %v2421, 64
    %v2466 = vpop.permute.xlu0 %2465
    %2467 = vrot.lane.b32.xlu0 %v2422, 64
    %v2468 = vpop.permute.xlu0 %2467
    %2469 = vrot.lane.b32.xlu0 %v2423, 64
    %v2470 = vpop.permute.xlu0 %2469
    %2471 = vrot.lane.b32.xlu0 %v2424, 64
    %v2472 = vpop.permute.xlu0 %2471
    %v2481 = vmul.f32 %v2433, %v2458
    %v2482 = vmul.f32 %v2434, %v2460
    %v2483 = vmul.f32 %v2435, %v2462
    %v2484 = vmul.f32 %v2436, %v2464
    %v2485 = vmul.f32 %v2437, %v2466
    %v2486 = vmul.f32 %v2438, %v2468
    %v2487 = vmul.f32 %v2439, %v2470
    %v2488 = vmul.f32 %v2440, %v2472
    %v2489 = vpack.c.bf16 %v2481, %v2481
    %v2490 = vpack.c.bf16 %v2482, %v2482
    %v2491 = vpack.c.bf16 %v2483, %v2483
    %v2492 = vpack.c.bf16 %v2484, %v2484
    %v2493 = vpack.c.bf16 %v2485, %v2485
    %v2494 = vpack.c.bf16 %v2486, %v2486
    %v2495 = vpack.c.bf16 %v2487, %v2487
    %v2496 = vpack.c.bf16 %v2488, %v2488
    %v2505 = vunpack.c.l.b16 %v2489
    %v2506 = vunpack.c.l.b16 %v2490
    %v2507 = vunpack.c.l.b16 %v2491
    %v2508 = vunpack.c.l.b16 %v2492
    %v2509 = vunpack.c.l.b16 %v2493
    %v2510 = vunpack.c.l.b16 %v2494
    %v2511 = vunpack.c.l.b16 %v2495
    %v2512 = vunpack.c.l.b16 %v2496
    %v2513 = vrot.slane %v2506, 7
    %v2514 = vsel %vm1334, %v2513, %v2505
    %v2515 = vrot.slane %v2507, 6
    %v2516 = vsel %vm1337, %v2515, %v2514
    %v2517 = vrot.slane %v2508, 5
    %v2518 = vsel %vm1340, %v2517, %v2516
    %v2519 = vrot.slane %v2509, 4
    %v2520 = vsel %vm1343, %v2519, %v2518
    %v2521 = vrot.slane %v2510, 3
    %v2522 = vsel %vm1346, %v2521, %v2520
    %v2523 = vrot.slane %v2511, 2
    %v2524 = vsel %vm1349, %v2523, %v2522
    %v2525 = vrot.slane %v2512, 1
    %v2526 = vsel %vm1352, %v2525, %v2524
    %v2527 = vpack.c.b16 %v2526, %v2526
    %v2529 = vsel %vm331, %v2527, 0
    %2531 = vmatprep.subr.bf16.mxu0 %v316
    %2532 = vmatpush1.bf16.msra.mxu0 %v315
    %2533 = vmatprep.subr.bf16.mxu0 %v318
    %2534 = vmatpush1.bf16.msra.mxu0 %v317
    %2535 = vmatprep.subr.bf16.mxu0 %v320
    %2536 = vmatpush1.bf16.msra.mxu0 %v319
    %2537 = vmatprep.subr.bf16.mxu0 %v322
    %2538 = vmatpush1.bf16.msra.mxu0 %v321
    %2539 = vmatprep.subr.bf16.mxu0 0
    %2540 = vmatpush1.bf16.msra.mxu0 0
    %2541 = vmatprep.subr.bf16.mxu0 0
    %2542 = vmatpush1.bf16.msra.mxu0 0
    %2543 = vmatprep.subr.bf16.mxu0 0
    %2544 = vmatpush1.bf16.msra.mxu0 0
    %2545 = vmatprep.subr.bf16.mxu0 0
    %2546 = vmatpush1.bf16.msra.mxu0 0
    %2547 = vmatprep.subr.bf16.mxu0 0
    %2548 = vmatpush1.bf16.msra.mxu0 0
    %2549 = vmatprep.subr.bf16.mxu0 0
    %2550 = vmatpush1.bf16.msra.mxu0 0
    %2551 = vmatprep.subr.bf16.mxu0 0
    %2552 = vmatpush1.bf16.msra.mxu0 0
    %2553 = vmatprep.subr.bf16.mxu0 0
    %2554 = vmatpush1.bf16.msra.mxu0 0
    %2555 = vmatprep.subr.bf16.mxu0 0
    %2556 = vmatpush1.bf16.msra.mxu0 0
    %2557 = vmatprep.subr.bf16.mxu0 0
    %2558 = vmatpush1.bf16.msra.mxu0 0
    %2559 = vmatprep.subr.bf16.mxu0 0
    %2560 = vmatpush1.bf16.msra.mxu0 0
    %2561 = vmatprep.subr.bf16.mxu0 0
    %2562 = vmatpush1.bf16.msra.mxu0 0
    %2563 = vmatprep.mubr.bf16.mxu0 0
    %2564 = vmatmul.mubr.bf16.gmra.mrb[0].mxu0 %v2529
    %v2565 = vpop.f32.mrb[0].mxu0
    %v2566 = vadd.f32 0.0, %v2565
    %v2567 = vpop.f32.mrb[0].mxu0
    %v2568 = vadd.f32 0.0, %v2567
    %v2569 = vpop.f32.mrb[0].mxu0
    %v2570 = vpop.f32.mrb[0].mxu0
    %2571 = vdwg.mxu0
    %s2572 = scalar_lea.vmem [#allocation4], 5
    %v2573 = vld [vmem:[%s2572] ss:$8 sm:$0x3]
    %s2574 = scalar_lea.vmem [#allocation4], 37
    %v2575 = vld [vmem:[%s2574] ss:$8 sm:$0x3]
    %s2576 = scalar_lea.vmem [#allocation4], 69
    %v2577 = vld [vmem:[%s2576] ss:$8 sm:$0x3]
    %s2578 = scalar_lea.vmem [#allocation4], 101
    %v2579 = vld [vmem:[%s2578] ss:$8 sm:$0x3]
    %s2580 = scalar_lea.vmem [#allocation4], 133
    %v2581 = vld [vmem:[%s2580] ss:$8 sm:$0x3]
    %s2582 = scalar_lea.vmem [#allocation4], 165
    %v2583 = vld [vmem:[%s2582] ss:$8 sm:$0x3]
    %s2584 = scalar_lea.vmem [#allocation4], 197
    %v2585 = vld [vmem:[%s2584] ss:$8 sm:$0x3]
    %s2586 = scalar_lea.vmem [#allocation4], 229
    %v2587 = vld [vmem:[%s2586] ss:$8 sm:$0x3]
    %v2590 = vcombine.low %v2566, %v2568
    %v2591 = vcombine.high %v2566, %v2568
    %v2593 = vunpack.c.l.s4 1966171168
    %v2594 = vunpack.c.0.s8 %v2593
    %v2595 = vlaneseq
    %v2596 = vshrl.u32 %v2595, 7
    %v2597 = vsub.s32 %v2594, %v2596
    %v2598 = vrot.slane %v2590, %v2597
    %v2600 = vunpack.c.l.s4 1966171168
    %v2601 = vunpack.c.0.s8 %v2600
    %v2602 = vlaneseq
    %v2603 = vshrl.u32 %v2602, 7
    %v2604 = vsub.s32 %v2601, %v2603
    %v2605 = vrot.slane %v2591, %v2604
    %v2606 = vcombine.high %v2598, %v2598
    %v2607 = vcombine.high %v2605, %v2605
    %v2609 = vunpack.c.l.s4 1966171168
    %v2610 = vunpack.c.0.s8 %v2609
    %v2611 = vlaneseq
    %v2612 = vshrl.u32 %v2611, 7
    %v2613 = vsub.s32 %v2610, %v2612
    %v2614 = vrot.slane %v2598, %v2613
    %v2616 = vunpack.c.l.s4 1966171168
    %v2617 = vunpack.c.0.s8 %v2616
    %v2618 = vlaneseq
    %v2619 = vshrl.u32 %v2618, 7
    %v2620 = vsub.s32 %v2617, %v2619
    %v2621 = vrot.slane %v2605, %v2620
    %v2623 = vunpack.c.l.s4 1966171168
    %v2624 = vunpack.c.0.s8 %v2623
    %v2625 = vlaneseq
    %v2626 = vshrl.u32 %v2625, 7
    %v2627 = vsub.s32 %v2624, %v2626
    %v2628 = vrot.slane %v2606, %v2627
    %v2630 = vunpack.c.l.s4 1966171168
    %v2631 = vunpack.c.0.s8 %v2630
    %v2632 = vlaneseq
    %v2633 = vshrl.u32 %v2632, 7
    %v2634 = vsub.s32 %v2631, %v2633
    %v2635 = vrot.slane %v2607, %v2634
    %v2636 = vcombine.high %v2614, %v2614
    %v2637 = vcombine.high %v2621, %v2621
    %v2638 = vcombine.high %v2628, %v2628
    %v2639 = vcombine.high %v2635, %v2635
    %v2648 = vadd.f32 %v2573, %v2614
    %v2649 = vadd.f32 %v2575, %v2628
    %v2650 = vadd.f32 %v2577, %v2636
    %v2651 = vadd.f32 %v2579, %v2638
    %v2652 = vadd.f32 %v2581, %v2621
    %v2653 = vadd.f32 %v2583, %v2635
    %v2654 = vadd.f32 %v2585, %v2637
    %v2655 = vadd.f32 %v2587, %v2639
    %v2656 = vxor.u32 %v2648, 2147483648
    %v2657 = vxor.u32 %v2649, 2147483648
    %v2658 = vxor.u32 %v2650, 2147483648
    %v2659 = vxor.u32 %v2651, 2147483648
    %v2660 = vxor.u32 %v2652, 2147483648
    %v2661 = vxor.u32 %v2653, 2147483648
    %v2662 = vxor.u32 %v2654, 2147483648
    %v2663 = vxor.u32 %v2655, 2147483648
    %v2664 = vmul.f32 %v2656, 1.442695
    %v2665 = vpow.pop %v2664
    %v2666 = vmul.f32 %v2657, 1.442695
    %v2667 = vpow.pop %v2666
    %v2668 = vmul.f32 %v2658, 1.442695
    %v2669 = vpow.pop %v2668
    %v2670 = vmul.f32 %v2659, 1.442695
    %v2671 = vpow.pop %v2670
    %v2672 = vmul.f32 %v2660, 1.442695
    %v2673 = vpow.pop %v2672
    %v2674 = vmul.f32 %v2661, 1.442695
    %v2675 = vpow.pop %v2674
    %v2676 = vmul.f32 %v2662, 1.442695
    %v2677 = vpow.pop %v2676
    %v2678 = vmul.f32 %v2663, 1.442695
    %v2679 = vpow.pop %v2678
    %v2680 = vadd.f32 %v2665, 1.0
    %v2681 = vadd.f32 %v2667, 1.0
    %v2682 = vadd.f32 %v2669, 1.0
    %v2683 = vadd.f32 %v2671, 1.0
    %v2684 = vadd.f32 %v2673, 1.0
    %v2685 = vadd.f32 %v2675, 1.0
    %v2686 = vadd.f32 %v2677, 1.0
    %v2687 = vadd.f32 %v2679, 1.0
    %v2688 = vrcp.pop %v2680
    %v2689 = vmul.f32 1.0, %v2688
    %v2690 = vrcp.pop %v2681
    %v2691 = vmul.f32 1.0, %v2690
    %v2692 = vrcp.pop %v2682
    %v2693 = vmul.f32 1.0, %v2692
    %v2694 = vrcp.pop %v2683
    %v2695 = vmul.f32 1.0, %v2694
    %v2696 = vrcp.pop %v2684
    %v2697 = vmul.f32 1.0, %v2696
    %v2698 = vrcp.pop %v2685
    %v2699 = vmul.f32 1.0, %v2698
    %v2700 = vrcp.pop %v2686
    %v2701 = vmul.f32 1.0, %v2700
    %v2702 = vrcp.pop %v2687
    %v2703 = vmul.f32 1.0, %v2702
    %2712 = vrot.lane.b32.xlu0 %v2648, 64
    %v2713 = vpop.permute.xlu0 %2712
    %2714 = vrot.lane.b32.xlu0 %v2649, 64
    %v2715 = vpop.permute.xlu0 %2714
    %2716 = vrot.lane.b32.xlu0 %v2650, 64
    %v2717 = vpop.permute.xlu0 %2716
    %2718 = vrot.lane.b32.xlu0 %v2651, 64
    %v2719 = vpop.permute.xlu0 %2718
    %2720 = vrot.lane.b32.xlu0 %v2652, 64
    %v2721 = vpop.permute.xlu0 %2720
    %2722 = vrot.lane.b32.xlu0 %v2653, 64
    %v2723 = vpop.permute.xlu0 %2722
    %2724 = vrot.lane.b32.xlu0 %v2654, 64
    %v2725 = vpop.permute.xlu0 %2724
    %2726 = vrot.lane.b32.xlu0 %v2655, 64
    %v2727 = vpop.permute.xlu0 %2726
    %v2728 = vrot.slane %v2713, 1
    %v2729 = vrot.slane %v2715, 1
    %v2730 = vrot.slane %v2717, 1
    %v2731 = vrot.slane %v2719, 1
    %v2732 = vrot.slane %v2721, 1
    %v2733 = vrot.slane %v2723, 1
    %v2734 = vrot.slane %v2725, 1
    %v2735 = vrot.slane %v2727, 1
    %v2744 = vtanh.pop %v2728
    %v2745 = vtanh.pop %v2729
    %v2746 = vtanh.pop %v2730
    %v2747 = vtanh.pop %v2731
    %v2748 = vtanh.pop %v2732
    %v2749 = vtanh.pop %v2733
    %v2750 = vtanh.pop %v2734
    %v2751 = vtanh.pop %v2735
    %v2752 = vmul.f32 %v2689, %v2409
    %v2753 = vmul.f32 %v2691, %v2410
    %v2754 = vmul.f32 %v2693, %v2411
    %v2755 = vmul.f32 %v2695, %v2412
    %v2756 = vmul.f32 %v2697, %v2413
    %v2757 = vmul.f32 %v2699, %v2414
    %v2758 = vmul.f32 %v2701, %v2415
    %v2759 = vmul.f32 %v2703, %v2416
    %v2760 = vmul.f32 %v2689, %v2744
    %v2761 = vmul.f32 %v2691, %v2745
    %v2762 = vmul.f32 %v2693, %v2746
    %v2763 = vmul.f32 %v2695, %v2747
    %v2764 = vmul.f32 %v2697, %v2748
    %v2765 = vmul.f32 %v2699, %v2749
    %v2766 = vmul.f32 %v2701, %v2750
    %v2767 = vmul.f32 %v2703, %v2751
    %2776 = vrot.lane.b32.xlu0 %v2760, 64
    %v2777 = vpop.permute.xlu0 %2776
    %2778 = vrot.lane.b32.xlu0 %v2761, 64
    %v2779 = vpop.permute.xlu0 %2778
    %2780 = vrot.lane.b32.xlu0 %v2762, 64
    %v2781 = vpop.permute.xlu0 %2780
    %2782 = vrot.lane.b32.xlu0 %v2763, 64
    %v2783 = vpop.permute.xlu0 %2782
    %2784 = vrot.lane.b32.xlu0 %v2764, 64
    %v2785 = vpop.permute.xlu0 %2784
    %2786 = vrot.lane.b32.xlu0 %v2765, 64
    %v2787 = vpop.permute.xlu0 %2786
    %2788 = vrot.lane.b32.xlu0 %v2766, 64
    %v2789 = vpop.permute.xlu0 %2788
    %2790 = vrot.lane.b32.xlu0 %v2767, 64
    %v2791 = vpop.permute.xlu0 %2790
    %v2800 = vadd.f32 %v2752, %v2777
    %v2801 = vadd.f32 %v2753, %v2779
    %v2802 = vadd.f32 %v2754, %v2781
    %v2803 = vadd.f32 %v2755, %v2783
    %v2804 = vadd.f32 %v2756, %v2785
    %v2805 = vadd.f32 %v2757, %v2787
    %v2806 = vadd.f32 %v2758, %v2789
    %v2807 = vadd.f32 %v2759, %v2791
    %v2808 = vtanh.pop %v2800
    %v2809 = vtanh.pop %v2801
    %v2810 = vtanh.pop %v2802
    %v2811 = vtanh.pop %v2803
    %v2812 = vtanh.pop %v2804
    %v2813 = vtanh.pop %v2805
    %v2814 = vtanh.pop %v2806
    %v2815 = vtanh.pop %v2807
    %v2824 = vrot.slane %v2689, 1
    %v2825 = vrot.slane %v2691, 1
    %v2826 = vrot.slane %v2693, 1
    %v2827 = vrot.slane %v2695, 1
    %v2828 = vrot.slane %v2697, 1
    %v2829 = vrot.slane %v2699, 1
    %v2830 = vrot.slane %v2701, 1
    %v2831 = vrot.slane %v2703, 1
    %2848 = vrot.lane.b32.xlu0 %v2808, 64
    %v2849 = vpop.permute.xlu0 %2848
    %2850 = vrot.lane.b32.xlu0 %v2809, 64
    %v2851 = vpop.permute.xlu0 %2850
    %2852 = vrot.lane.b32.xlu0 %v2810, 64
    %v2853 = vpop.permute.xlu0 %2852
    %2854 = vrot.lane.b32.xlu0 %v2811, 64
    %v2855 = vpop.permute.xlu0 %2854
    %2856 = vrot.lane.b32.xlu0 %v2812, 64
    %v2857 = vpop.permute.xlu0 %2856
    %2858 = vrot.lane.b32.xlu0 %v2813, 64
    %v2859 = vpop.permute.xlu0 %2858
    %2860 = vrot.lane.b32.xlu0 %v2814, 64
    %v2861 = vpop.permute.xlu0 %2860
    %2862 = vrot.lane.b32.xlu0 %v2815, 64
    %v2863 = vpop.permute.xlu0 %2862
    %v2872 = vmul.f32 %v2824, %v2849
    %v2873 = vmul.f32 %v2825, %v2851
    %v2874 = vmul.f32 %v2826, %v2853
    %v2875 = vmul.f32 %v2827, %v2855
    %v2876 = vmul.f32 %v2828, %v2857
    %v2877 = vmul.f32 %v2829, %v2859
    %v2878 = vmul.f32 %v2830, %v2861
    %v2879 = vmul.f32 %v2831, %v2863
    %v2880 = vpack.c.bf16 %v2872, %v2872
    %v2881 = vpack.c.bf16 %v2873, %v2873
    %v2882 = vpack.c.bf16 %v2874, %v2874
    %v2883 = vpack.c.bf16 %v2875, %v2875
    %v2884 = vpack.c.bf16 %v2876, %v2876
    %v2885 = vpack.c.bf16 %v2877, %v2877
    %v2886 = vpack.c.bf16 %v2878, %v2878
    %v2887 = vpack.c.bf16 %v2879, %v2879
    %v2896 = vunpack.c.l.b16 %v2880
    %v2897 = vunpack.c.l.b16 %v2881
    %v2898 = vunpack.c.l.b16 %v2882
    %v2899 = vunpack.c.l.b16 %v2883
    %v2900 = vunpack.c.l.b16 %v2884
    %v2901 = vunpack.c.l.b16 %v2885
    %v2902 = vunpack.c.l.b16 %v2886
    %v2903 = vunpack.c.l.b16 %v2887
    %v2904 = vrot.slane %v2897, 7
    %v2905 = vsel %vm1334, %v2904, %v2896
    %v2906 = vrot.slane %v2898, 6
    %v2907 = vsel %vm1337, %v2906, %v2905
    %v2908 = vrot.slane %v2899, 5
    %v2909 = vsel %vm1340, %v2908, %v2907
    %v2910 = vrot.slane %v2900, 4
    %v2911 = vsel %vm1343, %v2910, %v2909
    %v2912 = vrot.slane %v2901, 3
    %v2913 = vsel %vm1346, %v2912, %v2911
    %v2914 = vrot.slane %v2902, 2
    %v2915 = vsel %vm1349, %v2914, %v2913
    %v2916 = vrot.slane %v2903, 1
    %v2917 = vsel %vm1352, %v2916, %v2915
    %v2918 = vpack.c.b16 %v2917, %v2917
    %v2920 = vsel %vm331, %v2918, 0
    %2922 = vmatprep.subr.bf16.mxu0 %v316
    %2923 = vmatpush1.bf16.msra.mxu0 %v315
    %2924 = vmatprep.subr.bf16.mxu0 %v318
    %2925 = vmatpush1.bf16.msra.mxu0 %v317
    %2926 = vmatprep.subr.bf16.mxu0 %v320
    %2927 = vmatpush1.bf16.msra.mxu0 %v319
    %2928 = vmatprep.subr.bf16.mxu0 %v322
    %2929 = vmatpush1.bf16.msra.mxu0 %v321
    %2930 = vmatprep.subr.bf16.mxu0 0
    %2931 = vmatpush1.bf16.msra.mxu0 0
    %2932 = vmatprep.subr.bf16.mxu0 0
    %2933 = vmatpush1.bf16.msra.mxu0 0
    %2934 = vmatprep.subr.bf16.mxu0 0
    %2935 = vmatpush1.bf16.msra.mxu0 0
    %2936 = vmatprep.subr.bf16.mxu0 0
    %2937 = vmatpush1.bf16.msra.mxu0 0
    %2938 = vmatprep.subr.bf16.mxu0 0
    %2939 = vmatpush1.bf16.msra.mxu0 0
    %2940 = vmatprep.subr.bf16.mxu0 0
    %2941 = vmatpush1.bf16.msra.mxu0 0
    %2942 = vmatprep.subr.bf16.mxu0 0
    %2943 = vmatpush1.bf16.msra.mxu0 0
    %2944 = vmatprep.subr.bf16.mxu0 0
    %2945 = vmatpush1.bf16.msra.mxu0 0
    %2946 = vmatprep.subr.bf16.mxu0 0
    %2947 = vmatpush1.bf16.msra.mxu0 0
    %2948 = vmatprep.subr.bf16.mxu0 0
    %2949 = vmatpush1.bf16.msra.mxu0 0
    %2950 = vmatprep.subr.bf16.mxu0 0
    %2951 = vmatpush1.bf16.msra.mxu0 0
    %2952 = vmatprep.subr.bf16.mxu0 0
    %2953 = vmatpush1.bf16.msra.mxu0 0
    %2954 = vmatprep.mubr.bf16.mxu0 0
    %2955 = vmatmul.mubr.bf16.gmra.mrb[0].mxu0 %v2920
    %v2956 = vpop.f32.mrb[0].mxu0
    %v2957 = vadd.f32 0.0, %v2956
    %v2958 = vpop.f32.mrb[0].mxu0
    %v2959 = vadd.f32 0.0, %v2958
    %v2960 = vpop.f32.mrb[0].mxu0
    %v2961 = vpop.f32.mrb[0].mxu0
    %2962 = vdwg.mxu0
    %s2963 = scalar_lea.vmem [#allocation4], 6
    %v2964 = vld [vmem:[%s2963] ss:$8 sm:$0x3]
    %s2965 = scalar_lea.vmem [#allocation4], 38
    %v2966 = vld [vmem:[%s2965] ss:$8 sm:$0x3]
    %s2967 = scalar_lea.vmem [#allocation4], 70
    %v2968 = vld [vmem:[%s2967] ss:$8 sm:$0x3]
    %s2969 = scalar_lea.vmem [#allocation4], 102
    %v2970 = vld [vmem:[%s2969] ss:$8 sm:$0x3]
    %s2971 = scalar_lea.vmem [#allocation4], 134
    %v2972 = vld [vmem:[%s2971] ss:$8 sm:$0x3]
    %s2973 = scalar_lea.vmem [#allocation4], 166
    %v2974 = vld [vmem:[%s2973] ss:$8 sm:$0x3]
    %s2975 = scalar_lea.vmem [#allocation4], 198
    %v2976 = vld [vmem:[%s2975] ss:$8 sm:$0x3]
    %s2977 = scalar_lea.vmem [#allocation4], 230
    %v2978 = vld [vmem:[%s2977] ss:$8 sm:$0x3]
    %v2981 = vcombine.low %v2957, %v2959
    %v2982 = vcombine.high %v2957, %v2959
    %v2984 = vunpack.c.l.s4 1966171168
    %v2985 = vunpack.c.0.s8 %v2984
    %v2986 = vlaneseq
    %v2987 = vshrl.u32 %v2986, 7
    %v2988 = vsub.s32 %v2985, %v2987
    %v2989 = vrot.slane %v2981, %v2988
    %v2991 = vunpack.c.l.s4 1966171168
    %v2992 = vunpack.c.0.s8 %v2991
    %v2993 = vlaneseq
    %v2994 = vshrl.u32 %v2993, 7
    %v2995 = vsub.s32 %v2992, %v2994
    %v2996 = vrot.slane %v2982, %v2995
    %v2997 = vcombine.high %v2989, %v2989
    %v2998 = vcombine.high %v2996, %v2996
    %v3000 = vunpack.c.l.s4 1966171168
    %v3001 = vunpack.c.0.s8 %v3000
    %v3002 = vlaneseq
    %v3003 = vshrl.u32 %v3002, 7
    %v3004 = vsub.s32 %v3001, %v3003
    %v3005 = vrot.slane %v2989, %v3004
    %v3007 = vunpack.c.l.s4 1966171168
    %v3008 = vunpack.c.0.s8 %v3007
    %v3009 = vlaneseq
    %v3010 = vshrl.u32 %v3009, 7
    %v3011 = vsub.s32 %v3008, %v3010
    %v3012 = vrot.slane %v2996, %v3011
    %v3014 = vunpack.c.l.s4 1966171168
    %v3015 = vunpack.c.0.s8 %v3014
    %v3016 = vlaneseq
    %v3017 = vshrl.u32 %v3016, 7
    %v3018 = vsub.s32 %v3015, %v3017
    %v3019 = vrot.slane %v2997, %v3018
    %v3021 = vunpack.c.l.s4 1966171168
    %v3022 = vunpack.c.0.s8 %v3021
    %v3023 = vlaneseq
    %v3024 = vshrl.u32 %v3023, 7
    %v3025 = vsub.s32 %v3022, %v3024
    %v3026 = vrot.slane %v2998, %v3025
    %v3027 = vcombine.high %v3005, %v3005
    %v3028 = vcombine.high %v3012, %v3012
    %v3029 = vcombine.high %v3019, %v3019
    %v3030 = vcombine.high %v3026, %v3026
    %v3039 = vadd.f32 %v2964, %v3005
    %v3040 = vadd.f32 %v2966, %v3019
    %v3041 = vadd.f32 %v2968, %v3027
    %v3042 = vadd.f32 %v2970, %v3029
    %v3043 = vadd.f32 %v2972, %v3012
    %v3044 = vadd.f32 %v2974, %v3026
    %v3045 = vadd.f32 %v2976, %v3028
    %v3046 = vadd.f32 %v2978, %v3030
    %v3047 = vxor.u32 %v3039, 2147483648
    %v3048 = vxor.u32 %v3040, 2147483648
    %v3049 = vxor.u32 %v3041, 2147483648
    %v3050 = vxor.u32 %v3042, 2147483648
    %v3051 = vxor.u32 %v3043, 2147483648
    %v3052 = vxor.u32 %v3044, 2147483648
    %v3053 = vxor.u32 %v3045, 2147483648
    %v3054 = vxor.u32 %v3046, 2147483648
    %v3055 = vmul.f32 %v3047, 1.442695
    %v3056 = vpow.pop %v3055
    %v3057 = vmul.f32 %v3048, 1.442695
    %v3058 = vpow.pop %v3057
    %v3059 = vmul.f32 %v3049, 1.442695
    %v3060 = vpow.pop %v3059
    %v3061 = vmul.f32 %v3050, 1.442695
    %v3062 = vpow.pop %v3061
    %v3063 = vmul.f32 %v3051, 1.442695
    %v3064 = vpow.pop %v3063
    %v3065 = vmul.f32 %v3052, 1.442695
    %v3066 = vpow.pop %v3065
    %v3067 = vmul.f32 %v3053, 1.442695
    %v3068 = vpow.pop %v3067
    %v3069 = vmul.f32 %v3054, 1.442695
    %v3070 = vpow.pop %v3069
    %v3071 = vadd.f32 %v3056, 1.0
    %v3072 = vadd.f32 %v3058, 1.0
    %v3073 = vadd.f32 %v3060, 1.0
    %v3074 = vadd.f32 %v3062, 1.0
    %v3075 = vadd.f32 %v3064, 1.0
    %v3076 = vadd.f32 %v3066, 1.0
    %v3077 = vadd.f32 %v3068, 1.0
    %v3078 = vadd.f32 %v3070, 1.0
    %v3079 = vrcp.pop %v3071
    %v3080 = vmul.f32 1.0, %v3079
    %v3081 = vrcp.pop %v3072
    %v3082 = vmul.f32 1.0, %v3081
    %v3083 = vrcp.pop %v3073
    %v3084 = vmul.f32 1.0, %v3083
    %v3085 = vrcp.pop %v3074
    %v3086 = vmul.f32 1.0, %v3085
    %v3087 = vrcp.pop %v3075
    %v3088 = vmul.f32 1.0, %v3087
    %v3089 = vrcp.pop %v3076
    %v3090 = vmul.f32 1.0, %v3089
    %v3091 = vrcp.pop %v3077
    %v3092 = vmul.f32 1.0, %v3091
    %v3093 = vrcp.pop %v3078
    %v3094 = vmul.f32 1.0, %v3093
    %3103 = vrot.lane.b32.xlu0 %v3039, 64
    %v3104 = vpop.permute.xlu0 %3103
    %3105 = vrot.lane.b32.xlu0 %v3040, 64
    %v3106 = vpop.permute.xlu0 %3105
    %3107 = vrot.lane.b32.xlu0 %v3041, 64
    %v3108 = vpop.permute.xlu0 %3107
    %3109 = vrot.lane.b32.xlu0 %v3042, 64
    %v3110 = vpop.permute.xlu0 %3109
    %3111 = vrot.lane.b32.xlu0 %v3043, 64
    %v3112 = vpop.permute.xlu0 %3111
    %3113 = vrot.lane.b32.xlu0 %v3044, 64
    %v3114 = vpop.permute.xlu0 %3113
    %3115 = vrot.lane.b32.xlu0 %v3045, 64
    %v3116 = vpop.permute.xlu0 %3115
    %3117 = vrot.lane.b32.xlu0 %v3046, 64
    %v3118 = vpop.permute.xlu0 %3117
    %v3119 = vrot.slane %v3104, 1
    %v3120 = vrot.slane %v3106, 1
    %v3121 = vrot.slane %v3108, 1
    %v3122 = vrot.slane %v3110, 1
    %v3123 = vrot.slane %v3112, 1
    %v3124 = vrot.slane %v3114, 1
    %v3125 = vrot.slane %v3116, 1
    %v3126 = vrot.slane %v3118, 1
    %v3135 = vtanh.pop %v3119
    %v3136 = vtanh.pop %v3120
    %v3137 = vtanh.pop %v3121
    %v3138 = vtanh.pop %v3122
    %v3139 = vtanh.pop %v3123
    %v3140 = vtanh.pop %v3124
    %v3141 = vtanh.pop %v3125
    %v3142 = vtanh.pop %v3126
    %v3143 = vmul.f32 %v3080, %v2800
    %v3144 = vmul.f32 %v3082, %v2801
    %v3145 = vmul.f32 %v3084, %v2802
    %v3146 = vmul.f32 %v3086, %v2803
    %v3147 = vmul.f32 %v3088, %v2804
    %v3148 = vmul.f32 %v3090, %v2805
    %v3149 = vmul.f32 %v3092, %v2806
    %v3150 = vmul.f32 %v3094, %v2807
    %v3151 = vmul.f32 %v3080, %v3135
    %v3152 = vmul.f32 %v3082, %v3136
    %v3153 = vmul.f32 %v3084, %v3137
    %v3154 = vmul.f32 %v3086, %v3138
    %v3155 = vmul.f32 %v3088, %v3139
    %v3156 = vmul.f32 %v3090, %v3140
    %v3157 = vmul.f32 %v3092, %v3141
    %v3158 = vmul.f32 %v3094, %v3142
    %3167 = vrot.lane.b32.xlu0 %v3151, 64
    %v3168 = vpop.permute.xlu0 %3167
    %3169 = vrot.lane.b32.xlu0 %v3152, 64
    %v3170 = vpop.permute.xlu0 %3169
    %3171 = vrot.lane.b32.xlu0 %v3153, 64
    %v3172 = vpop.permute.xlu0 %3171
    %3173 = vrot.lane.b32.xlu0 %v3154, 64
    %v3174 = vpop.permute.xlu0 %3173
    %3175 = vrot.lane.b32.xlu0 %v3155, 64
    %v3176 = vpop.permute.xlu0 %3175
    %3177 = vrot.lane.b32.xlu0 %v3156, 64
    %v3178 = vpop.permute.xlu0 %3177
    %3179 = vrot.lane.b32.xlu0 %v3157, 64
    %v3180 = vpop.permute.xlu0 %3179
    %3181 = vrot.lane.b32.xlu0 %v3158, 64
    %v3182 = vpop.permute.xlu0 %3181
    %v3191 = vadd.f32 %v3143, %v3168
    %v3192 = vadd.f32 %v3144, %v3170
    %v3193 = vadd.f32 %v3145, %v3172
    %v3194 = vadd.f32 %v3146, %v3174
    %v3195 = vadd.f32 %v3147, %v3176
    %v3196 = vadd.f32 %v3148, %v3178
    %v3197 = vadd.f32 %v3149, %v3180
    %v3198 = vadd.f32 %v3150, %v3182
    %v3199 = vtanh.pop %v3191
    %v3200 = vtanh.pop %v3192
    %v3201 = vtanh.pop %v3193
    %v3202 = vtanh.pop %v3194
    %v3203 = vtanh.pop %v3195
    %v3204 = vtanh.pop %v3196
    %v3205 = vtanh.pop %v3197
    %v3206 = vtanh.pop %v3198
    %v3215 = vrot.slane %v3080, 1
    %v3216 = vrot.slane %v3082, 1
    %v3217 = vrot.slane %v3084, 1
    %v3218 = vrot.slane %v3086, 1
    %v3219 = vrot.slane %v3088, 1
    %v3220 = vrot.slane %v3090, 1
    %v3221 = vrot.slane %v3092, 1
    %v3222 = vrot.slane %v3094, 1
    %3239 = vrot.lane.b32.xlu0 %v3199, 64
    %v3240 = vpop.permute.xlu0 %3239
    %3241 = vrot.lane.b32.xlu0 %v3200, 64
    %v3242 = vpop.permute.xlu0 %3241
    %3243 = vrot.lane.b32.xlu0 %v3201, 64
    %v3244 = vpop.permute.xlu0 %3243
    %3245 = vrot.lane.b32.xlu0 %v3202, 64
    %v3246 = vpop.permute.xlu0 %3245
    %3247 = vrot.lane.b32.xlu0 %v3203, 64
    %v3248 = vpop.permute.xlu0 %3247
    %3249 = vrot.lane.b32.xlu0 %v3204, 64
    %v3250 = vpop.permute.xlu0 %3249
    %3251 = vrot.lane.b32.xlu0 %v3205, 64
    %v3252 = vpop.permute.xlu0 %3251
    %3253 = vrot.lane.b32.xlu0 %v3206, 64
    %v3254 = vpop.permute.xlu0 %3253
    %v3263 = vmul.f32 %v3215, %v3240
    %v3264 = vmul.f32 %v3216, %v3242
    %v3265 = vmul.f32 %v3217, %v3244
    %v3266 = vmul.f32 %v3218, %v3246
    %v3267 = vmul.f32 %v3219, %v3248
    %v3268 = vmul.f32 %v3220, %v3250
    %v3269 = vmul.f32 %v3221, %v3252
    %v3270 = vmul.f32 %v3222, %v3254
    %v3271 = vpack.c.bf16 %v3263, %v3263
    %v3272 = vpack.c.bf16 %v3264, %v3264
    %v3273 = vpack.c.bf16 %v3265, %v3265
    %v3274 = vpack.c.bf16 %v3266, %v3266
    %v3275 = vpack.c.bf16 %v3267, %v3267
    %v3276 = vpack.c.bf16 %v3268, %v3268
    %v3277 = vpack.c.bf16 %v3269, %v3269
    %v3278 = vpack.c.bf16 %v3270, %v3270
    %v3287 = vunpack.c.l.b16 %v3271
    %v3288 = vunpack.c.l.b16 %v3272
    %v3289 = vunpack.c.l.b16 %v3273
    %v3290 = vunpack.c.l.b16 %v3274
    %v3291 = vunpack.c.l.b16 %v3275
    %v3292 = vunpack.c.l.b16 %v3276
    %v3293 = vunpack.c.l.b16 %v3277
    %v3294 = vunpack.c.l.b16 %v3278
    %v3295 = vrot.slane %v3288, 7
    %v3296 = vsel %vm1334, %v3295, %v3287
    %v3297 = vrot.slane %v3289, 6
    %v3298 = vsel %vm1337, %v3297, %v3296
    %v3299 = vrot.slane %v3290, 5
    %v3300 = vsel %vm1340, %v3299, %v3298
    %v3301 = vrot.slane %v3291, 4
    %v3302 = vsel %vm1343, %v3301, %v3300
    %v3303 = vrot.slane %v3292, 3
    %v3304 = vsel %vm1346, %v3303, %v3302
    %v3305 = vrot.slane %v3293, 2
    %v3306 = vsel %vm1349, %v3305, %v3304
    %v3307 = vrot.slane %v3294, 1
    %v3308 = vsel %vm1352, %v3307, %v3306
    %v3309 = vpack.c.b16 %v3308, %v3308
    %v3311 = vsel %vm331, %v3309, 0
    %3313 = vmatprep.subr.bf16.mxu0 %v316
    %3314 = vmatpush1.bf16.msra.mxu0 %v315
    %3315 = vmatprep.subr.bf16.mxu0 %v318
    %3316 = vmatpush1.bf16.msra.mxu0 %v317
    %3317 = vmatprep.subr.bf16.mxu0 %v320
    %3318 = vmatpush1.bf16.msra.mxu0 %v319
    %3319 = vmatprep.subr.bf16.mxu0 %v322
    %3320 = vmatpush1.bf16.msra.mxu0 %v321
    %3321 = vmatprep.subr.bf16.mxu0 0
    %3322 = vmatpush1.bf16.msra.mxu0 0
    %3323 = vmatprep.subr.bf16.mxu0 0
    %3324 = vmatpush1.bf16.msra.mxu0 0
    %3325 = vmatprep.subr.bf16.mxu0 0
    %3326 = vmatpush1.bf16.msra.mxu0 0
    %3327 = vmatprep.subr.bf16.mxu0 0
    %3328 = vmatpush1.bf16.msra.mxu0 0
    %3329 = vmatprep.subr.bf16.mxu0 0
    %3330 = vmatpush1.bf16.msra.mxu0 0
    %3331 = vmatprep.subr.bf16.mxu0 0
    %3332 = vmatpush1.bf16.msra.mxu0 0
    %3333 = vmatprep.subr.bf16.mxu0 0
    %3334 = vmatpush1.bf16.msra.mxu0 0
    %3335 = vmatprep.subr.bf16.mxu0 0
    %3336 = vmatpush1.bf16.msra.mxu0 0
    %3337 = vmatprep.subr.bf16.mxu0 0
    %3338 = vmatpush1.bf16.msra.mxu0 0
    %3339 = vmatprep.subr.bf16.mxu0 0
    %3340 = vmatpush1.bf16.msra.mxu0 0
    %3341 = vmatprep.subr.bf16.mxu0 0
    %3342 = vmatpush1.bf16.msra.mxu0 0
    %3343 = vmatprep.subr.bf16.mxu0 0
    %3344 = vmatpush1.bf16.msra.mxu0 0
    %3345 = vmatprep.mubr.bf16.mxu0 0
    %3346 = vmatmul.mubr.bf16.gmra.mrb[0].mxu0 %v3311
    %v3347 = vpop.f32.mrb[0].mxu0
    %v3348 = vadd.f32 0.0, %v3347
    %v3349 = vpop.f32.mrb[0].mxu0
    %v3350 = vadd.f32 0.0, %v3349
    %v3351 = vpop.f32.mrb[0].mxu0
    %v3352 = vpop.f32.mrb[0].mxu0
    %3353 = vdwg.mxu0
    %s3354 = scalar_lea.vmem [#allocation4], 7
    %v3355 = vld [vmem:[%s3354] ss:$8 sm:$0x3]
    %s3356 = scalar_lea.vmem [#allocation4], 39
    %v3357 = vld [vmem:[%s3356] ss:$8 sm:$0x3]
    %s3358 = scalar_lea.vmem [#allocation4], 71
    %v3359 = vld [vmem:[%s3358] ss:$8 sm:$0x3]
    %s3360 = scalar_lea.vmem [#allocation4], 103
    %v3361 = vld [vmem:[%s3360] ss:$8 sm:$0x3]
    %s3362 = scalar_lea.vmem [#allocation4], 135
    %v3363 = vld [vmem:[%s3362] ss:$8 sm:$0x3]
    %s3364 = scalar_lea.vmem [#allocation4], 167
    %v3365 = vld [vmem:[%s3364] ss:$8 sm:$0x3]
    %s3366 = scalar_lea.vmem [#allocation4], 199
    %v3367 = vld [vmem:[%s3366] ss:$8 sm:$0x3]
    %s3368 = scalar_lea.vmem [#allocation4], 231
    %v3369 = vld [vmem:[%s3368] ss:$8 sm:$0x3]
    %v3372 = vcombine.low %v3348, %v3350
    %v3373 = vcombine.high %v3348, %v3350
    %v3375 = vunpack.c.l.s4 1966171168
    %v3376 = vunpack.c.0.s8 %v3375
    %v3377 = vlaneseq
    %v3378 = vshrl.u32 %v3377, 7
    %v3379 = vsub.s32 %v3376, %v3378
    %v3380 = vrot.slane %v3372, %v3379
    %v3382 = vunpack.c.l.s4 1966171168
    %v3383 = vunpack.c.0.s8 %v3382
    %v3384 = vlaneseq
    %v3385 = vshrl.u32 %v3384, 7
    %v3386 = vsub.s32 %v3383, %v3385
    %v3387 = vrot.slane %v3373, %v3386
    %v3388 = vcombine.high %v3380, %v3380
    %v3389 = vcombine.high %v3387, %v3387
    %v3391 = vunpack.c.l.s4 1966171168
    %v3392 = vunpack.c.0.s8 %v3391
    %v3393 = vlaneseq
    %v3394 = vshrl.u32 %v3393, 7
    %v3395 = vsub.s32 %v3392, %v3394
    %v3396 = vrot.slane %v3380, %v3395
    %v3398 = vunpack.c.l.s4 1966171168
    %v3399 = vunpack.c.0.s8 %v3398
    %v3400 = vlaneseq
    %v3401 = vshrl.u32 %v3400, 7
    %v3402 = vsub.s32 %v3399, %v3401
    %v3403 = vrot.slane %v3387, %v3402
    %v3405 = vunpack.c.l.s4 1966171168
    %v3406 = vunpack.c.0.s8 %v3405
    %v3407 = vlaneseq
    %v3408 = vshrl.u32 %v3407, 7
    %v3409 = vsub.s32 %v3406, %v3408
    %v3410 = vrot.slane %v3388, %v3409
    %v3412 = vunpack.c.l.s4 1966171168
    %v3413 = vunpack.c.0.s8 %v3412
    %v3414 = vlaneseq
    %v3415 = vshrl.u32 %v3414, 7
    %v3416 = vsub.s32 %v3413, %v3415
    %v3417 = vrot.slane %v3389, %v3416
    %v3418 = vcombine.high %v3396, %v3396
    %v3419 = vcombine.high %v3403, %v3403
    %v3420 = vcombine.high %v3410, %v3410
    %v3421 = vcombine.high %v3417, %v3417
    %v3430 = vadd.f32 %v3355, %v3396
    %v3431 = vadd.f32 %v3357, %v3410
    %v3432 = vadd.f32 %v3359, %v3418
    %v3433 = vadd.f32 %v3361, %v3420
    %v3434 = vadd.f32 %v3363, %v3403
    %v3435 = vadd.f32 %v3365, %v3417
    %v3436 = vadd.f32 %v3367, %v3419
    %v3437 = vadd.f32 %v3369, %v3421
    %v3438 = vxor.u32 %v3430, 2147483648
    %v3439 = vxor.u32 %v3431, 2147483648
    %v3440 = vxor.u32 %v3432, 2147483648
    %v3441 = vxor.u32 %v3433, 2147483648
    %v3442 = vxor.u32 %v3434, 2147483648
    %v3443 = vxor.u32 %v3435, 2147483648
    %v3444 = vxor.u32 %v3436, 2147483648
    %v3445 = vxor.u32 %v3437, 2147483648
    %v3446 = vmul.f32 %v3438, 1.442695
    %v3447 = vpow.pop %v3446
    %v3448 = vmul.f32 %v3439, 1.442695
    %v3449 = vpow.pop %v3448
    %v3450 = vmul.f32 %v3440, 1.442695
    %v3451 = vpow.pop %v3450
    %v3452 = vmul.f32 %v3441, 1.442695
    %v3453 = vpow.pop %v3452
    %v3454 = vmul.f32 %v3442, 1.442695
    %v3455 = vpow.pop %v3454
    %v3456 = vmul.f32 %v3443, 1.442695
    %v3457 = vpow.pop %v3456
    %v3458 = vmul.f32 %v3444, 1.442695
    %v3459 = vpow.pop %v3458
    %v3460 = vmul.f32 %v3445, 1.442695
    %v3461 = vpow.pop %v3460
    %v3462 = vadd.f32 %v3447, 1.0
    %v3463 = vadd.f32 %v3449, 1.0
    %v3464 = vadd.f32 %v3451, 1.0
    %v3465 = vadd.f32 %v3453, 1.0
    %v3466 = vadd.f32 %v3455, 1.0
    %v3467 = vadd.f32 %v3457, 1.0
    %v3468 = vadd.f32 %v3459, 1.0
    %v3469 = vadd.f32 %v3461, 1.0
    %v3470 = vrcp.pop %v3462
    %v3471 = vmul.f32 1.0, %v3470
    %v3472 = vrcp.pop %v3463
    %v3473 = vmul.f32 1.0, %v3472
    %v3474 = vrcp.pop %v3464
    %v3475 = vmul.f32 1.0, %v3474
    %v3476 = vrcp.pop %v3465
    %v3477 = vmul.f32 1.0, %v3476
    %v3478 = vrcp.pop %v3466
    %v3479 = vmul.f32 1.0, %v3478
    %v3480 = vrcp.pop %v3467
    %v3481 = vmul.f32 1.0, %v3480
    %v3482 = vrcp.pop %v3468
    %v3483 = vmul.f32 1.0, %v3482
    %v3484 = vrcp.pop %v3469
    %v3485 = vmul.f32 1.0, %v3484
    %3494 = vrot.lane.b32.xlu0 %v3430, 64
    %v3495 = vpop.permute.xlu0 %3494
    %3496 = vrot.lane.b32.xlu0 %v3431, 64
    %v3497 = vpop.permute.xlu0 %3496
    %3498 = vrot.lane.b32.xlu0 %v3432, 64
    %v3499 = vpop.permute.xlu0 %3498
    %3500 = vrot.lane.b32.xlu0 %v3433, 64
    %v3501 = vpop.permute.xlu0 %3500
    %3502 = vrot.lane.b32.xlu0 %v3434, 64
    %v3503 = vpop.permute.xlu0 %3502
    %3504 = vrot.lane.b32.xlu0 %v3435, 64
    %v3505 = vpop.permute.xlu0 %3504
    %3506 = vrot.lane.b32.xlu0 %v3436, 64
    %v3507 = vpop.permute.xlu0 %3506
    %3508 = vrot.lane.b32.xlu0 %v3437, 64
    %v3509 = vpop.permute.xlu0 %3508
    %v3510 = vrot.slane %v3495, 1
    %v3511 = vrot.slane %v3497, 1
    %v3512 = vrot.slane %v3499, 1
    %v3513 = vrot.slane %v3501, 1
    %v3514 = vrot.slane %v3503, 1
    %v3515 = vrot.slane %v3505, 1
    %v3516 = vrot.slane %v3507, 1
    %v3517 = vrot.slane %v3509, 1
    %v3526 = vtanh.pop %v3510
    %v3527 = vtanh.pop %v3511
    %v3528 = vtanh.pop %v3512
    %v3529 = vtanh.pop %v3513
    %v3530 = vtanh.pop %v3514
    %v3531 = vtanh.pop %v3515
    %v3532 = vtanh.pop %v3516
    %v3533 = vtanh.pop %v3517
    %v3534 = vmul.f32 %v3471, %v3191
    %v3535 = vmul.f32 %v3473, %v3192
    %v3536 = vmul.f32 %v3475, %v3193
    %v3537 = vmul.f32 %v3477, %v3194
    %v3538 = vmul.f32 %v3479, %v3195
    %v3539 = vmul.f32 %v3481, %v3196
    %v3540 = vmul.f32 %v3483, %v3197
    %v3541 = vmul.f32 %v3485, %v3198
    %v3542 = vmul.f32 %v3471, %v3526
    %v3543 = vmul.f32 %v3473, %v3527
    %v3544 = vmul.f32 %v3475, %v3528
    %v3545 = vmul.f32 %v3477, %v3529
    %v3546 = vmul.f32 %v3479, %v3530
    %v3547 = vmul.f32 %v3481, %v3531
    %v3548 = vmul.f32 %v3483, %v3532
    %v3549 = vmul.f32 %v3485, %v3533
    %3558 = vrot.lane.b32.xlu0 %v3542, 64
    %v3559 = vpop.permute.xlu0 %3558
    %3560 = vrot.lane.b32.xlu0 %v3543, 64
    %v3561 = vpop.permute.xlu0 %3560
    %3562 = vrot.lane.b32.xlu0 %v3544, 64
    %v3563 = vpop.permute.xlu0 %3562
    %3564 = vrot.lane.b32.xlu0 %v3545, 64
    %v3565 = vpop.permute.xlu0 %3564
    %3566 = vrot.lane.b32.xlu0 %v3546, 64
    %v3567 = vpop.permute.xlu0 %3566
    %3568 = vrot.lane.b32.xlu0 %v3547, 64
    %v3569 = vpop.permute.xlu0 %3568
    %3570 = vrot.lane.b32.xlu0 %v3548, 64
    %v3571 = vpop.permute.xlu0 %3570
    %3572 = vrot.lane.b32.xlu0 %v3549, 64
    %v3573 = vpop.permute.xlu0 %3572
    %v3582 = vadd.f32 %v3534, %v3559
    %v3583 = vadd.f32 %v3535, %v3561
    %v3584 = vadd.f32 %v3536, %v3563
    %v3585 = vadd.f32 %v3537, %v3565
    %v3586 = vadd.f32 %v3538, %v3567
    %v3587 = vadd.f32 %v3539, %v3569
    %v3588 = vadd.f32 %v3540, %v3571
    %v3589 = vadd.f32 %v3541, %v3573
    %v3590 = vtanh.pop %v3582
    %v3591 = vtanh.pop %v3583
    %v3592 = vtanh.pop %v3584
    %v3593 = vtanh.pop %v3585
    %v3594 = vtanh.pop %v3586
    %v3595 = vtanh.pop %v3587
    %v3596 = vtanh.pop %v3588
    %v3597 = vtanh.pop %v3589
    %v3606 = vrot.slane %v3471, 1
    %v3607 = vrot.slane %v3473, 1
    %v3608 = vrot.slane %v3475, 1
    %v3609 = vrot.slane %v3477, 1
    %v3610 = vrot.slane %v3479, 1
    %v3611 = vrot.slane %v3481, 1
    %v3612 = vrot.slane %v3483, 1
    %v3613 = vrot.slane %v3485, 1
    %3630 = vrot.lane.b32.xlu0 %v3590, 64
    %v3631 = vpop.permute.xlu0 %3630
    %3632 = vrot.lane.b32.xlu0 %v3591, 64
    %v3633 = vpop.permute.xlu0 %3632
    %3634 = vrot.lane.b32.xlu0 %v3592, 64
    %v3635 = vpop.permute.xlu0 %3634
    %3636 = vrot.lane.b32.xlu0 %v3593, 64
    %v3637 = vpop.permute.xlu0 %3636
    %3638 = vrot.lane.b32.xlu0 %v3594, 64
    %v3639 = vpop.permute.xlu0 %3638
    %3640 = vrot.lane.b32.xlu0 %v3595, 64
    %v3641 = vpop.permute.xlu0 %3640
    %3642 = vrot.lane.b32.xlu0 %v3596, 64
    %v3643 = vpop.permute.xlu0 %3642
    %3644 = vrot.lane.b32.xlu0 %v3597, 64
    %v3645 = vpop.permute.xlu0 %3644
    %v3654 = vmul.f32 %v3606, %v3631
    %v3655 = vmul.f32 %v3607, %v3633
    %v3656 = vmul.f32 %v3608, %v3635
    %v3657 = vmul.f32 %v3609, %v3637
    %v3658 = vmul.f32 %v3610, %v3639
    %v3659 = vmul.f32 %v3611, %v3641
    %v3660 = vmul.f32 %v3612, %v3643
    %v3661 = vmul.f32 %v3613, %v3645
    %v3662 = vpack.c.bf16 %v3654, %v3654
    %v3663 = vpack.c.bf16 %v3655, %v3655
    %v3664 = vpack.c.bf16 %v3656, %v3656
    %v3665 = vpack.c.bf16 %v3657, %v3657
    %v3666 = vpack.c.bf16 %v3658, %v3658
    %v3667 = vpack.c.bf16 %v3659, %v3659
    %v3668 = vpack.c.bf16 %v3660, %v3660
    %v3669 = vpack.c.bf16 %v3661, %v3661
    %v3678 = vunpack.c.l.b16 %v3662
    %v3679 = vunpack.c.l.b16 %v3663
    %v3680 = vunpack.c.l.b16 %v3664
    %v3681 = vunpack.c.l.b16 %v3665
    %v3682 = vunpack.c.l.b16 %v3666
    %v3683 = vunpack.c.l.b16 %v3667
    %v3684 = vunpack.c.l.b16 %v3668
    %v3685 = vunpack.c.l.b16 %v3669
    %v3686 = vrot.slane %v3679, 7
    %v3687 = vsel %vm1334, %v3686, %v3678
    %v3688 = vrot.slane %v3680, 6
    %v3689 = vsel %vm1337, %v3688, %v3687
    %v3690 = vrot.slane %v3681, 5
    %v3691 = vsel %vm1340, %v3690, %v3689
    %v3692 = vrot.slane %v3682, 4
    %v3693 = vsel %vm1343, %v3692, %v3691
    %v3694 = vrot.slane %v3683, 3
    %v3695 = vsel %vm1346, %v3694, %v3693
    %v3696 = vrot.slane %v3684, 2
    %v3697 = vsel %vm1349, %v3696, %v3695
    %v3698 = vrot.slane %v3685, 1
    %v3699 = vsel %vm1352, %v3698, %v3697
    %v3700 = vpack.c.b16 %v3699, %v3699
    %v3702 = vsel %vm331, %v3700, 0
    %3704 = vmatprep.subr.bf16.mxu0 %v316
    %3705 = vmatpush1.bf16.msra.mxu0 %v315
    %3706 = vmatprep.subr.bf16.mxu0 %v318
    %3707 = vmatpush1.bf16.msra.mxu0 %v317
    %3708 = vmatprep.subr.bf16.mxu0 %v320
    %3709 = vmatpush1.bf16.msra.mxu0 %v319
    %3710 = vmatprep.subr.bf16.mxu0 %v322
    %3711 = vmatpush1.bf16.msra.mxu0 %v321
    %3712 = vmatprep.subr.bf16.mxu0 0
    %3713 = vmatpush1.bf16.msra.mxu0 0
    %3714 = vmatprep.subr.bf16.mxu0 0
    %3715 = vmatpush1.bf16.msra.mxu0 0
    %3716 = vmatprep.subr.bf16.mxu0 0
    %3717 = vmatpush1.bf16.msra.mxu0 0
    %3718 = vmatprep.subr.bf16.mxu0 0
    %3719 = vmatpush1.bf16.msra.mxu0 0
    %3720 = vmatprep.subr.bf16.mxu0 0
    %3721 = vmatpush1.bf16.msra.mxu0 0
    %3722 = vmatprep.subr.bf16.mxu0 0
    %3723 = vmatpush1.bf16.msra.mxu0 0
    %3724 = vmatprep.subr.bf16.mxu0 0
    %3725 = vmatpush1.bf16.msra.mxu0 0
    %3726 = vmatprep.subr.bf16.mxu0 0
    %3727 = vmatpush1.bf16.msra.mxu0 0
    %3728 = vmatprep.subr.bf16.mxu0 0
    %3729 = vmatpush1.bf16.msra.mxu0 0
    %3730 = vmatprep.subr.bf16.mxu0 0
    %3731 = vmatpush1.bf16.msra.mxu0 0
    %3732 = vmatprep.subr.bf16.mxu0 0
    %3733 = vmatpush1.bf16.msra.mxu0 0
    %3734 = vmatprep.subr.bf16.mxu0 0
    %3735 = vmatpush1.bf16.msra.mxu0 0
    %3736 = vmatprep.mubr.bf16.mxu0 0
    %3737 = vmatmul.mubr.bf16.gmra.mrb[0].mxu0 %v3702
    %v3738 = vpop.f32.mrb[0].mxu0
    %v3739 = vadd.f32 0.0, %v3738
    %v3740 = vpop.f32.mrb[0].mxu0
    %v3741 = vadd.f32 0.0, %v3740
    %v3742 = vpop.f32.mrb[0].mxu0
    %v3743 = vpop.f32.mrb[0].mxu0
    %3744 = vdwg.mxu0
    %s3745 = scalar_lea.vmem [#allocation4], 16
    %v3746 = vld [vmem:[%s3745] ss:$8 sm:$0x3]
    %s3747 = scalar_lea.vmem [#allocation4], 48
    %v3748 = vld [vmem:[%s3747] ss:$8 sm:$0x3]
    %s3749 = scalar_lea.vmem [#allocation4], 80
    %v3750 = vld [vmem:[%s3749] ss:$8 sm:$0x3]
    %s3751 = scalar_lea.vmem [#allocation4], 112
    %v3752 = vld [vmem:[%s3751] ss:$8 sm:$0x3]
    %s3753 = scalar_lea.vmem [#allocation4], 144
    %v3754 = vld [vmem:[%s3753] ss:$8 sm:$0x3]
    %s3755 = scalar_lea.vmem [#allocation4], 176
    %v3756 = vld [vmem:[%s3755] ss:$8 sm:$0x3]
    %s3757 = scalar_lea.vmem [#allocation4], 208
    %v3758 = vld [vmem:[%s3757] ss:$8 sm:$0x3]
    %s3759 = scalar_lea.vmem [#allocation4], 240
    %v3760 = vld [vmem:[%s3759] ss:$8 sm:$0x3]
    %v3763 = vcombine.low %v3739, %v3741
    %v3764 = vcombine.high %v3739, %v3741
    %v3766 = vunpack.c.l.s4 1966171168
    %v3767 = vunpack.c.0.s8 %v3766
    %v3768 = vlaneseq
    %v3769 = vshrl.u32 %v3768, 7
    %v3770 = vsub.s32 %v3767, %v3769
    %v3771 = vrot.slane %v3763, %v3770
    %v3773 = vunpack.c.l.s4 1966171168
    %v3774 = vunpack.c.0.s8 %v3773
    %v3775 = vlaneseq
    %v3776 = vshrl.u32 %v3775, 7
    %v3777 = vsub.s32 %v3774, %v3776
    %v3778 = vrot.slane %v3764, %v3777
    %v3779 = vcombine.high %v3771, %v3771
    %v3780 = vcombine.high %v3778, %v3778
    %v3782 = vunpack.c.l.s4 1966171168
    %v3783 = vunpack.c.0.s8 %v3782
    %v3784 = vlaneseq
    %v3785 = vshrl.u32 %v3784, 7
    %v3786 = vsub.s32 %v3783, %v3785
    %v3787 = vrot.slane %v3771, %v3786
    %v3789 = vunpack.c.l.s4 1966171168
    %v3790 = vunpack.c.0.s8 %v3789
    %v3791 = vlaneseq
    %v3792 = vshrl.u32 %v3791, 7
    %v3793 = vsub.s32 %v3790, %v3792
    %v3794 = vrot.slane %v3778, %v3793
    %v3796 = vunpack.c.l.s4 1966171168
    %v3797 = vunpack.c.0.s8 %v3796
    %v3798 = vlaneseq
    %v3799 = vshrl.u32 %v3798, 7
    %v3800 = vsub.s32 %v3797, %v3799
    %v3801 = vrot.slane %v3779, %v3800
    %v3803 = vunpack.c.l.s4 1966171168
    %v3804 = vunpack.c.0.s8 %v3803
    %v3805 = vlaneseq
    %v3806 = vshrl.u32 %v3805, 7
    %v3807 = vsub.s32 %v3804, %v3806
    %v3808 = vrot.slane %v3780, %v3807
    %v3809 = vcombine.high %v3787, %v3787
    %v3810 = vcombine.high %v3794, %v3794
    %v3811 = vcombine.high %v3801, %v3801
    %v3812 = vcombine.high %v3808, %v3808
    %v3821 = vadd.f32 %v3746, %v3787
    %v3822 = vadd.f32 %v3748, %v3801
    %v3823 = vadd.f32 %v3750, %v3809
    %v3824 = vadd.f32 %v3752, %v3811
    %v3825 = vadd.f32 %v3754, %v3794
    %v3826 = vadd.f32 %v3756, %v3808
    %v3827 = vadd.f32 %v3758, %v3810
    %v3828 = vadd.f32 %v3760, %v3812
    %v3829 = vxor.u32 %v3821, 2147483648
    %v3830 = vxor.u32 %v3822, 2147483648
    %v3831 = vxor.u32 %v3823, 2147483648
    %v3832 = vxor.u32 %v3824, 2147483648
    %v3833 = vxor.u32 %v3825, 2147483648
    %v3834 = vxor.u32 %v3826, 2147483648
    %v3835 = vxor.u32 %v3827, 2147483648
    %v3836 = vxor.u32 %v3828, 2147483648
    %v3837 = vmul.f32 %v3829, 1.442695
    %v3838 = vpow.pop %v3837
    %v3839 = vmul.f32 %v3830, 1.442695
    %v3840 = vpow.pop %v3839
    %v3841 = vmul.f32 %v3831, 1.442695
    %v3842 = vpow.pop %v3841
    %v3843 = vmul.f32 %v3832, 1.442695
    %v3844 = vpow.pop %v3843
    %v3845 = vmul.f32 %v3833, 1.442695
    %v3846 = vpow.pop %v3845
    %v3847 = vmul.f32 %v3834, 1.442695
    %v3848 = vpow.pop %v3847
    %v3849 = vmul.f32 %v3835, 1.442695
    %v3850 = vpow.pop %v3849
    %v3851 = vmul.f32 %v3836, 1.442695
    %v3852 = vpow.pop %v3851
    %v3853 = vadd.f32 %v3838, 1.0
    %v3854 = vadd.f32 %v3840, 1.0
    %v3855 = vadd.f32 %v3842, 1.0
    %v3856 = vadd.f32 %v3844, 1.0
    %v3857 = vadd.f32 %v3846, 1.0
    %v3858 = vadd.f32 %v3848, 1.0
    %v3859 = vadd.f32 %v3850, 1.0
    %v3860 = vadd.f32 %v3852, 1.0
    %v3861 = vrcp.pop %v3853
    %v3862 = vmul.f32 1.0, %v3861
    %v3863 = vrcp.pop %v3854
    %v3864 = vmul.f32 1.0, %v3863
    %v3865 = vrcp.pop %v3855
    %v3866 = vmul.f32 1.0, %v3865
    %v3867 = vrcp.pop %v3856
    %v3868 = vmul.f32 1.0, %v3867
    %v3869 = vrcp.pop %v3857
    %v3870 = vmul.f32 1.0, %v3869
    %v3871 = vrcp.pop %v3858
    %v3872 = vmul.f32 1.0, %v3871
    %v3873 = vrcp.pop %v3859
    %v3874 = vmul.f32 1.0, %v3873
    %v3875 = vrcp.pop %v3860
    %v3876 = vmul.f32 1.0, %v3875
    %3885 = vrot.lane.b32.xlu0 %v3821, 64
    %v3886 = vpop.permute.xlu0 %3885
    %3887 = vrot.lane.b32.xlu0 %v3822, 64
    %v3888 = vpop.permute.xlu0 %3887
    %3889 = vrot.lane.b32.xlu0 %v3823, 64
    %v3890 = vpop.permute.xlu0 %3889
    %3891 = vrot.lane.b32.xlu0 %v3824, 64
    %v3892 = vpop.permute.xlu0 %3891
    %3893 = vrot.lane.b32.xlu0 %v3825, 64
    %v3894 = vpop.permute.xlu0 %3893
    %3895 = vrot.lane.b32.xlu0 %v3826, 64
    %v3896 = vpop.permute.xlu0 %3895
    %3897 = vrot.lane.b32.xlu0 %v3827, 64
    %v3898 = vpop.permute.xlu0 %3897
    %3899 = vrot.lane.b32.xlu0 %v3828, 64
    %v3900 = vpop.permute.xlu0 %3899
    %v3901 = vrot.slane %v3886, 1
    %v3902 = vrot.slane %v3888, 1
    %v3903 = vrot.slane %v3890, 1
    %v3904 = vrot.slane %v3892, 1
    %v3905 = vrot.slane %v3894, 1
    %v3906 = vrot.slane %v3896, 1
    %v3907 = vrot.slane %v3898, 1
    %v3908 = vrot.slane %v3900, 1
    %v3917 = vtanh.pop %v3901
    %v3918 = vtanh.pop %v3902
    %v3919 = vtanh.pop %v3903
    %v3920 = vtanh.pop %v3904
    %v3921 = vtanh.pop %v3905
    %v3922 = vtanh.pop %v3906
    %v3923 = vtanh.pop %v3907
    %v3924 = vtanh.pop %v3908
    %v3925 = vmul.f32 %v3862, %v3582
    %v3926 = vmul.f32 %v3864, %v3583
    %v3927 = vmul.f32 %v3866, %v3584
    %v3928 = vmul.f32 %v3868, %v3585
    %v3929 = vmul.f32 %v3870, %v3586
    %v3930 = vmul.f32 %v3872, %v3587
    %v3931 = vmul.f32 %v3874, %v3588
    %v3932 = vmul.f32 %v3876, %v3589
    %v3933 = vmul.f32 %v3862, %v3917
    %v3934 = vmul.f32 %v3864, %v3918
    %v3935 = vmul.f32 %v3866, %v3919
    %v3936 = vmul.f32 %v3868, %v3920
    %v3937 = vmul.f32 %v3870, %v3921
    %v3938 = vmul.f32 %v3872, %v3922
    %v3939 = vmul.f32 %v3874, %v3923
    %v3940 = vmul.f32 %v3876, %v3924
    %3949 = vrot.lane.b32.xlu0 %v3933, 64
    %v3950 = vpop.permute.xlu0 %3949
    %3951 = vrot.lane.b32.xlu0 %v3934, 64
    %v3952 = vpop.permute.xlu0 %3951
    %3953 = vrot.lane.b32.xlu0 %v3935, 64
    %v3954 = vpop.permute.xlu0 %3953
    %3955 = vrot.lane.b32.xlu0 %v3936, 64
    %v3956 = vpop.permute.xlu0 %3955
    %3957 = vrot.lane.b32.xlu0 %v3937, 64
    %v3958 = vpop.permute.xlu0 %3957
    %3959 = vrot.lane.b32.xlu0 %v3938, 64
    %v3960 = vpop.permute.xlu0 %3959
    %3961 = vrot.lane.b32.xlu0 %v3939, 64
    %v3962 = vpop.permute.xlu0 %3961
    %3963 = vrot.lane.b32.xlu0 %v3940, 64
    %v3964 = vpop.permute.xlu0 %3963
    %v3973 = vadd.f32 %v3925, %v3950
    %v3974 = vadd.f32 %v3926, %v3952
    %v3975 = vadd.f32 %v3927, %v3954
    %v3976 = vadd.f32 %v3928, %v3956
    %v3977 = vadd.f32 %v3929, %v3958
    %v3978 = vadd.f32 %v3930, %v3960
    %v3979 = vadd.f32 %v3931, %v3962
    %v3980 = vadd.f32 %v3932, %v3964
    %v3981 = vtanh.pop %v3973
    %v3982 = vtanh.pop %v3974
    %v3983 = vtanh.pop %v3975
    %v3984 = vtanh.pop %v3976
    %v3985 = vtanh.pop %v3977
    %v3986 = vtanh.pop %v3978
    %v3987 = vtanh.pop %v3979
    %v3988 = vtanh.pop %v3980
    %v3997 = vrot.slane %v3862, 1
    %v3998 = vrot.slane %v3864, 1
    %v3999 = vrot.slane %v3866, 1
    %v4000 = vrot.slane %v3868, 1
    %v4001 = vrot.slane %v3870, 1
    %v4002 = vrot.slane %v3872, 1
    %v4003 = vrot.slane %v3874, 1
    %v4004 = vrot.slane %v3876, 1
    %4021 = vrot.lane.b32.xlu0 %v3981, 64
    %v4022 = vpop.permute.xlu0 %4021
    %4023 = vrot.lane.b32.xlu0 %v3982, 64
    %v4024 = vpop.permute.xlu0 %4023
    %4025 = vrot.lane.b32.xlu0 %v3983, 64
    %v4026 = vpop.permute.xlu0 %4025
    %4027 = vrot.lane.b32.xlu0 %v3984, 64
    %v4028 = vpop.permute.xlu0 %4027
    %4029 = vrot.lane.b32.xlu0 %v3985, 64
    %v4030 = vpop.permute.xlu0 %4029
    %4031 = vrot.lane.b32.xlu0 %v3986, 64
    %v4032 = vpop.permute.xlu0 %4031
    %4033 = vrot.lane.b32.xlu0 %v3987, 64
    %v4034 = vpop.permute.xlu0 %4033
    %4035 = vrot.lane.b32.xlu0 %v3988, 64
    %v4036 = vpop.permute.xlu0 %4035
    %v4045 = vmul.f32 %v3997, %v4022
    %v4046 = vmul.f32 %v3998, %v4024
    %v4047 = vmul.f32 %v3999, %v4026
    %v4048 = vmul.f32 %v4000, %v4028
    %v4049 = vmul.f32 %v4001, %v4030
    %v4050 = vmul.f32 %v4002, %v4032
    %v4051 = vmul.f32 %v4003, %v4034
    %v4052 = vmul.f32 %v4004, %v4036
    %v4053 = vpack.c.bf16 %v4045, %v4045
    %v4054 = vpack.c.bf16 %v4046, %v4046
    %v4055 = vpack.c.bf16 %v4047, %v4047
    %v4056 = vpack.c.bf16 %v4048, %v4048
    %v4057 = vpack.c.bf16 %v4049, %v4049
    %v4058 = vpack.c.bf16 %v4050, %v4050
    %v4059 = vpack.c.bf16 %v4051, %v4051
    %v4060 = vpack.c.bf16 %v4052, %v4052
    %v4069 = vunpack.c.l.b16 %v4053
    %v4070 = vunpack.c.l.b16 %v4054
    %v4071 = vunpack.c.l.b16 %v4055
    %v4072 = vunpack.c.l.b16 %v4056
    %v4073 = vunpack.c.l.b16 %v4057
    %v4074 = vunpack.c.l.b16 %v4058
    %v4075 = vunpack.c.l.b16 %v4059
    %v4076 = vunpack.c.l.b16 %v4060
    %v4077 = vrot.slane %v4070, 7
    %v4078 = vsel %vm1334, %v4077, %v4069
    %v4079 = vrot.slane %v4071, 6
    %v4080 = vsel %vm1337, %v4079, %v4078
    %v4081 = vrot.slane %v4072, 5
    %v4082 = vsel %vm1340, %v4081, %v4080
    %v4083 = vrot.slane %v4073, 4
    %v4084 = vsel %vm1343, %v4083, %v4082
    %v4085 = vrot.slane %v4074, 3
    %v4086 = vsel %vm1346, %v4085, %v4084
    %v4087 = vrot.slane %v4075, 2
    %v4088 = vsel %vm1349, %v4087, %v4086
    %v4089 = vrot.slane %v4076, 1
    %v4090 = vsel %vm1352, %v4089, %v4088
    %v4091 = vpack.c.b16 %v4090, %v4090
    %v4093 = vsel %vm331, %v4091, 0
    %4095 = vmatprep.subr.bf16.mxu0 %v316
    %4096 = vmatpush1.bf16.msra.mxu0 %v315
    %4097 = vmatprep.subr.bf16.mxu0 %v318
    %4098 = vmatpush1.bf16.msra.mxu0 %v317
    %4099 = vmatprep.subr.bf16.mxu0 %v320
    %4100 = vmatpush1.bf16.msra.mxu0 %v319
    %4101 = vmatprep.subr.bf16.mxu0 %v322
    %4102 = vmatpush1.bf16.msra.mxu0 %v321
    %4103 = vmatprep.subr.bf16.mxu0 0
    %4104 = vmatpush1.bf16.msra.mxu0 0
    %4105 = vmatprep.subr.bf16.mxu0 0
    %4106 = vmatpush1.bf16.msra.mxu0 0
    %4107 = vmatprep.subr.bf16.mxu0 0
    %4108 = vmatpush1.bf16.msra.mxu0 0
    %4109 = vmatprep.subr.bf16.mxu0 0
    %4110 = vmatpush1.bf16.msra.mxu0 0
    %4111 = vmatprep.subr.bf16.mxu0 0
    %4112 = vmatpush1.bf16.msra.mxu0 0
    %4113 = vmatprep.subr.bf16.mxu0 0
    %4114 = vmatpush1.bf16.msra.mxu0 0
    %4115 = vmatprep.subr.bf16.mxu0 0
    %4116 = vmatpush1.bf16.msra.mxu0 0
    %4117 = vmatprep.subr.bf16.mxu0 0
    %4118 = vmatpush1.bf16.msra.mxu0 0
    %4119 = vmatprep.subr.bf16.mxu0 0
    %4120 = vmatpush1.bf16.msra.mxu0 0
    %4121 = vmatprep.subr.bf16.mxu0 0
    %4122 = vmatpush1.bf16.msra.mxu0 0
    %4123 = vmatprep.subr.bf16.mxu0 0
    %4124 = vmatpush1.bf16.msra.mxu0 0
    %4125 = vmatprep.subr.bf16.mxu0 0
    %4126 = vmatpush1.bf16.msra.mxu0 0
    %4127 = vmatprep.mubr.bf16.mxu0 0
    %4128 = vmatmul.mubr.bf16.gmra.mrb[0].mxu0 %v4093
    %v4129 = vpop.f32.mrb[0].mxu0
    %v4130 = vadd.f32 0.0, %v4129
    %v4131 = vpop.f32.mrb[0].mxu0
    %v4132 = vadd.f32 0.0, %v4131
    %v4133 = vpop.f32.mrb[0].mxu0
    %v4134 = vpop.f32.mrb[0].mxu0
    %4135 = vdwg.mxu0
    %s4136 = scalar_lea.vmem [#allocation4], 17
    %v4137 = vld [vmem:[%s4136] ss:$8 sm:$0x3]
    %s4138 = scalar_lea.vmem [#allocation4], 49
    %v4139 = vld [vmem:[%s4138] ss:$8 sm:$0x3]
    %s4140 = scalar_lea.vmem [#allocation4], 81
    %v4141 = vld [vmem:[%s4140] ss:$8 sm:$0x3]
    %s4142 = scalar_lea.vmem [#allocation4], 113
    %v4143 = vld [vmem:[%s4142] ss:$8 sm:$0x3]
    %s4144 = scalar_lea.vmem [#allocation4], 145
    %v4145 = vld [vmem:[%s4144] ss:$8 sm:$0x3]
    %s4146 = scalar_lea.vmem [#allocation4], 177
    %v4147 = vld [vmem:[%s4146] ss:$8 sm:$0x3]
    %s4148 = scalar_lea.vmem [#allocation4], 209
    %v4149 = vld [vmem:[%s4148] ss:$8 sm:$0x3]
    %s4150 = scalar_lea.vmem [#allocation4], 241
    %v4151 = vld [vmem:[%s4150] ss:$8 sm:$0x3]
    %v4154 = vcombine.low %v4130, %v4132
    %v4155 = vcombine.high %v4130, %v4132
    %v4157 = vunpack.c.l.s4 1966171168
    %v4158 = vunpack.c.0.s8 %v4157
    %v4159 = vlaneseq
    %v4160 = vshrl.u32 %v4159, 7
    %v4161 = vsub.s32 %v4158, %v4160
    %v4162 = vrot.slane %v4154, %v4161
    %v4164 = vunpack.c.l.s4 1966171168
    %v4165 = vunpack.c.0.s8 %v4164
    %v4166 = vlaneseq
    %v4167 = vshrl.u32 %v4166, 7
    %v4168 = vsub.s32 %v4165, %v4167
    %v4169 = vrot.slane %v4155, %v4168
    %v4170 = vcombine.high %v4162, %v4162
    %v4171 = vcombine.high %v4169, %v4169
    %v4173 = vunpack.c.l.s4 1966171168
    %v4174 = vunpack.c.0.s8 %v4173
    %v4175 = vlaneseq
    %v4176 = vshrl.u32 %v4175, 7
    %v4177 = vsub.s32 %v4174, %v4176
    %v4178 = vrot.slane %v4162, %v4177
    %v4180 = vunpack.c.l.s4 1966171168
    %v4181 = vunpack.c.0.s8 %v4180
    %v4182 = vlaneseq
    %v4183 = vshrl.u32 %v4182, 7
    %v4184 = vsub.s32 %v4181, %v4183
    %v4185 = vrot.slane %v4169, %v4184
    %v4187 = vunpack.c.l.s4 1966171168
    %v4188 = vunpack.c.0.s8 %v4187
    %v4189 = vlaneseq
    %v4190 = vshrl.u32 %v4189, 7
    %v4191 = vsub.s32 %v4188, %v4190
    %v4192 = vrot.slane %v4170, %v4191
    %v4194 = vunpack.c.l.s4 1966171168
    %v4195 = vunpack.c.0.s8 %v4194
    %v4196 = vlaneseq
    %v4197 = vshrl.u32 %v4196, 7
    %v4198 = vsub.s32 %v4195, %v4197
    %v4199 = vrot.slane %v4171, %v4198
    %v4200 = vcombine.high %v4178, %v4178
    %v4201 = vcombine.high %v4185, %v4185
    %v4202 = vcombine.high %v4192, %v4192
    %v4203 = vcombine.high %v4199, %v4199
    %v4212 = vadd.f32 %v4137, %v4178
    %v4213 = vadd.f32 %v4139, %v4192
    %v4214 = vadd.f32 %v4141, %v4200
    %v4215 = vadd.f32 %v4143, %v4202
    %v4216 = vadd.f32 %v4145, %v4185
    %v4217 = vadd.f32 %v4147, %v4199
    %v4218 = vadd.f32 %v4149, %v4201
    %v4219 = vadd.f32 %v4151, %v4203
    %v4220 = vxor.u32 %v4212, 2147483648
    %v4221 = vxor.u32 %v4213, 2147483648
    %v4222 = vxor.u32 %v4214, 2147483648
    %v4223 = vxor.u32 %v4215, 2147483648
    %v4224 = vxor.u32 %v4216, 2147483648
    %v4225 = vxor.u32 %v4217, 2147483648
    %v4226 = vxor.u32 %v4218, 2147483648
    %v4227 = vxor.u32 %v4219, 2147483648
    %v4228 = vmul.f32 %v4220, 1.442695
    %v4229 = vpow.pop %v4228
    %v4230 = vmul.f32 %v4221, 1.442695
    %v4231 = vpow.pop %v4230
    %v4232 = vmul.f32 %v4222, 1.442695
    %v4233 = vpow.pop %v4232
    %v4234 = vmul.f32 %v4223, 1.442695
    %v4235 = vpow.pop %v4234
    %v4236 = vmul.f32 %v4224, 1.442695
    %v4237 = vpow.pop %v4236
    %v4238 = vmul.f32 %v4225, 1.442695
    %v4239 = vpow.pop %v4238
    %v4240 = vmul.f32 %v4226, 1.442695
    %v4241 = vpow.pop %v4240
    %v4242 = vmul.f32 %v4227, 1.442695
    %v4243 = vpow.pop %v4242
    %v4244 = vadd.f32 %v4229, 1.0
    %v4245 = vadd.f32 %v4231, 1.0
    %v4246 = vadd.f32 %v4233, 1.0
    %v4247 = vadd.f32 %v4235, 1.0
    %v4248 = vadd.f32 %v4237, 1.0
    %v4249 = vadd.f32 %v4239, 1.0
    %v4250 = vadd.f32 %v4241, 1.0
    %v4251 = vadd.f32 %v4243, 1.0
    %v4252 = vrcp.pop %v4244
    %v4253 = vmul.f32 1.0, %v4252
    %v4254 = vrcp.pop %v4245
    %v4255 = vmul.f32 1.0, %v4254
    %v4256 = vrcp.pop %v4246
    %v4257 = vmul.f32 1.0, %v4256
    %v4258 = vrcp.pop %v4247
    %v4259 = vmul.f32 1.0, %v4258
    %v4260 = vrcp.pop %v4248
    %v4261 = vmul.f32 1.0, %v4260
    %v4262 = vrcp.pop %v4249
    %v4263 = vmul.f32 1.0, %v4262
    %v4264 = vrcp.pop %v4250
    %v4265 = vmul.f32 1.0, %v4264
    %v4266 = vrcp.pop %v4251
    %v4267 = vmul.f32 1.0, %v4266
    %4276 = vrot.lane.b32.xlu0 %v4212, 64
    %v4277 = vpop.permute.xlu0 %4276
    %4278 = vrot.lane.b32.xlu0 %v4213, 64
    %v4279 = vpop.permute.xlu0 %4278
    %4280 = vrot.lane.b32.xlu0 %v4214, 64
    %v4281 = vpop.permute.xlu0 %4280
    %4282 = vrot.lane.b32.xlu0 %v4215, 64
    %v4283 = vpop.permute.xlu0 %4282
    %4284 = vrot.lane.b32.xlu0 %v4216, 64
    %v4285 = vpop.permute.xlu0 %4284
    %4286 = vrot.lane.b32.xlu0 %v4217, 64
    %v4287 = vpop.permute.xlu0 %4286
    %4288 = vrot.lane.b32.xlu0 %v4218, 64
    %v4289 = vpop.permute.xlu0 %4288
    %4290 = vrot.lane.b32.xlu0 %v4219, 64
    %v4291 = vpop.permute.xlu0 %4290
    %v4292 = vrot.slane %v4277, 1
    %v4293 = vrot.slane %v4279, 1
    %v4294 = vrot.slane %v4281, 1
    %v4295 = vrot.slane %v4283, 1
    %v4296 = vrot.slane %v4285, 1
    %v4297 = vrot.slane %v4287, 1
    %v4298 = vrot.slane %v4289, 1
    %v4299 = vrot.slane %v4291, 1
    %v4308 = vtanh.pop %v4292
    %v4309 = vtanh.pop %v4293
    %v4310 = vtanh.pop %v4294
    %v4311 = vtanh.pop %v4295
    %v4312 = vtanh.pop %v4296
    %v4313 = vtanh.pop %v4297
    %v4314 = vtanh.pop %v4298
    %v4315 = vtanh.pop %v4299
    %v4316 = vmul.f32 %v4253, %v3973
    %v4317 = vmul.f32 %v4255, %v3974
    %v4318 = vmul.f32 %v4257, %v3975
    %v4319 = vmul.f32 %v4259, %v3976
    %v4320 = vmul.f32 %v4261, %v3977
    %v4321 = vmul.f32 %v4263, %v3978
    %v4322 = vmul.f32 %v4265, %v3979
    %v4323 = vmul.f32 %v4267, %v3980
    %v4324 = vmul.f32 %v4253, %v4308
    %v4325 = vmul.f32 %v4255, %v4309
    %v4326 = vmul.f32 %v4257, %v4310
    %v4327 = vmul.f32 %v4259, %v4311
    %v4328 = vmul.f32 %v4261, %v4312
    %v4329 = vmul.f32 %v4263, %v4313
    %v4330 = vmul.f32 %v4265, %v4314
    %v4331 = vmul.f32 %v4267, %v4315
    %4340 = vrot.lane.b32.xlu0 %v4324, 64
    %v4341 = vpop.permute.xlu0 %4340
    %4342 = vrot.lane.b32.xlu0 %v4325, 64
    %v4343 = vpop.permute.xlu0 %4342
    %4344 = vrot.lane.b32.xlu0 %v4326, 64
    %v4345 = vpop.permute.xlu0 %4344
    %4346 = vrot.lane.b32.xlu0 %v4327, 64
    %v4347 = vpop.permute.xlu0 %4346
    %4348 = vrot.lane.b32.xlu0 %v4328, 64
    %v4349 = vpop.permute.xlu0 %4348
    %4350 = vrot.lane.b32.xlu0 %v4329, 64
    %v4351 = vpop.permute.xlu0 %4350
    %4352 = vrot.lane.b32.xlu0 %v4330, 64
    %v4353 = vpop.permute.xlu0 %4352
    %4354 = vrot.lane.b32.xlu0 %v4331, 64
    %v4355 = vpop.permute.xlu0 %4354
    %v4364 = vadd.f32 %v4316, %v4341
    %v4365 = vadd.f32 %v4317, %v4343
    %v4366 = vadd.f32 %v4318, %v4345
    %v4367 = vadd.f32 %v4319, %v4347
    %v4368 = vadd.f32 %v4320, %v4349
    %v4369 = vadd.f32 %v4321, %v4351
    %v4370 = vadd.f32 %v4322, %v4353
    %v4371 = vadd.f32 %v4323, %v4355
    %v4372 = vtanh.pop %v4364
    %v4373 = vtanh.pop %v4365
    %v4374 = vtanh.pop %v4366
    %v4375 = vtanh.pop %v4367
    %v4376 = vtanh.pop %v4368
    %v4377 = vtanh.pop %v4369
    %v4378 = vtanh.pop %v4370
    %v4379 = vtanh.pop %v4371
    %v4388 = vrot.slane %v4253, 1
    %v4389 = vrot.slane %v4255, 1
    %v4390 = vrot.slane %v4257, 1
    %v4391 = vrot.slane %v4259, 1
    %v4392 = vrot.slane %v4261, 1
    %v4393 = vrot.slane %v4263, 1
    %v4394 = vrot.slane %v4265, 1
    %v4395 = vrot.slane %v4267, 1
    %4412 = vrot.lane.b32.xlu0 %v4372, 64
    %v4413 = vpop.permute.xlu0 %4412
    %4414 = vrot.lane.b32.xlu0 %v4373, 64
    %v4415 = vpop.permute.xlu0 %4414
    %4416 = vrot.lane.b32.xlu0 %v4374, 64
    %v4417 = vpop.permute.xlu0 %4416
    %4418 = vrot.lane.b32.xlu0 %v4375, 64
    %v4419 = vpop.permute.xlu0 %4418
    %4420 = vrot.lane.b32.xlu0 %v4376, 64
    %v4421 = vpop.permute.xlu0 %4420
    %4422 = vrot.lane.b32.xlu0 %v4377, 64
    %v4423 = vpop.permute.xlu0 %4422
    %4424 = vrot.lane.b32.xlu0 %v4378, 64
    %v4425 = vpop.permute.xlu0 %4424
    %4426 = vrot.lane.b32.xlu0 %v4379, 64
    %v4427 = vpop.permute.xlu0 %4426
    %v4436 = vmul.f32 %v4388, %v4413
    %v4437 = vmul.f32 %v4389, %v4415
    %v4438 = vmul.f32 %v4390, %v4417
    %v4439 = vmul.f32 %v4391, %v4419
    %v4440 = vmul.f32 %v4392, %v4421
    %v4441 = vmul.f32 %v4393, %v4423
    %v4442 = vmul.f32 %v4394, %v4425
    %v4443 = vmul.f32 %v4395, %v4427
    %v4444 = vpack.c.bf16 %v4436, %v4436
    %v4445 = vpack.c.bf16 %v4437, %v4437
    %v4446 = vpack.c.bf16 %v4438, %v4438
    %v4447 = vpack.c.bf16 %v4439, %v4439
    %v4448 = vpack.c.bf16 %v4440, %v4440
    %v4449 = vpack.c.bf16 %v4441, %v4441
    %v4450 = vpack.c.bf16 %v4442, %v4442
    %v4451 = vpack.c.bf16 %v4443, %v4443
    %v4460 = vunpack.c.l.b16 %v4444
    %v4461 = vunpack.c.l.b16 %v4445
    %v4462 = vunpack.c.l.b16 %v4446
    %v4463 = vunpack.c.l.b16 %v4447
    %v4464 = vunpack.c.l.b16 %v4448
    %v4465 = vunpack.c.l.b16 %v4449
    %v4466 = vunpack.c.l.b16 %v4450
    %v4467 = vunpack.c.l.b16 %v4451
    %v4468 = vrot.slane %v4461, 7
    %v4469 = vsel %vm1334, %v4468, %v4460
    %v4470 = vrot.slane %v4462, 6
    %v4471 = vsel %vm1337, %v4470, %v4469
    %v4472 = vrot.slane %v4463, 5
    %v4473 = vsel %vm1340, %v4472, %v4471
    %v4474 = vrot.slane %v4464, 4
    %v4475 = vsel %vm1343, %v4474, %v4473
    %v4476 = vrot.slane %v4465, 3
    %v4477 = vsel %vm1346, %v4476, %v4475
    %v4478 = vrot.slane %v4466, 2
    %v4479 = vsel %vm1349, %v4478, %v4477
    %v4480 = vrot.slane %v4467, 1
    %v4481 = vsel %vm1352, %v4480, %v4479
    %v4482 = vpack.c.b16 %v4481, %v4481
    %v4484 = vsel %vm331, %v4482, 0
    %4486 = vmatprep.subr.bf16.mxu0 %v316
    %4487 = vmatpush1.bf16.msra.mxu0 %v315
    %4488 = vmatprep.subr.bf16.mxu0 %v318
    %4489 = vmatpush1.bf16.msra.mxu0 %v317
    %4490 = vmatprep.subr.bf16.mxu0 %v320
    %4491 = vmatpush1.bf16.msra.mxu0 %v319
    %4492 = vmatprep.subr.bf16.mxu0 %v322
    %4493 = vmatpush1.bf16.msra.mxu0 %v321
    %4494 = vmatprep.subr.bf16.mxu0 0
    %4495 = vmatpush1.bf16.msra.mxu0 0
    %4496 = vmatprep.subr.bf16.mxu0 0
    %4497 = vmatpush1.bf16.msra.mxu0 0
    %4498 = vmatprep.subr.bf16.mxu0 0
    %4499 = vmatpush1.bf16.msra.mxu0 0
    %4500 = vmatprep.subr.bf16.mxu0 0
    %4501 = vmatpush1.bf16.msra.mxu0 0
    %4502 = vmatprep.subr.bf16.mxu0 0
    %4503 = vmatpush1.bf16.msra.mxu0 0
    %4504 = vmatprep.subr.bf16.mxu0 0
    %4505 = vmatpush1.bf16.msra.mxu0 0
    %4506 = vmatprep.subr.bf16.mxu0 0
    %4507 = vmatpush1.bf16.msra.mxu0 0
    %4508 = vmatprep.subr.bf16.mxu0 0
    %4509 = vmatpush1.bf16.msra.mxu0 0
    %4510 = vmatprep.subr.bf16.mxu0 0
    %4511 = vmatpush1.bf16.msra.mxu0 0
    %4512 = vmatprep.subr.bf16.mxu0 0
    %4513 = vmatpush1.bf16.msra.mxu0 0
    %4514 = vmatprep.subr.bf16.mxu0 0
    %4515 = vmatpush1.bf16.msra.mxu0 0
    %4516 = vmatprep.subr.bf16.mxu0 0
    %4517 = vmatpush1.bf16.msra.mxu0 0
    %4518 = vmatprep.mubr.bf16.mxu0 0
    %4519 = vmatmul.mubr.bf16.gmra.mrb[0].mxu0 %v4484
    %v4520 = vpop.f32.mrb[0].mxu0
    %v4521 = vadd.f32 0.0, %v4520
    %v4522 = vpop.f32.mrb[0].mxu0
    %v4523 = vadd.f32 0.0, %v4522
    %v4524 = vpop.f32.mrb[0].mxu0
    %v4525 = vpop.f32.mrb[0].mxu0
    %4526 = vdwg.mxu0
    %s4527 = scalar_lea.vmem [#allocation4], 18
    %v4528 = vld [vmem:[%s4527] ss:$8 sm:$0x3]
    %s4529 = scalar_lea.vmem [#allocation4], 50
    %v4530 = vld [vmem:[%s4529] ss:$8 sm:$0x3]
    %s4531 = scalar_lea.vmem [#allocation4], 82
    %v4532 = vld [vmem:[%s4531] ss:$8 sm:$0x3]
    %s4533 = scalar_lea.vmem [#allocation4], 114
    %v4534 = vld [vmem:[%s4533] ss:$8 sm:$0x3]
    %s4535 = scalar_lea.vmem [#allocation4], 146
    %v4536 = vld [vmem:[%s4535] ss:$8 sm:$0x3]
    %s4537 = scalar_lea.vmem [#allocation4], 178
    %v4538 = vld [vmem:[%s4537] ss:$8 sm:$0x3]
    %s4539 = scalar_lea.vmem [#allocation4], 210
    %v4540 = vld [vmem:[%s4539] ss:$8 sm:$0x3]
    %s4541 = scalar_lea.vmem [#allocation4], 242
    %v4542 = vld [vmem:[%s4541] ss:$8 sm:$0x3]
    %v4545 = vcombine.low %v4521, %v4523
    %v4546 = vcombine.high %v4521, %v4523
    %v4548 = vunpack.c.l.s4 1966171168
    %v4549 = vunpack.c.0.s8 %v4548
    %v4550 = vlaneseq
    %v4551 = vshrl.u32 %v4550, 7
    %v4552 = vsub.s32 %v4549, %v4551
    %v4553 = vrot.slane %v4545, %v4552
    %v4555 = vunpack.c.l.s4 1966171168
    %v4556 = vunpack.c.0.s8 %v4555
    %v4557 = vlaneseq
    %v4558 = vshrl.u32 %v4557, 7
    %v4559 = vsub.s32 %v4556, %v4558
    %v4560 = vrot.slane %v4546, %v4559
    %v4561 = vcombine.high %v4553, %v4553
    %v4562 = vcombine.high %v4560, %v4560
    %v4564 = vunpack.c.l.s4 1966171168
    %v4565 = vunpack.c.0.s8 %v4564
    %v4566 = vlaneseq
    %v4567 = vshrl.u32 %v4566, 7
    %v4568 = vsub.s32 %v4565, %v4567
    %v4569 = vrot.slane %v4553, %v4568
    %v4571 = vunpack.c.l.s4 1966171168
    %v4572 = vunpack.c.0.s8 %v4571
    %v4573 = vlaneseq
    %v4574 = vshrl.u32 %v4573, 7
    %v4575 = vsub.s32 %v4572, %v4574
    %v4576 = vrot.slane %v4560, %v4575
    %v4578 = vunpack.c.l.s4 1966171168
    %v4579 = vunpack.c.0.s8 %v4578
    %v4580 = vlaneseq
    %v4581 = vshrl.u32 %v4580, 7
    %v4582 = vsub.s32 %v4579, %v4581
    %v4583 = vrot.slane %v4561, %v4582
    %v4585 = vunpack.c.l.s4 1966171168
    %v4586 = vunpack.c.0.s8 %v4585
    %v4587 = vlaneseq
    %v4588 = vshrl.u32 %v4587, 7
    %v4589 = vsub.s32 %v4586, %v4588
    %v4590 = vrot.slane %v4562, %v4589
    %v4591 = vcombine.high %v4569, %v4569
    %v4592 = vcombine.high %v4576, %v4576
    %v4593 = vcombine.high %v4583, %v4583
    %v4594 = vcombine.high %v4590, %v4590
    %v4603 = vadd.f32 %v4528, %v4569
    %v4604 = vadd.f32 %v4530, %v4583
    %v4605 = vadd.f32 %v4532, %v4591
    %v4606 = vadd.f32 %v4534, %v4593
    %v4607 = vadd.f32 %v4536, %v4576
    %v4608 = vadd.f32 %v4538, %v4590
    %v4609 = vadd.f32 %v4540, %v4592
    %v4610 = vadd.f32 %v4542, %v4594
    %v4611 = vxor.u32 %v4603, 2147483648
    %v4612 = vxor.u32 %v4604, 2147483648
    %v4613 = vxor.u32 %v4605, 2147483648
    %v4614 = vxor.u32 %v4606, 2147483648
    %v4615 = vxor.u32 %v4607, 2147483648
    %v4616 = vxor.u32 %v4608, 2147483648
    %v4617 = vxor.u32 %v4609, 2147483648
    %v4618 = vxor.u32 %v4610, 2147483648
    %v4619 = vmul.f32 %v4611, 1.442695
    %v4620 = vpow.pop %v4619
    %v4621 = vmul.f32 %v4612, 1.442695
    %v4622 = vpow.pop %v4621
    %v4623 = vmul.f32 %v4613, 1.442695
    %v4624 = vpow.pop %v4623
    %v4625 = vmul.f32 %v4614, 1.442695
    %v4626 = vpow.pop %v4625
    %v4627 = vmul.f32 %v4615, 1.442695
    %v4628 = vpow.pop %v4627
    %v4629 = vmul.f32 %v4616, 1.442695
    %v4630 = vpow.pop %v4629
    %v4631 = vmul.f32 %v4617, 1.442695
    %v4632 = vpow.pop %v4631
    %v4633 = vmul.f32 %v4618, 1.442695
    %v4634 = vpow.pop %v4633
    %v4635 = vadd.f32 %v4620, 1.0
    %v4636 = vadd.f32 %v4622, 1.0
    %v4637 = vadd.f32 %v4624, 1.0
    %v4638 = vadd.f32 %v4626, 1.0
    %v4639 = vadd.f32 %v4628, 1.0
    %v4640 = vadd.f32 %v4630, 1.0
    %v4641 = vadd.f32 %v4632, 1.0
    %v4642 = vadd.f32 %v4634, 1.0
    %v4643 = vrcp.pop %v4635
    %v4644 = vmul.f32 1.0, %v4643
    %v4645 = vrcp.pop %v4636
    %v4646 = vmul.f32 1.0, %v4645
    %v4647 = vrcp.pop %v4637
    %v4648 = vmul.f32 1.0, %v4647
    %v4649 = vrcp.pop %v4638
    %v4650 = vmul.f32 1.0, %v4649
    %v4651 = vrcp.pop %v4639
    %v4652 = vmul.f32 1.0, %v4651
    %v4653 = vrcp.pop %v4640
    %v4654 = vmul.f32 1.0, %v4653
    %v4655 = vrcp.pop %v4641
    %v4656 = vmul.f32 1.0, %v4655
    %v4657 = vrcp.pop %v4642
    %v4658 = vmul.f32 1.0, %v4657
    %4667 = vrot.lane.b32.xlu0 %v4603, 64
    %v4668 = vpop.permute.xlu0 %4667
    %4669 = vrot.lane.b32.xlu0 %v4604, 64
    %v4670 = vpop.permute.xlu0 %4669
    %4671 = vrot.lane.b32.xlu0 %v4605, 64
    %v4672 = vpop.permute.xlu0 %4671
    %4673 = vrot.lane.b32.xlu0 %v4606, 64
    %v4674 = vpop.permute.xlu0 %4673
    %4675 = vrot.lane.b32.xlu0 %v4607, 64
    %v4676 = vpop.permute.xlu0 %4675
    %4677 = vrot.lane.b32.xlu0 %v4608, 64
    %v4678 = vpop.permute.xlu0 %4677
    %4679 = vrot.lane.b32.xlu0 %v4609, 64
    %v4680 = vpop.permute.xlu0 %4679
    %4681 = vrot.lane.b32.xlu0 %v4610, 64
    %v4682 = vpop.permute.xlu0 %4681
    %v4683 = vrot.slane %v4668, 1
    %v4684 = vrot.slane %v4670, 1
    %v4685 = vrot.slane %v4672, 1
    %v4686 = vrot.slane %v4674, 1
    %v4687 = vrot.slane %v4676, 1
    %v4688 = vrot.slane %v4678, 1
    %v4689 = vrot.slane %v4680, 1
    %v4690 = vrot.slane %v4682, 1
    %v4699 = vtanh.pop %v4683
    %v4700 = vtanh.pop %v4684
    %v4701 = vtanh.pop %v4685
    %v4702 = vtanh.pop %v4686
    %v4703 = vtanh.pop %v4687
    %v4704 = vtanh.pop %v4688
    %v4705 = vtanh.pop %v4689
    %v4706 = vtanh.pop %v4690
    %v4707 = vmul.f32 %v4644, %v4364
    %v4708 = vmul.f32 %v4646, %v4365
    %v4709 = vmul.f32 %v4648, %v4366
    %v4710 = vmul.f32 %v4650, %v4367
    %v4711 = vmul.f32 %v4652, %v4368
    %v4712 = vmul.f32 %v4654, %v4369
    %v4713 = vmul.f32 %v4656, %v4370
    %v4714 = vmul.f32 %v4658, %v4371
    %v4715 = vmul.f32 %v4644, %v4699
    %v4716 = vmul.f32 %v4646, %v4700
    %v4717 = vmul.f32 %v4648, %v4701
    %v4718 = vmul.f32 %v4650, %v4702
    %v4719 = vmul.f32 %v4652, %v4703
    %v4720 = vmul.f32 %v4654, %v4704
    %v4721 = vmul.f32 %v4656, %v4705
    %v4722 = vmul.f32 %v4658, %v4706
    %4731 = vrot.lane.b32.xlu0 %v4715, 64
    %v4732 = vpop.permute.xlu0 %4731
    %4733 = vrot.lane.b32.xlu0 %v4716, 64
    %v4734 = vpop.permute.xlu0 %4733
    %4735 = vrot.lane.b32.xlu0 %v4717, 64
    %v4736 = vpop.permute.xlu0 %4735
    %4737 = vrot.lane.b32.xlu0 %v4718, 64
    %v4738 = vpop.permute.xlu0 %4737
    %4739 = vrot.lane.b32.xlu0 %v4719, 64
    %v4740 = vpop.permute.xlu0 %4739
    %4741 = vrot.lane.b32.xlu0 %v4720, 64
    %v4742 = vpop.permute.xlu0 %4741
    %4743 = vrot.lane.b32.xlu0 %v4721, 64
    %v4744 = vpop.permute.xlu0 %4743
    %4745 = vrot.lane.b32.xlu0 %v4722, 64
    %v4746 = vpop.permute.xlu0 %4745
    %v4755 = vadd.f32 %v4707, %v4732
    %v4756 = vadd.f32 %v4708, %v4734
    %v4757 = vadd.f32 %v4709, %v4736
    %v4758 = vadd.f32 %v4710, %v4738
    %v4759 = vadd.f32 %v4711, %v4740
    %v4760 = vadd.f32 %v4712, %v4742
    %v4761 = vadd.f32 %v4713, %v4744
    %v4762 = vadd.f32 %v4714, %v4746
    %v4763 = vtanh.pop %v4755
    %v4764 = vtanh.pop %v4756
    %v4765 = vtanh.pop %v4757
    %v4766 = vtanh.pop %v4758
    %v4767 = vtanh.pop %v4759
    %v4768 = vtanh.pop %v4760
    %v4769 = vtanh.pop %v4761
    %v4770 = vtanh.pop %v4762
    %v4779 = vrot.slane %v4644, 1
    %v4780 = vrot.slane %v4646, 1
    %v4781 = vrot.slane %v4648, 1
    %v4782 = vrot.slane %v4650, 1
    %v4783 = vrot.slane %v4652, 1
    %v4784 = vrot.slane %v4654, 1
    %v4785 = vrot.slane %v4656, 1
    %v4786 = vrot.slane %v4658, 1
    %4803 = vrot.lane.b32.xlu0 %v4763, 64
    %v4804 = vpop.permute.xlu0 %4803
    %4805 = vrot.lane.b32.xlu0 %v4764, 64
    %v4806 = vpop.permute.xlu0 %4805
    %4807 = vrot.lane.b32.xlu0 %v4765, 64
    %v4808 = vpop.permute.xlu0 %4807
    %4809 = vrot.lane.b32.xlu0 %v4766, 64
    %v4810 = vpop.permute.xlu0 %4809
    %4811 = vrot.lane.b32.xlu0 %v4767, 64
    %v4812 = vpop.permute.xlu0 %4811
    %4813 = vrot.lane.b32.xlu0 %v4768, 64
    %v4814 = vpop.permute.xlu0 %4813
    %4815 = vrot.lane.b32.xlu0 %v4769, 64
    %v4816 = vpop.permute.xlu0 %4815
    %4817 = vrot.lane.b32.xlu0 %v4770, 64
    %v4818 = vpop.permute.xlu0 %4817
    %v4827 = vmul.f32 %v4779, %v4804
    %v4828 = vmul.f32 %v4780, %v4806
    %v4829 = vmul.f32 %v4781, %v4808
    %v4830 = vmul.f32 %v4782, %v4810
    %v4831 = vmul.f32 %v4783, %v4812
    %v4832 = vmul.f32 %v4784, %v4814
    %v4833 = vmul.f32 %v4785, %v4816
    %v4834 = vmul.f32 %v4786, %v4818
    %v4835 = vpack.c.bf16 %v4827, %v4827
    %v4836 = vpack.c.bf16 %v4828, %v4828
    %v4837 = vpack.c.bf16 %v4829, %v4829
    %v4838 = vpack.c.bf16 %v4830, %v4830
    %v4839 = vpack.c.bf16 %v4831, %v4831
    %v4840 = vpack.c.bf16 %v4832, %v4832
    %v4841 = vpack.c.bf16 %v4833, %v4833
    %v4842 = vpack.c.bf16 %v4834, %v4834
    %v4851 = vunpack.c.l.b16 %v4835
    %v4852 = vunpack.c.l.b16 %v4836
    %v4853 = vunpack.c.l.b16 %v4837
    %v4854 = vunpack.c.l.b16 %v4838
    %v4855 = vunpack.c.l.b16 %v4839
    %v4856 = vunpack.c.l.b16 %v4840
    %v4857 = vunpack.c.l.b16 %v4841
    %v4858 = vunpack.c.l.b16 %v4842
    %v4859 = vrot.slane %v4852, 7
    %v4860 = vsel %vm1334, %v4859, %v4851
    %v4861 = vrot.slane %v4853, 6
    %v4862 = vsel %vm1337, %v4861, %v4860
    %v4863 = vrot.slane %v4854, 5
    %v4864 = vsel %vm1340, %v4863, %v4862
    %v4865 = vrot.slane %v4855, 4
    %v4866 = vsel %vm1343, %v4865, %v4864
    %v4867 = vrot.slane %v4856, 3
    %v4868 = vsel %vm1346, %v4867, %v4866
    %v4869 = vrot.slane %v4857, 2
    %v4870 = vsel %vm1349, %v4869, %v4868
    %v4871 = vrot.slane %v4858, 1
    %v4872 = vsel %vm1352, %v4871, %v4870
    %v4873 = vpack.c.b16 %v4872, %v4872
    %v4875 = vsel %vm331, %v4873, 0
    %4877 = vmatprep.subr.bf16.mxu0 %v316
    %4878 = vmatpush1.bf16.msra.mxu0 %v315
    %4879 = vmatprep.subr.bf16.mxu0 %v318
    %4880 = vmatpush1.bf16.msra.mxu0 %v317
    %4881 = vmatprep.subr.bf16.mxu0 %v320
    %4882 = vmatpush1.bf16.msra.mxu0 %v319
    %4883 = vmatprep.subr.bf16.mxu0 %v322
    %4884 = vmatpush1.bf16.msra.mxu0 %v321
    %4885 = vmatprep.subr.bf16.mxu0 0
    %4886 = vmatpush1.bf16.msra.mxu0 0
    %4887 = vmatprep.subr.bf16.mxu0 0
    %4888 = vmatpush1.bf16.msra.mxu0 0
    %4889 = vmatprep.subr.bf16.mxu0 0
    %4890 = vmatpush1.bf16.msra.mxu0 0
    %4891 = vmatprep.subr.bf16.mxu0 0
    %4892 = vmatpush1.bf16.msra.mxu0 0
    %4893 = vmatprep.subr.bf16.mxu0 0
    %4894 = vmatpush1.bf16.msra.mxu0 0
    %4895 = vmatprep.subr.bf16.mxu0 0
    %4896 = vmatpush1.bf16.msra.mxu0 0
    %4897 = vmatprep.subr.bf16.mxu0 0
    %4898 = vmatpush1.bf16.msra.mxu0 0
    %4899 = vmatprep.subr.bf16.mxu0 0
    %4900 = vmatpush1.bf16.msra.mxu0 0
    %4901 = vmatprep.subr.bf16.mxu0 0
    %4902 = vmatpush1.bf16.msra.mxu0 0
    %4903 = vmatprep.subr.bf16.mxu0 0
    %4904 = vmatpush1.bf16.msra.mxu0 0
    %4905 = vmatprep.subr.bf16.mxu0 0
    %4906 = vmatpush1.bf16.msra.mxu0 0
    %4907 = vmatprep.subr.bf16.mxu0 0
    %4908 = vmatpush1.bf16.msra.mxu0 0
    %4909 = vmatprep.mubr.bf16.mxu0 0
    %4910 = vmatmul.mubr.bf16.gmra.mrb[0].mxu0 %v4875
    %v4911 = vpop.f32.mrb[0].mxu0
    %v4912 = vadd.f32 0.0, %v4911
    %v4913 = vpop.f32.mrb[0].mxu0
    %v4914 = vadd.f32 0.0, %v4913
    %v4915 = vpop.f32.mrb[0].mxu0
    %v4916 = vpop.f32.mrb[0].mxu0
    %4917 = vdwg.mxu0
    %s4918 = scalar_lea.vmem [#allocation4], 19
    %v4919 = vld [vmem:[%s4918] ss:$8 sm:$0x3]
    %s4920 = scalar_lea.vmem [#allocation4], 51
    %v4921 = vld [vmem:[%s4920] ss:$8 sm:$0x3]
    %s4922 = scalar_lea.vmem [#allocation4], 83
    %v4923 = vld [vmem:[%s4922] ss:$8 sm:$0x3]
    %s4924 = scalar_lea.vmem [#allocation4], 115
    %v4925 = vld [vmem:[%s4924] ss:$8 sm:$0x3]
    %s4926 = scalar_lea.vmem [#allocation4], 147
    %v4927 = vld [vmem:[%s4926] ss:$8 sm:$0x3]
    %s4928 = scalar_lea.vmem [#allocation4], 179
    %v4929 = vld [vmem:[%s4928] ss:$8 sm:$0x3]
    %s4930 = scalar_lea.vmem [#allocation4], 211
    %v4931 = vld [vmem:[%s4930] ss:$8 sm:$0x3]
    %s4932 = scalar_lea.vmem [#allocation4], 243
    %v4933 = vld [vmem:[%s4932] ss:$8 sm:$0x3]
    %v4936 = vcombine.low %v4912, %v4914
    %v4937 = vcombine.high %v4912, %v4914
    %v4939 = vunpack.c.l.s4 1966171168
    %v4940 = vunpack.c.0.s8 %v4939
    %v4941 = vlaneseq
    %v4942 = vshrl.u32 %v4941, 7
    %v4943 = vsub.s32 %v4940, %v4942
    %v4944 = vrot.slane %v4936, %v4943
    %v4946 = vunpack.c.l.s4 1966171168
    %v4947 = vunpack.c.0.s8 %v4946
    %v4948 = vlaneseq
    %v4949 = vshrl.u32 %v4948, 7
    %v4950 = vsub.s32 %v4947, %v4949
    %v4951 = vrot.slane %v4937, %v4950
    %v4952 = vcombine.high %v4944, %v4944
    %v4953 = vcombine.high %v4951, %v4951
    %v4955 = vunpack.c.l.s4 1966171168
    %v4956 = vunpack.c.0.s8 %v4955
    %v4957 = vlaneseq
    %v4958 = vshrl.u32 %v4957, 7
    %v4959 = vsub.s32 %v4956, %v4958
    %v4960 = vrot.slane %v4944, %v4959
    %v4962 = vunpack.c.l.s4 1966171168
    %v4963 = vunpack.c.0.s8 %v4962
    %v4964 = vlaneseq
    %v4965 = vshrl.u32 %v4964, 7
    %v4966 = vsub.s32 %v4963, %v4965
    %v4967 = vrot.slane %v4951, %v4966
    %v4969 = vunpack.c.l.s4 1966171168
    %v4970 = vunpack.c.0.s8 %v4969
    %v4971 = vlaneseq
    %v4972 = vshrl.u32 %v4971, 7
    %v4973 = vsub.s32 %v4970, %v4972
    %v4974 = vrot.slane %v4952, %v4973
    %v4976 = vunpack.c.l.s4 1966171168
    %v4977 = vunpack.c.0.s8 %v4976
    %v4978 = vlaneseq
    %v4979 = vshrl.u32 %v4978, 7
    %v4980 = vsub.s32 %v4977, %v4979
    %v4981 = vrot.slane %v4953, %v4980
    %v4982 = vcombine.high %v4960, %v4960
    %v4983 = vcombine.high %v4967, %v4967
    %v4984 = vcombine.high %v4974, %v4974
    %v4985 = vcombine.high %v4981, %v4981
    %v4994 = vadd.f32 %v4919, %v4960
    %v4995 = vadd.f32 %v4921, %v4974
    %v4996 = vadd.f32 %v4923, %v4982
    %v4997 = vadd.f32 %v4925, %v4984
    %v4998 = vadd.f32 %v4927, %v4967
    %v4999 = vadd.f32 %v4929, %v4981
    %v5000 = vadd.f32 %v4931, %v4983
    %v5001 = vadd.f32 %v4933, %v4985
    %v5002 = vxor.u32 %v4994, 2147483648
    %v5003 = vxor.u32 %v4995, 2147483648
    %v5004 = vxor.u32 %v4996, 2147483648
    %v5005 = vxor.u32 %v4997, 2147483648
    %v5006 = vxor.u32 %v4998, 2147483648
    %v5007 = vxor.u32 %v4999, 2147483648
    %v5008 = vxor.u32 %v5000, 2147483648
    %v5009 = vxor.u32 %v5001, 2147483648
    %v5010 = vmul.f32 %v5002, 1.442695
    %v5011 = vpow.pop %v5010
    %v5012 = vmul.f32 %v5003, 1.442695
    %v5013 = vpow.pop %v5012
    %v5014 = vmul.f32 %v5004, 1.442695
    %v5015 = vpow.pop %v5014
    %v5016 = vmul.f32 %v5005, 1.442695
    %v5017 = vpow.pop %v5016
    %v5018 = vmul.f32 %v5006, 1.442695
    %v5019 = vpow.pop %v5018
    %v5020 = vmul.f32 %v5007, 1.442695
    %v5021 = vpow.pop %v5020
    %v5022 = vmul.f32 %v5008, 1.442695
    %v5023 = vpow.pop %v5022
    %v5024 = vmul.f32 %v5009, 1.442695
    %v5025 = vpow.pop %v5024
    %v5026 = vadd.f32 %v5011, 1.0
    %v5027 = vadd.f32 %v5013, 1.0
    %v5028 = vadd.f32 %v5015, 1.0
    %v5029 = vadd.f32 %v5017, 1.0
    %v5030 = vadd.f32 %v5019, 1.0
    %v5031 = vadd.f32 %v5021, 1.0
    %v5032 = vadd.f32 %v5023, 1.0
    %v5033 = vadd.f32 %v5025, 1.0
    %v5034 = vrcp.pop %v5026
    %v5035 = vmul.f32 1.0, %v5034
    %v5036 = vrcp.pop %v5027
    %v5037 = vmul.f32 1.0, %v5036
    %v5038 = vrcp.pop %v5028
    %v5039 = vmul.f32 1.0, %v5038
    %v5040 = vrcp.pop %v5029
    %v5041 = vmul.f32 1.0, %v5040
    %v5042 = vrcp.pop %v5030
    %v5043 = vmul.f32 1.0, %v5042
    %v5044 = vrcp.pop %v5031
    %v5045 = vmul.f32 1.0, %v5044
    %v5046 = vrcp.pop %v5032
    %v5047 = vmul.f32 1.0, %v5046
    %v5048 = vrcp.pop %v5033
    %v5049 = vmul.f32 1.0, %v5048
    %5058 = vrot.lane.b32.xlu0 %v4994, 64
    %v5059 = vpop.permute.xlu0 %5058
    %5060 = vrot.lane.b32.xlu0 %v4995, 64
    %v5061 = vpop.permute.xlu0 %5060
    %5062 = vrot.lane.b32.xlu0 %v4996, 64
    %v5063 = vpop.permute.xlu0 %5062
    %5064 = vrot.lane.b32.xlu0 %v4997, 64
    %v5065 = vpop.permute.xlu0 %5064
    %5066 = vrot.lane.b32.xlu0 %v4998, 64
    %v5067 = vpop.permute.xlu0 %5066
    %5068 = vrot.lane.b32.xlu0 %v4999, 64
    %v5069 = vpop.permute.xlu0 %5068
    %5070 = vrot.lane.b32.xlu0 %v5000, 64
    %v5071 = vpop.permute.xlu0 %5070
    %5072 = vrot.lane.b32.xlu0 %v5001, 64
    %v5073 = vpop.permute.xlu0 %5072
    %v5074 = vrot.slane %v5059, 1
    %v5075 = vrot.slane %v5061, 1
    %v5076 = vrot.slane %v5063, 1
    %v5077 = vrot.slane %v5065, 1
    %v5078 = vrot.slane %v5067, 1
    %v5079 = vrot.slane %v5069, 1
    %v5080 = vrot.slane %v5071, 1
    %v5081 = vrot.slane %v5073, 1
    %v5090 = vtanh.pop %v5074
    %v5091 = vtanh.pop %v5075
    %v5092 = vtanh.pop %v5076
    %v5093 = vtanh.pop %v5077
    %v5094 = vtanh.pop %v5078
    %v5095 = vtanh.pop %v5079
    %v5096 = vtanh.pop %v5080
    %v5097 = vtanh.pop %v5081
    %v5098 = vmul.f32 %v5035, %v4755
    %v5099 = vmul.f32 %v5037, %v4756
    %v5100 = vmul.f32 %v5039, %v4757
    %v5101 = vmul.f32 %v5041, %v4758
    %v5102 = vmul.f32 %v5043, %v4759
    %v5103 = vmul.f32 %v5045, %v4760
    %v5104 = vmul.f32 %v5047, %v4761
    %v5105 = vmul.f32 %v5049, %v4762
    %v5106 = vmul.f32 %v5035, %v5090
    %v5107 = vmul.f32 %v5037, %v5091
    %v5108 = vmul.f32 %v5039, %v5092
    %v5109 = vmul.f32 %v5041, %v5093
    %v5110 = vmul.f32 %v5043, %v5094
    %v5111 = vmul.f32 %v5045, %v5095
    %v5112 = vmul.f32 %v5047, %v5096
    %v5113 = vmul.f32 %v5049, %v5097
    %5122 = vrot.lane.b32.xlu0 %v5106, 64
    %v5123 = vpop.permute.xlu0 %5122
    %5124 = vrot.lane.b32.xlu0 %v5107, 64
    %v5125 = vpop.permute.xlu0 %5124
    %5126 = vrot.lane.b32.xlu0 %v5108, 64
    %v5127 = vpop.permute.xlu0 %5126
    %5128 = vrot.lane.b32.xlu0 %v5109, 64
    %v5129 = vpop.permute.xlu0 %5128
    %5130 = vrot.lane.b32.xlu0 %v5110, 64
    %v5131 = vpop.permute.xlu0 %5130
    %5132 = vrot.lane.b32.xlu0 %v5111, 64
    %v5133 = vpop.permute.xlu0 %5132
    %5134 = vrot.lane.b32.xlu0 %v5112, 64
    %v5135 = vpop.permute.xlu0 %5134
    %5136 = vrot.lane.b32.xlu0 %v5113, 64
    %v5137 = vpop.permute.xlu0 %5136
    %v5146 = vadd.f32 %v5098, %v5123
    %v5147 = vadd.f32 %v5099, %v5125
    %v5148 = vadd.f32 %v5100, %v5127
    %v5149 = vadd.f32 %v5101, %v5129
    %v5150 = vadd.f32 %v5102, %v5131
    %v5151 = vadd.f32 %v5103, %v5133
    %v5152 = vadd.f32 %v5104, %v5135
    %v5153 = vadd.f32 %v5105, %v5137
    %v5154 = vtanh.pop %v5146
    %v5155 = vtanh.pop %v5147
    %v5156 = vtanh.pop %v5148
    %v5157 = vtanh.pop %v5149
    %v5158 = vtanh.pop %v5150
    %v5159 = vtanh.pop %v5151
    %v5160 = vtanh.pop %v5152
    %v5161 = vtanh.pop %v5153
    %v5170 = vrot.slane %v5035, 1
    %v5171 = vrot.slane %v5037, 1
    %v5172 = vrot.slane %v5039, 1
    %v5173 = vrot.slane %v5041, 1
    %v5174 = vrot.slane %v5043, 1
    %v5175 = vrot.slane %v5045, 1
    %v5176 = vrot.slane %v5047, 1
    %v5177 = vrot.slane %v5049, 1
    %5194 = vrot.lane.b32.xlu0 %v5154, 64
    %v5195 = vpop.permute.xlu0 %5194
    %5196 = vrot.lane.b32.xlu0 %v5155, 64
    %v5197 = vpop.permute.xlu0 %5196
    %5198 = vrot.lane.b32.xlu0 %v5156, 64
    %v5199 = vpop.permute.xlu0 %5198
    %5200 = vrot.lane.b32.xlu0 %v5157, 64
    %v5201 = vpop.permute.xlu0 %5200
    %5202 = vrot.lane.b32.xlu0 %v5158, 64
    %v5203 = vpop.permute.xlu0 %5202
    %5204 = vrot.lane.b32.xlu0 %v5159, 64
    %v5205 = vpop.permute.xlu0 %5204
    %5206 = vrot.lane.b32.xlu0 %v5160, 64
    %v5207 = vpop.permute.xlu0 %5206
    %5208 = vrot.lane.b32.xlu0 %v5161, 64
    %v5209 = vpop.permute.xlu0 %5208
    %v5218 = vmul.f32 %v5170, %v5195
    %v5219 = vmul.f32 %v5171, %v5197
    %v5220 = vmul.f32 %v5172, %v5199
    %v5221 = vmul.f32 %v5173, %v5201
    %v5222 = vmul.f32 %v5174, %v5203
    %v5223 = vmul.f32 %v5175, %v5205
    %v5224 = vmul.f32 %v5176, %v5207
    %v5225 = vmul.f32 %v5177, %v5209
    %v5226 = vpack.c.bf16 %v5218, %v5218
    %v5227 = vpack.c.bf16 %v5219, %v5219
    %v5228 = vpack.c.bf16 %v5220, %v5220
    %v5229 = vpack.c.bf16 %v5221, %v5221
    %v5230 = vpack.c.bf16 %v5222, %v5222
    %v5231 = vpack.c.bf16 %v5223, %v5223
    %v5232 = vpack.c.bf16 %v5224, %v5224
    %v5233 = vpack.c.bf16 %v5225, %v5225
    %v5242 = vunpack.c.l.b16 %v5226
    %v5243 = vunpack.c.l.b16 %v5227
    %v5244 = vunpack.c.l.b16 %v5228
    %v5245 = vunpack.c.l.b16 %v5229
    %v5246 = vunpack.c.l.b16 %v5230
    %v5247 = vunpack.c.l.b16 %v5231
    %v5248 = vunpack.c.l.b16 %v5232
    %v5249 = vunpack.c.l.b16 %v5233
    %v5250 = vrot.slane %v5243, 7
    %v5251 = vsel %vm1334, %v5250, %v5242
    %v5252 = vrot.slane %v5244, 6
    %v5253 = vsel %vm1337, %v5252, %v5251
    %v5254 = vrot.slane %v5245, 5
    %v5255 = vsel %vm1340, %v5254, %v5253
    %v5256 = vrot.slane %v5246, 4
    %v5257 = vsel %vm1343, %v5256, %v5255
    %v5258 = vrot.slane %v5247, 3
    %v5259 = vsel %vm1346, %v5258, %v5257
    %v5260 = vrot.slane %v5248, 2
    %v5261 = vsel %vm1349, %v5260, %v5259
    %v5262 = vrot.slane %v5249, 1
    %v5263 = vsel %vm1352, %v5262, %v5261
    %v5264 = vpack.c.b16 %v5263, %v5263
    %v5266 = vsel %vm331, %v5264, 0
    %5268 = vmatprep.subr.bf16.mxu0 %v316
    %5269 = vmatpush1.bf16.msra.mxu0 %v315
    %5270 = vmatprep.subr.bf16.mxu0 %v318
    %5271 = vmatpush1.bf16.msra.mxu0 %v317
    %5272 = vmatprep.subr.bf16.mxu0 %v320
    %5273 = vmatpush1.bf16.msra.mxu0 %v319
    %5274 = vmatprep.subr.bf16.mxu0 %v322
    %5275 = vmatpush1.bf16.msra.mxu0 %v321
    %5276 = vmatprep.subr.bf16.mxu0 0
    %5277 = vmatpush1.bf16.msra.mxu0 0
    %5278 = vmatprep.subr.bf16.mxu0 0
    %5279 = vmatpush1.bf16.msra.mxu0 0
    %5280 = vmatprep.subr.bf16.mxu0 0
    %5281 = vmatpush1.bf16.msra.mxu0 0
    %5282 = vmatprep.subr.bf16.mxu0 0
    %5283 = vmatpush1.bf16.msra.mxu0 0
    %5284 = vmatprep.subr.bf16.mxu0 0
    %5285 = vmatpush1.bf16.msra.mxu0 0
    %5286 = vmatprep.subr.bf16.mxu0 0
    %5287 = vmatpush1.bf16.msra.mxu0 0
    %5288 = vmatprep.subr.bf16.mxu0 0
    %5289 = vmatpush1.bf16.msra.mxu0 0
    %5290 = vmatprep.subr.bf16.mxu0 0
    %5291 = vmatpush1.bf16.msra.mxu0 0
    %5292 = vmatprep.subr.bf16.mxu0 0
    %5293 = vmatpush1.bf16.msra.mxu0 0
    %5294 = vmatprep.subr.bf16.mxu0 0
    %5295 = vmatpush1.bf16.msra.mxu0 0
    %5296 = vmatprep.subr.bf16.mxu0 0
    %5297 = vmatpush1.bf16.msra.mxu0 0
    %5298 = vmatprep.subr.bf16.mxu0 0
    %5299 = vmatpush1.bf16.msra.mxu0 0
    %5300 = vmatprep.mubr.bf16.mxu0 0
    %5301 = vmatmul.mubr.bf16.gmra.mrb[0].mxu0 %v5266
    %v5302 = vpop.f32.mrb[0].mxu0
    %v5303 = vadd.f32 0.0, %v5302
    %v5304 = vpop.f32.mrb[0].mxu0
    %v5305 = vadd.f32 0.0, %v5304
    %v5306 = vpop.f32.mrb[0].mxu0
    %v5307 = vpop.f32.mrb[0].mxu0
    %5308 = vdwg.mxu0
    %s5309 = scalar_lea.vmem [#allocation4], 20
    %v5310 = vld [vmem:[%s5309] ss:$8 sm:$0x3]
    %s5311 = scalar_lea.vmem [#allocation4], 52
    %v5312 = vld [vmem:[%s5311] ss:$8 sm:$0x3]
    %s5313 = scalar_lea.vmem [#allocation4], 84
    %v5314 = vld [vmem:[%s5313] ss:$8 sm:$0x3]
    %s5315 = scalar_lea.vmem [#allocation4], 116
    %v5316 = vld [vmem:[%s5315] ss:$8 sm:$0x3]
    %s5317 = scalar_lea.vmem [#allocation4], 148
    %v5318 = vld [vmem:[%s5317] ss:$8 sm:$0x3]
    %s5319 = scalar_lea.vmem [#allocation4], 180
    %v5320 = vld [vmem:[%s5319] ss:$8 sm:$0x3]
    %s5321 = scalar_lea.vmem [#allocation4], 212
    %v5322 = vld [vmem:[%s5321] ss:$8 sm:$0x3]
    %s5323 = scalar_lea.vmem [#allocation4], 244
    %v5324 = vld [vmem:[%s5323] ss:$8 sm:$0x3]
    %v5327 = vcombine.low %v5303, %v5305
    %v5328 = vcombine.high %v5303, %v5305
    %v5330 = vunpack.c.l.s4 1966171168
    %v5331 = vunpack.c.0.s8 %v5330
    %v5332 = vlaneseq
    %v5333 = vshrl.u32 %v5332, 7
    %v5334 = vsub.s32 %v5331, %v5333
    %v5335 = vrot.slane %v5327, %v5334
    %v5337 = vunpack.c.l.s4 1966171168
    %v5338 = vunpack.c.0.s8 %v5337
    %v5339 = vlaneseq
    %v5340 = vshrl.u32 %v5339, 7
    %v5341 = vsub.s32 %v5338, %v5340
    %v5342 = vrot.slane %v5328, %v5341
    %v5343 = vcombine.high %v5335, %v5335
    %v5344 = vcombine.high %v5342, %v5342
    %v5346 = vunpack.c.l.s4 1966171168
    %v5347 = vunpack.c.0.s8 %v5346
    %v5348 = vlaneseq
    %v5349 = vshrl.u32 %v5348, 7
    %v5350 = vsub.s32 %v5347, %v5349
    %v5351 = vrot.slane %v5335, %v5350
    %v5353 = vunpack.c.l.s4 1966171168
    %v5354 = vunpack.c.0.s8 %v5353
    %v5355 = vlaneseq
    %v5356 = vshrl.u32 %v5355, 7
    %v5357 = vsub.s32 %v5354, %v5356
    %v5358 = vrot.slane %v5342, %v5357
    %v5360 = vunpack.c.l.s4 1966171168
    %v5361 = vunpack.c.0.s8 %v5360
    %v5362 = vlaneseq
    %v5363 = vshrl.u32 %v5362, 7
    %v5364 = vsub.s32 %v5361, %v5363
    %v5365 = vrot.slane %v5343, %v5364
    %v5367 = vunpack.c.l.s4 1966171168
    %v5368 = vunpack.c.0.s8 %v5367
    %v5369 = vlaneseq
    %v5370 = vshrl.u32 %v5369, 7
    %v5371 = vsub.s32 %v5368, %v5370
    %v5372 = vrot.slane %v5344, %v5371
    %v5373 = vcombine.high %v5351, %v5351
    %v5374 = vcombine.high %v5358, %v5358
    %v5375 = vcombine.high %v5365, %v5365
    %v5376 = vcombine.high %v5372, %v5372
    %v5385 = vadd.f32 %v5310, %v5351
    %v5386 = vadd.f32 %v5312, %v5365
    %v5387 = vadd.f32 %v5314, %v5373
    %v5388 = vadd.f32 %v5316, %v5375
    %v5389 = vadd.f32 %v5318, %v5358
    %v5390 = vadd.f32 %v5320, %v5372
    %v5391 = vadd.f32 %v5322, %v5374
    %v5392 = vadd.f32 %v5324, %v5376
    %v5393 = vxor.u32 %v5385, 2147483648
    %v5394 = vxor.u32 %v5386, 2147483648
    %v5395 = vxor.u32 %v5387, 2147483648
    %v5396 = vxor.u32 %v5388, 2147483648
    %v5397 = vxor.u32 %v5389, 2147483648
    %v5398 = vxor.u32 %v5390, 2147483648
    %v5399 = vxor.u32 %v5391, 2147483648
    %v5400 = vxor.u32 %v5392, 2147483648
    %v5401 = vmul.f32 %v5393, 1.442695
    %v5402 = vpow.pop %v5401
    %v5403 = vmul.f32 %v5394, 1.442695
    %v5404 = vpow.pop %v5403
    %v5405 = vmul.f32 %v5395, 1.442695
    %v5406 = vpow.pop %v5405
    %v5407 = vmul.f32 %v5396, 1.442695
    %v5408 = vpow.pop %v5407
    %v5409 = vmul.f32 %v5397, 1.442695
    %v5410 = vpow.pop %v5409
    %v5411 = vmul.f32 %v5398, 1.442695
    %v5412 = vpow.pop %v5411
    %v5413 = vmul.f32 %v5399, 1.442695
    %v5414 = vpow.pop %v5413
    %v5415 = vmul.f32 %v5400, 1.442695
    %v5416 = vpow.pop %v5415
    %v5417 = vadd.f32 %v5402, 1.0
    %v5418 = vadd.f32 %v5404, 1.0
    %v5419 = vadd.f32 %v5406, 1.0
    %v5420 = vadd.f32 %v5408, 1.0
    %v5421 = vadd.f32 %v5410, 1.0
    %v5422 = vadd.f32 %v5412, 1.0
    %v5423 = vadd.f32 %v5414, 1.0
    %v5424 = vadd.f32 %v5416, 1.0
    %v5425 = vrcp.pop %v5417
    %v5426 = vmul.f32 1.0, %v5425
    %v5427 = vrcp.pop %v5418
    %v5428 = vmul.f32 1.0, %v5427
    %v5429 = vrcp.pop %v5419
    %v5430 = vmul.f32 1.0, %v5429
    %v5431 = vrcp.pop %v5420
    %v5432 = vmul.f32 1.0, %v5431
    %v5433 = vrcp.pop %v5421
    %v5434 = vmul.f32 1.0, %v5433
    %v5435 = vrcp.pop %v5422
    %v5436 = vmul.f32 1.0, %v5435
    %v5437 = vrcp.pop %v5423
    %v5438 = vmul.f32 1.0, %v5437
    %v5439 = vrcp.pop %v5424
    %v5440 = vmul.f32 1.0, %v5439
    %5449 = vrot.lane.b32.xlu0 %v5385, 64
    %v5450 = vpop.permute.xlu0 %5449
    %5451 = vrot.lane.b32.xlu0 %v5386, 64
    %v5452 = vpop.permute.xlu0 %5451
    %5453 = vrot.lane.b32.xlu0 %v5387, 64
    %v5454 = vpop.permute.xlu0 %5453
    %5455 = vrot.lane.b32.xlu0 %v5388, 64
    %v5456 = vpop.permute.xlu0 %5455
    %5457 = vrot.lane.b32.xlu0 %v5389, 64
    %v5458 = vpop.permute.xlu0 %5457
    %5459 = vrot.lane.b32.xlu0 %v5390, 64
    %v5460 = vpop.permute.xlu0 %5459
    %5461 = vrot.lane.b32.xlu0 %v5391, 64
    %v5462 = vpop.permute.xlu0 %5461
    %5463 = vrot.lane.b32.xlu0 %v5392, 64
    %v5464 = vpop.permute.xlu0 %5463
    %v5465 = vrot.slane %v5450, 1
    %v5466 = vrot.slane %v5452, 1
    %v5467 = vrot.slane %v5454, 1
    %v5468 = vrot.slane %v5456, 1
    %v5469 = vrot.slane %v5458, 1
    %v5470 = vrot.slane %v5460, 1
    %v5471 = vrot.slane %v5462, 1
    %v5472 = vrot.slane %v5464, 1
    %v5481 = vtanh.pop %v5465
    %v5482 = vtanh.pop %v5466
    %v5483 = vtanh.pop %v5467
    %v5484 = vtanh.pop %v5468
    %v5485 = vtanh.pop %v5469
    %v5486 = vtanh.pop %v5470
    %v5487 = vtanh.pop %v5471
    %v5488 = vtanh.pop %v5472
    %v5489 = vmul.f32 %v5426, %v5146
    %v5490 = vmul.f32 %v5428, %v5147
    %v5491 = vmul.f32 %v5430, %v5148
    %v5492 = vmul.f32 %v5432, %v5149
    %v5493 = vmul.f32 %v5434, %v5150
    %v5494 = vmul.f32 %v5436, %v5151
    %v5495 = vmul.f32 %v5438, %v5152
    %v5496 = vmul.f32 %v5440, %v5153
    %v5497 = vmul.f32 %v5426, %v5481
    %v5498 = vmul.f32 %v5428, %v5482
    %v5499 = vmul.f32 %v5430, %v5483
    %v5500 = vmul.f32 %v5432, %v5484
    %v5501 = vmul.f32 %v5434, %v5485
    %v5502 = vmul.f32 %v5436, %v5486
    %v5503 = vmul.f32 %v5438, %v5487
    %v5504 = vmul.f32 %v5440, %v5488
    %5513 = vrot.lane.b32.xlu0 %v5497, 64
    %v5514 = vpop.permute.xlu0 %5513
    %5515 = vrot.lane.b32.xlu0 %v5498, 64
    %v5516 = vpop.permute.xlu0 %5515
    %5517 = vrot.lane.b32.xlu0 %v5499, 64
    %v5518 = vpop.permute.xlu0 %5517
    %5519 = vrot.lane.b32.xlu0 %v5500, 64
    %v5520 = vpop.permute.xlu0 %5519
    %5521 = vrot.lane.b32.xlu0 %v5501, 64
    %v5522 = vpop.permute.xlu0 %5521
    %5523 = vrot.lane.b32.xlu0 %v5502, 64
    %v5524 = vpop.permute.xlu0 %5523
    %5525 = vrot.lane.b32.xlu0 %v5503, 64
    %v5526 = vpop.permute.xlu0 %5525
    %5527 = vrot.lane.b32.xlu0 %v5504, 64
    %v5528 = vpop.permute.xlu0 %5527
    %v5537 = vadd.f32 %v5489, %v5514
    %v5538 = vadd.f32 %v5490, %v5516
    %v5539 = vadd.f32 %v5491, %v5518
    %v5540 = vadd.f32 %v5492, %v5520
    %v5541 = vadd.f32 %v5493, %v5522
    %v5542 = vadd.f32 %v5494, %v5524
    %v5543 = vadd.f32 %v5495, %v5526
    %v5544 = vadd.f32 %v5496, %v5528
    %v5545 = vtanh.pop %v5537
    %v5546 = vtanh.pop %v5538
    %v5547 = vtanh.pop %v5539
    %v5548 = vtanh.pop %v5540
    %v5549 = vtanh.pop %v5541
    %v5550 = vtanh.pop %v5542
    %v5551 = vtanh.pop %v5543
    %v5552 = vtanh.pop %v5544
    %v5561 = vrot.slane %v5426, 1
    %v5562 = vrot.slane %v5428, 1
    %v5563 = vrot.slane %v5430, 1
    %v5564 = vrot.slane %v5432, 1
    %v5565 = vrot.slane %v5434, 1
    %v5566 = vrot.slane %v5436, 1
    %v5567 = vrot.slane %v5438, 1
    %v5568 = vrot.slane %v5440, 1
    %5585 = vrot.lane.b32.xlu0 %v5545, 64
    %v5586 = vpop.permute.xlu0 %5585
    %5587 = vrot.lane.b32.xlu0 %v5546, 64
    %v5588 = vpop.permute.xlu0 %5587
    %5589 = vrot.lane.b32.xlu0 %v5547, 64
    %v5590 = vpop.permute.xlu0 %5589
    %5591 = vrot.lane.b32.xlu0 %v5548, 64
    %v5592 = vpop.permute.xlu0 %5591
    %5593 = vrot.lane.b32.xlu0 %v5549, 64
    %v5594 = vpop.permute.xlu0 %5593
    %5595 = vrot.lane.b32.xlu0 %v5550, 64
    %v5596 = vpop.permute.xlu0 %5595
    %5597 = vrot.lane.b32.xlu0 %v5551, 64
    %v5598 = vpop.permute.xlu0 %5597
    %5599 = vrot.lane.b32.xlu0 %v5552, 64
    %v5600 = vpop.permute.xlu0 %5599
    %v5609 = vmul.f32 %v5561, %v5586
    %v5610 = vmul.f32 %v5562, %v5588
    %v5611 = vmul.f32 %v5563, %v5590
    %v5612 = vmul.f32 %v5564, %v5592
    %v5613 = vmul.f32 %v5565, %v5594
    %v5614 = vmul.f32 %v5566, %v5596
    %v5615 = vmul.f32 %v5567, %v5598
    %v5616 = vmul.f32 %v5568, %v5600
    %v5617 = vpack.c.bf16 %v5609, %v5609
    %v5618 = vpack.c.bf16 %v5610, %v5610
    %v5619 = vpack.c.bf16 %v5611, %v5611
    %v5620 = vpack.c.bf16 %v5612, %v5612
    %v5621 = vpack.c.bf16 %v5613, %v5613
    %v5622 = vpack.c.bf16 %v5614, %v5614
    %v5623 = vpack.c.bf16 %v5615, %v5615
    %v5624 = vpack.c.bf16 %v5616, %v5616
    %v5633 = vunpack.c.l.b16 %v5617
    %v5634 = vunpack.c.l.b16 %v5618
    %v5635 = vunpack.c.l.b16 %v5619
    %v5636 = vunpack.c.l.b16 %v5620
    %v5637 = vunpack.c.l.b16 %v5621
    %v5638 = vunpack.c.l.b16 %v5622
    %v5639 = vunpack.c.l.b16 %v5623
    %v5640 = vunpack.c.l.b16 %v5624
    %v5641 = vrot.slane %v5634, 7
    %v5642 = vsel %vm1334, %v5641, %v5633
    %v5643 = vrot.slane %v5635, 6
    %v5644 = vsel %vm1337, %v5643, %v5642
    %v5645 = vrot.slane %v5636, 5
    %v5646 = vsel %vm1340, %v5645, %v5644
    %v5647 = vrot.slane %v5637, 4
    %v5648 = vsel %vm1343, %v5647, %v5646
    %v5649 = vrot.slane %v5638, 3
    %v5650 = vsel %vm1346, %v5649, %v5648
    %v5651 = vrot.slane %v5639, 2
    %v5652 = vsel %vm1349, %v5651, %v5650
    %v5653 = vrot.slane %v5640, 1
    %v5654 = vsel %vm1352, %v5653, %v5652
    %v5655 = vpack.c.b16 %v5654, %v5654
    %v5657 = vsel %vm331, %v5655, 0
    %5659 = vmatprep.subr.bf16.mxu0 %v316
    %5660 = vmatpush1.bf16.msra.mxu0 %v315
    %5661 = vmatprep.subr.bf16.mxu0 %v318
    %5662 = vmatpush1.bf16.msra.mxu0 %v317
    %5663 = vmatprep.subr.bf16.mxu0 %v320
    %5664 = vmatpush1.bf16.msra.mxu0 %v319
    %5665 = vmatprep.subr.bf16.mxu0 %v322
    %5666 = vmatpush1.bf16.msra.mxu0 %v321
    %5667 = vmatprep.subr.bf16.mxu0 0
    %5668 = vmatpush1.bf16.msra.mxu0 0
    %5669 = vmatprep.subr.bf16.mxu0 0
    %5670 = vmatpush1.bf16.msra.mxu0 0
    %5671 = vmatprep.subr.bf16.mxu0 0
    %5672 = vmatpush1.bf16.msra.mxu0 0
    %5673 = vmatprep.subr.bf16.mxu0 0
    %5674 = vmatpush1.bf16.msra.mxu0 0
    %5675 = vmatprep.subr.bf16.mxu0 0
    %5676 = vmatpush1.bf16.msra.mxu0 0
    %5677 = vmatprep.subr.bf16.mxu0 0
    %5678 = vmatpush1.bf16.msra.mxu0 0
    %5679 = vmatprep.subr.bf16.mxu0 0
    %5680 = vmatpush1.bf16.msra.mxu0 0
    %5681 = vmatprep.subr.bf16.mxu0 0
    %5682 = vmatpush1.bf16.msra.mxu0 0
    %5683 = vmatprep.subr.bf16.mxu0 0
    %5684 = vmatpush1.bf16.msra.mxu0 0
    %5685 = vmatprep.subr.bf16.mxu0 0
    %5686 = vmatpush1.bf16.msra.mxu0 0
    %5687 = vmatprep.subr.bf16.mxu0 0
    %5688 = vmatpush1.bf16.msra.mxu0 0
    %5689 = vmatprep.subr.bf16.mxu0 0
    %5690 = vmatpush1.bf16.msra.mxu0 0
    %5691 = vmatprep.mubr.bf16.mxu0 0
    %5692 = vmatmul.mubr.bf16.gmra.mrb[0].mxu0 %v5657
    %v5693 = vpop.f32.mrb[0].mxu0
    %v5694 = vadd.f32 0.0, %v5693
    %v5695 = vpop.f32.mrb[0].mxu0
    %v5696 = vadd.f32 0.0, %v5695
    %v5697 = vpop.f32.mrb[0].mxu0
    %v5698 = vpop.f32.mrb[0].mxu0
    %5699 = vdwg.mxu0
    %s5700 = scalar_lea.vmem [#allocation4], 21
    %v5701 = vld [vmem:[%s5700] ss:$8 sm:$0x3]
    %s5702 = scalar_lea.vmem [#allocation4], 53
    %v5703 = vld [vmem:[%s5702] ss:$8 sm:$0x3]
    %s5704 = scalar_lea.vmem [#allocation4], 85
    %v5705 = vld [vmem:[%s5704] ss:$8 sm:$0x3]
    %s5706 = scalar_lea.vmem [#allocation4], 117
    %v5707 = vld [vmem:[%s5706] ss:$8 sm:$0x3]
    %s5708 = scalar_lea.vmem [#allocation4], 149
    %v5709 = vld [vmem:[%s5708] ss:$8 sm:$0x3]
    %s5710 = scalar_lea.vmem [#allocation4], 181
    %v5711 = vld [vmem:[%s5710] ss:$8 sm:$0x3]
    %s5712 = scalar_lea.vmem [#allocation4], 213
    %v5713 = vld [vmem:[%s5712] ss:$8 sm:$0x3]
    %s5714 = scalar_lea.vmem [#allocation4], 245
    %v5715 = vld [vmem:[%s5714] ss:$8 sm:$0x3]
    %v5718 = vcombine.low %v5694, %v5696
    %v5719 = vcombine.high %v5694, %v5696
    %v5721 = vunpack.c.l.s4 1966171168
    %v5722 = vunpack.c.0.s8 %v5721
    %v5723 = vlaneseq
    %v5724 = vshrl.u32 %v5723, 7
    %v5725 = vsub.s32 %v5722, %v5724
    %v5726 = vrot.slane %v5718, %v5725
    %v5728 = vunpack.c.l.s4 1966171168
    %v5729 = vunpack.c.0.s8 %v5728
    %v5730 = vlaneseq
    %v5731 = vshrl.u32 %v5730, 7
    %v5732 = vsub.s32 %v5729, %v5731
    %v5733 = vrot.slane %v5719, %v5732
    %v5734 = vcombine.high %v5726, %v5726
    %v5735 = vcombine.high %v5733, %v5733
    %v5737 = vunpack.c.l.s4 1966171168
    %v5738 = vunpack.c.0.s8 %v5737
    %v5739 = vlaneseq
    %v5740 = vshrl.u32 %v5739, 7
    %v5741 = vsub.s32 %v5738, %v5740
    %v5742 = vrot.slane %v5726, %v5741
    %v5744 = vunpack.c.l.s4 1966171168
    %v5745 = vunpack.c.0.s8 %v5744
    %v5746 = vlaneseq
    %v5747 = vshrl.u32 %v5746, 7
    %v5748 = vsub.s32 %v5745, %v5747
    %v5749 = vrot.slane %v5733, %v5748
    %v5751 = vunpack.c.l.s4 1966171168
    %v5752 = vunpack.c.0.s8 %v5751
    %v5753 = vlaneseq
    %v5754 = vshrl.u32 %v5753, 7
    %v5755 = vsub.s32 %v5752, %v5754
    %v5756 = vrot.slane %v5734, %v5755
    %v5758 = vunpack.c.l.s4 1966171168
    %v5759 = vunpack.c.0.s8 %v5758
    %v5760 = vlaneseq
    %v5761 = vshrl.u32 %v5760, 7
    %v5762 = vsub.s32 %v5759, %v5761
    %v5763 = vrot.slane %v5735, %v5762
    %v5764 = vcombine.high %v5742, %v5742
    %v5765 = vcombine.high %v5749, %v5749
    %v5766 = vcombine.high %v5756, %v5756
    %v5767 = vcombine.high %v5763, %v5763
    %v5776 = vadd.f32 %v5701, %v5742
    %v5777 = vadd.f32 %v5703, %v5756
    %v5778 = vadd.f32 %v5705, %v5764
    %v5779 = vadd.f32 %v5707, %v5766
    %v5780 = vadd.f32 %v5709, %v5749
    %v5781 = vadd.f32 %v5711, %v5763
    %v5782 = vadd.f32 %v5713, %v5765
    %v5783 = vadd.f32 %v5715, %v5767
    %v5784 = vxor.u32 %v5776, 2147483648
    %v5785 = vxor.u32 %v5777, 2147483648
    %v5786 = vxor.u32 %v5778, 2147483648
    %v5787 = vxor.u32 %v5779, 2147483648
    %v5788 = vxor.u32 %v5780, 2147483648
    %v5789 = vxor.u32 %v5781, 2147483648
    %v5790 = vxor.u32 %v5782, 2147483648
    %v5791 = vxor.u32 %v5783, 2147483648
    %v5792 = vmul.f32 %v5784, 1.442695
    %v5793 = vpow.pop %v5792
    %v5794 = vmul.f32 %v5785, 1.442695
    %v5795 = vpow.pop %v5794
    %v5796 = vmul.f32 %v5786, 1.442695
    %v5797 = vpow.pop %v5796
    %v5798 = vmul.f32 %v5787, 1.442695
    %v5799 = vpow.pop %v5798
    %v5800 = vmul.f32 %v5788, 1.442695
    %v5801 = vpow.pop %v5800
    %v5802 = vmul.f32 %v5789, 1.442695
    %v5803 = vpow.pop %v5802
    %v5804 = vmul.f32 %v5790, 1.442695
    %v5805 = vpow.pop %v5804
    %v5806 = vmul.f32 %v5791, 1.442695
    %v5807 = vpow.pop %v5806
    %v5808 = vadd.f32 %v5793, 1.0
    %v5809 = vadd.f32 %v5795, 1.0
    %v5810 = vadd.f32 %v5797, 1.0
    %v5811 = vadd.f32 %v5799, 1.0
    %v5812 = vadd.f32 %v5801, 1.0
    %v5813 = vadd.f32 %v5803, 1.0
    %v5814 = vadd.f32 %v5805, 1.0
    %v5815 = vadd.f32 %v5807, 1.0
    %v5816 = vrcp.pop %v5808
    %v5817 = vmul.f32 1.0, %v5816
    %v5818 = vrcp.pop %v5809
    %v5819 = vmul.f32 1.0, %v5818
    %v5820 = vrcp.pop %v5810
    %v5821 = vmul.f32 1.0, %v5820
    %v5822 = vrcp.pop %v5811
    %v5823 = vmul.f32 1.0, %v5822
    %v5824 = vrcp.pop %v5812
    %v5825 = vmul.f32 1.0, %v5824
    %v5826 = vrcp.pop %v5813
    %v5827 = vmul.f32 1.0, %v5826
    %v5828 = vrcp.pop %v5814
    %v5829 = vmul.f32 1.0, %v5828
    %v5830 = vrcp.pop %v5815
    %v5831 = vmul.f32 1.0, %v5830
    %5840 = vrot.lane.b32.xlu0 %v5776, 64
    %v5841 = vpop.permute.xlu0 %5840
    %5842 = vrot.lane.b32.xlu0 %v5777, 64
    %v5843 = vpop.permute.xlu0 %5842
    %5844 = vrot.lane.b32.xlu0 %v5778, 64
    %v5845 = vpop.permute.xlu0 %5844
    %5846 = vrot.lane.b32.xlu0 %v5779, 64
    %v5847 = vpop.permute.xlu0 %5846
    %5848 = vrot.lane.b32.xlu0 %v5780, 64
    %v5849 = vpop.permute.xlu0 %5848
    %5850 = vrot.lane.b32.xlu0 %v5781, 64
    %v5851 = vpop.permute.xlu0 %5850
    %5852 = vrot.lane.b32.xlu0 %v5782, 64
    %v5853 = vpop.permute.xlu0 %5852
    %5854 = vrot.lane.b32.xlu0 %v5783, 64
    %v5855 = vpop.permute.xlu0 %5854
    %v5856 = vrot.slane %v5841, 1
    %v5857 = vrot.slane %v5843, 1
    %v5858 = vrot.slane %v5845, 1
    %v5859 = vrot.slane %v5847, 1
    %v5860 = vrot.slane %v5849, 1
    %v5861 = vrot.slane %v5851, 1
    %v5862 = vrot.slane %v5853, 1
    %v5863 = vrot.slane %v5855, 1
    %v5872 = vtanh.pop %v5856
    %v5873 = vtanh.pop %v5857
    %v5874 = vtanh.pop %v5858
    %v5875 = vtanh.pop %v5859
    %v5876 = vtanh.pop %v5860
    %v5877 = vtanh.pop %v5861
    %v5878 = vtanh.pop %v5862
    %v5879 = vtanh.pop %v5863
    %v5880 = vmul.f32 %v5817, %v5537
    %v5881 = vmul.f32 %v5819, %v5538
    %v5882 = vmul.f32 %v5821, %v5539
    %v5883 = vmul.f32 %v5823, %v5540
    %v5884 = vmul.f32 %v5825, %v5541
    %v5885 = vmul.f32 %v5827, %v5542
    %v5886 = vmul.f32 %v5829, %v5543
    %v5887 = vmul.f32 %v5831, %v5544
    %v5888 = vmul.f32 %v5817, %v5872
    %v5889 = vmul.f32 %v5819, %v5873
    %v5890 = vmul.f32 %v5821, %v5874
    %v5891 = vmul.f32 %v5823, %v5875
    %v5892 = vmul.f32 %v5825, %v5876
    %v5893 = vmul.f32 %v5827, %v5877
    %v5894 = vmul.f32 %v5829, %v5878
    %v5895 = vmul.f32 %v5831, %v5879
    %5904 = vrot.lane.b32.xlu0 %v5888, 64
    %v5905 = vpop.permute.xlu0 %5904
    %5906 = vrot.lane.b32.xlu0 %v5889, 64
    %v5907 = vpop.permute.xlu0 %5906
    %5908 = vrot.lane.b32.xlu0 %v5890, 64
    %v5909 = vpop.permute.xlu0 %5908
    %5910 = vrot.lane.b32.xlu0 %v5891, 64
    %v5911 = vpop.permute.xlu0 %5910
    %5912 = vrot.lane.b32.xlu0 %v5892, 64
    %v5913 = vpop.permute.xlu0 %5912
    %5914 = vrot.lane.b32.xlu0 %v5893, 64
    %v5915 = vpop.permute.xlu0 %5914
    %5916 = vrot.lane.b32.xlu0 %v5894, 64
    %v5917 = vpop.permute.xlu0 %5916
    %5918 = vrot.lane.b32.xlu0 %v5895, 64
    %v5919 = vpop.permute.xlu0 %5918
    %v5928 = vadd.f32 %v5880, %v5905
    %v5929 = vadd.f32 %v5881, %v5907
    %v5930 = vadd.f32 %v5882, %v5909
    %v5931 = vadd.f32 %v5883, %v5911
    %v5932 = vadd.f32 %v5884, %v5913
    %v5933 = vadd.f32 %v5885, %v5915
    %v5934 = vadd.f32 %v5886, %v5917
    %v5935 = vadd.f32 %v5887, %v5919
    %v5936 = vtanh.pop %v5928
    %v5937 = vtanh.pop %v5929
    %v5938 = vtanh.pop %v5930
    %v5939 = vtanh.pop %v5931
    %v5940 = vtanh.pop %v5932
    %v5941 = vtanh.pop %v5933
    %v5942 = vtanh.pop %v5934
    %v5943 = vtanh.pop %v5935
    %v5952 = vrot.slane %v5817, 1
    %v5953 = vrot.slane %v5819, 1
    %v5954 = vrot.slane %v5821, 1
    %v5955 = vrot.slane %v5823, 1
    %v5956 = vrot.slane %v5825, 1
    %v5957 = vrot.slane %v5827, 1
    %v5958 = vrot.slane %v5829, 1
    %v5959 = vrot.slane %v5831, 1
    %5976 = vrot.lane.b32.xlu0 %v5936, 64
    %v5977 = vpop.permute.xlu0 %5976
    %5978 = vrot.lane.b32.xlu0 %v5937, 64
    %v5979 = vpop.permute.xlu0 %5978
    %5980 = vrot.lane.b32.xlu0 %v5938, 64
    %v5981 = vpop.permute.xlu0 %5980
    %5982 = vrot.lane.b32.xlu0 %v5939, 64
    %v5983 = vpop.permute.xlu0 %5982
    %5984 = vrot.lane.b32.xlu0 %v5940, 64
    %v5985 = vpop.permute.xlu0 %5984
    %5986 = vrot.lane.b32.xlu0 %v5941, 64
    %v5987 = vpop.permute.xlu0 %5986
    %5988 = vrot.lane.b32.xlu0 %v5942, 64
    %v5989 = vpop.permute.xlu0 %5988
    %5990 = vrot.lane.b32.xlu0 %v5943, 64
    %v5991 = vpop.permute.xlu0 %5990
    %v6000 = vmul.f32 %v5952, %v5977
    %v6001 = vmul.f32 %v5953, %v5979
    %v6002 = vmul.f32 %v5954, %v5981
    %v6003 = vmul.f32 %v5955, %v5983
    %v6004 = vmul.f32 %v5956, %v5985
    %v6005 = vmul.f32 %v5957, %v5987
    %v6006 = vmul.f32 %v5958, %v5989
    %v6007 = vmul.f32 %v5959, %v5991
    %v6008 = vpack.c.bf16 %v6000, %v6000
    %v6009 = vpack.c.bf16 %v6001, %v6001
    %v6010 = vpack.c.bf16 %v6002, %v6002
    %v6011 = vpack.c.bf16 %v6003, %v6003
    %v6012 = vpack.c.bf16 %v6004, %v6004
    %v6013 = vpack.c.bf16 %v6005, %v6005
    %v6014 = vpack.c.bf16 %v6006, %v6006
    %v6015 = vpack.c.bf16 %v6007, %v6007
    %v6024 = vunpack.c.l.b16 %v6008
    %v6025 = vunpack.c.l.b16 %v6009
    %v6026 = vunpack.c.l.b16 %v6010
    %v6027 = vunpack.c.l.b16 %v6011
    %v6028 = vunpack.c.l.b16 %v6012
    %v6029 = vunpack.c.l.b16 %v6013
    %v6030 = vunpack.c.l.b16 %v6014
    %v6031 = vunpack.c.l.b16 %v6015
    %v6032 = vrot.slane %v6025, 7
    %v6033 = vsel %vm1334, %v6032, %v6024
    %v6034 = vrot.slane %v6026, 6
    %v6035 = vsel %vm1337, %v6034, %v6033
    %v6036 = vrot.slane %v6027, 5
    %v6037 = vsel %vm1340, %v6036, %v6035
    %v6038 = vrot.slane %v6028, 4
    %v6039 = vsel %vm1343, %v6038, %v6037
    %v6040 = vrot.slane %v6029, 3
    %v6041 = vsel %vm1346, %v6040, %v6039
    %v6042 = vrot.slane %v6030, 2
    %v6043 = vsel %vm1349, %v6042, %v6041
    %v6044 = vrot.slane %v6031, 1
    %v6045 = vsel %vm1352, %v6044, %v6043
    %v6046 = vpack.c.b16 %v6045, %v6045
    %v6048 = vsel %vm331, %v6046, 0
    %6050 = vmatprep.subr.bf16.mxu0 %v316
    %6051 = vmatpush1.bf16.msra.mxu0 %v315
    %6052 = vmatprep.subr.bf16.mxu0 %v318
    %6053 = vmatpush1.bf16.msra.mxu0 %v317
    %6054 = vmatprep.subr.bf16.mxu0 %v320
    %6055 = vmatpush1.bf16.msra.mxu0 %v319
    %6056 = vmatprep.subr.bf16.mxu0 %v322
    %6057 = vmatpush1.bf16.msra.mxu0 %v321
    %6058 = vmatprep.subr.bf16.mxu0 0
    %6059 = vmatpush1.bf16.msra.mxu0 0
    %6060 = vmatprep.subr.bf16.mxu0 0
    %6061 = vmatpush1.bf16.msra.mxu0 0
    %6062 = vmatprep.subr.bf16.mxu0 0
    %6063 = vmatpush1.bf16.msra.mxu0 0
    %6064 = vmatprep.subr.bf16.mxu0 0
    %6065 = vmatpush1.bf16.msra.mxu0 0
    %6066 = vmatprep.subr.bf16.mxu0 0
    %6067 = vmatpush1.bf16.msra.mxu0 0
    %6068 = vmatprep.subr.bf16.mxu0 0
    %6069 = vmatpush1.bf16.msra.mxu0 0
    %6070 = vmatprep.subr.bf16.mxu0 0
    %6071 = vmatpush1.bf16.msra.mxu0 0
    %6072 = vmatprep.subr.bf16.mxu0 0
    %6073 = vmatpush1.bf16.msra.mxu0 0
    %6074 = vmatprep.subr.bf16.mxu0 0
    %6075 = vmatpush1.bf16.msra.mxu0 0
    %6076 = vmatprep.subr.bf16.mxu0 0
    %6077 = vmatpush1.bf16.msra.mxu0 0
    %6078 = vmatprep.subr.bf16.mxu0 0
    %6079 = vmatpush1.bf16.msra.mxu0 0
    %6080 = vmatprep.subr.bf16.mxu0 0
    %6081 = vmatpush1.bf16.msra.mxu0 0
    %6082 = vmatprep.mubr.bf16.mxu0 0
    %6083 = vmatmul.mubr.bf16.gmra.mrb[0].mxu0 %v6048
    %v6084 = vpop.f32.mrb[0].mxu0
    %v6085 = vadd.f32 0.0, %v6084
    %v6086 = vpop.f32.mrb[0].mxu0
    %v6087 = vadd.f32 0.0, %v6086
    %v6088 = vpop.f32.mrb[0].mxu0
    %v6089 = vpop.f32.mrb[0].mxu0
    %6090 = vdwg.mxu0
    %s6091 = scalar_lea.vmem [#allocation4], 22
    %v6092 = vld [vmem:[%s6091] ss:$8 sm:$0x3]
    %s6093 = scalar_lea.vmem [#allocation4], 54
    %v6094 = vld [vmem:[%s6093] ss:$8 sm:$0x3]
    %s6095 = scalar_lea.vmem [#allocation4], 86
    %v6096 = vld [vmem:[%s6095] ss:$8 sm:$0x3]
    %s6097 = scalar_lea.vmem [#allocation4], 118
    %v6098 = vld [vmem:[%s6097] ss:$8 sm:$0x3]
    %s6099 = scalar_lea.vmem [#allocation4], 150
    %v6100 = vld [vmem:[%s6099] ss:$8 sm:$0x3]
    %s6101 = scalar_lea.vmem [#allocation4], 182
    %v6102 = vld [vmem:[%s6101] ss:$8 sm:$0x3]
    %s6103 = scalar_lea.vmem [#allocation4], 214
    %v6104 = vld [vmem:[%s6103] ss:$8 sm:$0x3]
    %s6105 = scalar_lea.vmem [#allocation4], 246
    %v6106 = vld [vmem:[%s6105] ss:$8 sm:$0x3]
    %v6109 = vcombine.low %v6085, %v6087
    %v6110 = vcombine.high %v6085, %v6087
    %v6112 = vunpack.c.l.s4 1966171168
    %v6113 = vunpack.c.0.s8 %v6112
    %v6114 = vlaneseq
    %v6115 = vshrl.u32 %v6114, 7
    %v6116 = vsub.s32 %v6113, %v6115
    %v6117 = vrot.slane %v6109, %v6116
    %v6119 = vunpack.c.l.s4 1966171168
    %v6120 = vunpack.c.0.s8 %v6119
    %v6121 = vlaneseq
    %v6122 = vshrl.u32 %v6121, 7
    %v6123 = vsub.s32 %v6120, %v6122
    %v6124 = vrot.slane %v6110, %v6123
    %v6125 = vcombine.high %v6117, %v6117
    %v6126 = vcombine.high %v6124, %v6124
    %v6128 = vunpack.c.l.s4 1966171168
    %v6129 = vunpack.c.0.s8 %v6128
    %v6130 = vlaneseq
    %v6131 = vshrl.u32 %v6130, 7
    %v6132 = vsub.s32 %v6129, %v6131
    %v6133 = vrot.slane %v6117, %v6132
    %v6135 = vunpack.c.l.s4 1966171168
    %v6136 = vunpack.c.0.s8 %v6135
    %v6137 = vlaneseq
    %v6138 = vshrl.u32 %v6137, 7
    %v6139 = vsub.s32 %v6136, %v6138
    %v6140 = vrot.slane %v6124, %v6139
    %v6142 = vunpack.c.l.s4 1966171168
    %v6143 = vunpack.c.0.s8 %v6142
    %v6144 = vlaneseq
    %v6145 = vshrl.u32 %v6144, 7
    %v6146 = vsub.s32 %v6143, %v6145
    %v6147 = vrot.slane %v6125, %v6146
    %v6149 = vunpack.c.l.s4 1966171168
    %v6150 = vunpack.c.0.s8 %v6149
    %v6151 = vlaneseq
    %v6152 = vshrl.u32 %v6151, 7
    %v6153 = vsub.s32 %v6150, %v6152
    %v6154 = vrot.slane %v6126, %v6153
    %v6155 = vcombine.high %v6133, %v6133
    %v6156 = vcombine.high %v6140, %v6140
    %v6157 = vcombine.high %v6147, %v6147
    %v6158 = vcombine.high %v6154, %v6154
    %v6167 = vadd.f32 %v6092, %v6133
    %v6168 = vadd.f32 %v6094, %v6147
    %v6169 = vadd.f32 %v6096, %v6155
    %v6170 = vadd.f32 %v6098, %v6157
    %v6171 = vadd.f32 %v6100, %v6140
    %v6172 = vadd.f32 %v6102, %v6154
    %v6173 = vadd.f32 %v6104, %v6156
    %v6174 = vadd.f32 %v6106, %v6158
    %v6175 = vxor.u32 %v6167, 2147483648
    %v6176 = vxor.u32 %v6168, 2147483648
    %v6177 = vxor.u32 %v6169, 2147483648
    %v6178 = vxor.u32 %v6170, 2147483648
    %v6179 = vxor.u32 %v6171, 2147483648
    %v6180 = vxor.u32 %v6172, 2147483648
    %v6181 = vxor.u32 %v6173, 2147483648
    %v6182 = vxor.u32 %v6174, 2147483648
    %v6183 = vmul.f32 %v6175, 1.442695
    %v6184 = vpow.pop %v6183
    %v6185 = vmul.f32 %v6176, 1.442695
    %v6186 = vpow.pop %v6185
    %v6187 = vmul.f32 %v6177, 1.442695
    %v6188 = vpow.pop %v6187
    %v6189 = vmul.f32 %v6178, 1.442695
    %v6190 = vpow.pop %v6189
    %v6191 = vmul.f32 %v6179, 1.442695
    %v6192 = vpow.pop %v6191
    %v6193 = vmul.f32 %v6180, 1.442695
    %v6194 = vpow.pop %v6193
    %v6195 = vmul.f32 %v6181, 1.442695
    %v6196 = vpow.pop %v6195
    %v6197 = vmul.f32 %v6182, 1.442695
    %v6198 = vpow.pop %v6197
    %v6199 = vadd.f32 %v6184, 1.0
    %v6200 = vadd.f32 %v6186, 1.0
    %v6201 = vadd.f32 %v6188, 1.0
    %v6202 = vadd.f32 %v6190, 1.0
    %v6203 = vadd.f32 %v6192, 1.0
    %v6204 = vadd.f32 %v6194, 1.0
    %v6205 = vadd.f32 %v6196, 1.0
    %v6206 = vadd.f32 %v6198, 1.0
    %v6207 = vrcp.pop %v6199
    %v6208 = vmul.f32 1.0, %v6207
    %v6209 = vrcp.pop %v6200
    %v6210 = vmul.f32 1.0, %v6209
    %v6211 = vrcp.pop %v6201
    %v6212 = vmul.f32 1.0, %v6211
    %v6213 = vrcp.pop %v6202
    %v6214 = vmul.f32 1.0, %v6213
    %v6215 = vrcp.pop %v6203
    %v6216 = vmul.f32 1.0, %v6215
    %v6217 = vrcp.pop %v6204
    %v6218 = vmul.f32 1.0, %v6217
    %v6219 = vrcp.pop %v6205
    %v6220 = vmul.f32 1.0, %v6219
    %v6221 = vrcp.pop %v6206
    %v6222 = vmul.f32 1.0, %v6221
    %6231 = vrot.lane.b32.xlu0 %v6167, 64
    %v6232 = vpop.permute.xlu0 %6231
    %6233 = vrot.lane.b32.xlu0 %v6168, 64
    %v6234 = vpop.permute.xlu0 %6233
    %6235 = vrot.lane.b32.xlu0 %v6169, 64
    %v6236 = vpop.permute.xlu0 %6235
    %6237 = vrot.lane.b32.xlu0 %v6170, 64
    %v6238 = vpop.permute.xlu0 %6237
    %6239 = vrot.lane.b32.xlu0 %v6171, 64
    %v6240 = vpop.permute.xlu0 %6239
    %6241 = vrot.lane.b32.xlu0 %v6172, 64
    %v6242 = vpop.permute.xlu0 %6241
    %6243 = vrot.lane.b32.xlu0 %v6173, 64
    %v6244 = vpop.permute.xlu0 %6243
    %6245 = vrot.lane.b32.xlu0 %v6174, 64
    %v6246 = vpop.permute.xlu0 %6245
    %v6247 = vrot.slane %v6232, 1
    %v6248 = vrot.slane %v6234, 1
    %v6249 = vrot.slane %v6236, 1
    %v6250 = vrot.slane %v6238, 1
    %v6251 = vrot.slane %v6240, 1
    %v6252 = vrot.slane %v6242, 1
    %v6253 = vrot.slane %v6244, 1
    %v6254 = vrot.slane %v6246, 1
    %v6263 = vtanh.pop %v6247
    %v6264 = vtanh.pop %v6248
    %v6265 = vtanh.pop %v6249
    %v6266 = vtanh.pop %v6250
    %v6267 = vtanh.pop %v6251
    %v6268 = vtanh.pop %v6252
    %v6269 = vtanh.pop %v6253
    %v6270 = vtanh.pop %v6254
    %v6271 = vmul.f32 %v6208, %v5928
    %v6272 = vmul.f32 %v6210, %v5929
    %v6273 = vmul.f32 %v6212, %v5930
    %v6274 = vmul.f32 %v6214, %v5931
    %v6275 = vmul.f32 %v6216, %v5932
    %v6276 = vmul.f32 %v6218, %v5933
    %v6277 = vmul.f32 %v6220, %v5934
    %v6278 = vmul.f32 %v6222, %v5935
    %v6279 = vmul.f32 %v6208, %v6263
    %v6280 = vmul.f32 %v6210, %v6264
    %v6281 = vmul.f32 %v6212, %v6265
    %v6282 = vmul.f32 %v6214, %v6266
    %v6283 = vmul.f32 %v6216, %v6267
    %v6284 = vmul.f32 %v6218, %v6268
    %v6285 = vmul.f32 %v6220, %v6269
    %v6286 = vmul.f32 %v6222, %v6270
    %6295 = vrot.lane.b32.xlu0 %v6279, 64
    %v6296 = vpop.permute.xlu0 %6295
    %6297 = vrot.lane.b32.xlu0 %v6280, 64
    %v6298 = vpop.permute.xlu0 %6297
    %6299 = vrot.lane.b32.xlu0 %v6281, 64
    %v6300 = vpop.permute.xlu0 %6299
    %6301 = vrot.lane.b32.xlu0 %v6282, 64
    %v6302 = vpop.permute.xlu0 %6301
    %6303 = vrot.lane.b32.xlu0 %v6283, 64
    %v6304 = vpop.permute.xlu0 %6303
    %6305 = vrot.lane.b32.xlu0 %v6284, 64
    %v6306 = vpop.permute.xlu0 %6305
    %6307 = vrot.lane.b32.xlu0 %v6285, 64
    %v6308 = vpop.permute.xlu0 %6307
    %6309 = vrot.lane.b32.xlu0 %v6286, 64
    %v6310 = vpop.permute.xlu0 %6309
    %v6319 = vadd.f32 %v6271, %v6296
    %v6320 = vadd.f32 %v6272, %v6298
    %v6321 = vadd.f32 %v6273, %v6300
    %v6322 = vadd.f32 %v6274, %v6302
    %v6323 = vadd.f32 %v6275, %v6304
    %v6324 = vadd.f32 %v6276, %v6306
    %v6325 = vadd.f32 %v6277, %v6308
    %v6326 = vadd.f32 %v6278, %v6310
    %v6327 = vtanh.pop %v6319
    %v6328 = vtanh.pop %v6320
    %v6329 = vtanh.pop %v6321
    %v6330 = vtanh.pop %v6322
    %v6331 = vtanh.pop %v6323
    %v6332 = vtanh.pop %v6324
    %v6333 = vtanh.pop %v6325
    %v6334 = vtanh.pop %v6326
    %v6343 = vrot.slane %v6208, 1
    %v6344 = vrot.slane %v6210, 1
    %v6345 = vrot.slane %v6212, 1
    %v6346 = vrot.slane %v6214, 1
    %v6347 = vrot.slane %v6216, 1
    %v6348 = vrot.slane %v6218, 1
    %v6349 = vrot.slane %v6220, 1
    %v6350 = vrot.slane %v6222, 1
    %6367 = vrot.lane.b32.xlu0 %v6327, 64
    %v6368 = vpop.permute.xlu0 %6367
    %6369 = vrot.lane.b32.xlu0 %v6328, 64
    %v6370 = vpop.permute.xlu0 %6369
    %6371 = vrot.lane.b32.xlu0 %v6329, 64
    %v6372 = vpop.permute.xlu0 %6371
    %6373 = vrot.lane.b32.xlu0 %v6330, 64
    %v6374 = vpop.permute.xlu0 %6373
    %6375 = vrot.lane.b32.xlu0 %v6331, 64
    %v6376 = vpop.permute.xlu0 %6375
    %6377 = vrot.lane.b32.xlu0 %v6332, 64
    %v6378 = vpop.permute.xlu0 %6377
    %6379 = vrot.lane.b32.xlu0 %v6333, 64
    %v6380 = vpop.permute.xlu0 %6379
    %6381 = vrot.lane.b32.xlu0 %v6334, 64
    %v6382 = vpop.permute.xlu0 %6381
    %v6391 = vmul.f32 %v6343, %v6368
    %v6392 = vmul.f32 %v6344, %v6370
    %v6393 = vmul.f32 %v6345, %v6372
    %v6394 = vmul.f32 %v6346, %v6374
    %v6395 = vmul.f32 %v6347, %v6376
    %v6396 = vmul.f32 %v6348, %v6378
    %v6397 = vmul.f32 %v6349, %v6380
    %v6398 = vmul.f32 %v6350, %v6382
    %v6399 = vpack.c.bf16 %v6391, %v6391
    %v6400 = vpack.c.bf16 %v6392, %v6392
    %v6401 = vpack.c.bf16 %v6393, %v6393
    %v6402 = vpack.c.bf16 %v6394, %v6394
    %v6403 = vpack.c.bf16 %v6395, %v6395
    %v6404 = vpack.c.bf16 %v6396, %v6396
    %v6405 = vpack.c.bf16 %v6397, %v6397
    %v6406 = vpack.c.bf16 %v6398, %v6398
    %v6415 = vunpack.c.l.b16 %v6399
    %v6416 = vunpack.c.l.b16 %v6400
    %v6417 = vunpack.c.l.b16 %v6401
    %v6418 = vunpack.c.l.b16 %v6402
    %v6419 = vunpack.c.l.b16 %v6403
    %v6420 = vunpack.c.l.b16 %v6404
    %v6421 = vunpack.c.l.b16 %v6405
    %v6422 = vunpack.c.l.b16 %v6406
    %v6423 = vrot.slane %v6416, 7
    %v6424 = vsel %vm1334, %v6423, %v6415
    %v6425 = vrot.slane %v6417, 6
    %v6426 = vsel %vm1337, %v6425, %v6424
    %v6427 = vrot.slane %v6418, 5
    %v6428 = vsel %vm1340, %v6427, %v6426
    %v6429 = vrot.slane %v6419, 4
    %v6430 = vsel %vm1343, %v6429, %v6428
    %v6431 = vrot.slane %v6420, 3
    %v6432 = vsel %vm1346, %v6431, %v6430
    %v6433 = vrot.slane %v6421, 2
    %v6434 = vsel %vm1349, %v6433, %v6432
    %v6435 = vrot.slane %v6422, 1
    %v6436 = vsel %vm1352, %v6435, %v6434
    %v6437 = vpack.c.b16 %v6436, %v6436
    %v6439 = vsel %vm331, %v6437, 0
    %6441 = vmatprep.subr.bf16.mxu0 %v316
    %6442 = vmatpush1.bf16.msra.mxu0 %v315
    %6443 = vmatprep.subr.bf16.mxu0 %v318
    %6444 = vmatpush1.bf16.msra.mxu0 %v317
    %6445 = vmatprep.subr.bf16.mxu0 %v320
    %6446 = vmatpush1.bf16.msra.mxu0 %v319
    %6447 = vmatprep.subr.bf16.mxu0 %v322
    %6448 = vmatpush1.bf16.msra.mxu0 %v321
    %6449 = vmatprep.subr.bf16.mxu0 0
    %6450 = vmatpush1.bf16.msra.mxu0 0
    %6451 = vmatprep.subr.bf16.mxu0 0
    %6452 = vmatpush1.bf16.msra.mxu0 0
    %6453 = vmatprep.subr.bf16.mxu0 0
    %6454 = vmatpush1.bf16.msra.mxu0 0
    %6455 = vmatprep.subr.bf16.mxu0 0
    %6456 = vmatpush1.bf16.msra.mxu0 0
    %6457 = vmatprep.subr.bf16.mxu0 0
    %6458 = vmatpush1.bf16.msra.mxu0 0
    %6459 = vmatprep.subr.bf16.mxu0 0
    %6460 = vmatpush1.bf16.msra.mxu0 0
    %6461 = vmatprep.subr.bf16.mxu0 0
    %6462 = vmatpush1.bf16.msra.mxu0 0
    %6463 = vmatprep.subr.bf16.mxu0 0
    %6464 = vmatpush1.bf16.msra.mxu0 0
    %6465 = vmatprep.subr.bf16.mxu0 0
    %6466 = vmatpush1.bf16.msra.mxu0 0
    %6467 = vmatprep.subr.bf16.mxu0 0
    %6468 = vmatpush1.bf16.msra.mxu0 0
    %6469 = vmatprep.subr.bf16.mxu0 0
    %6470 = vmatpush1.bf16.msra.mxu0 0
    %6471 = vmatprep.subr.bf16.mxu0 0
    %6472 = vmatpush1.bf16.msra.mxu0 0
    %6473 = vmatprep.mubr.bf16.mxu0 0
    %6474 = vmatmul.mubr.bf16.gmra.mrb[0].mxu0 %v6439
    %v6475 = vpop.f32.mrb[0].mxu0
    %v6476 = vadd.f32 0.0, %v6475
    %v6477 = vpop.f32.mrb[0].mxu0
    %v6478 = vadd.f32 0.0, %v6477
    %v6479 = vpop.f32.mrb[0].mxu0
    %v6480 = vpop.f32.mrb[0].mxu0
    %6481 = vdwg.mxu0
    %s6482 = scalar_lea.vmem [#allocation4], 23
    %v6483 = vld [vmem:[%s6482] ss:$8 sm:$0x3]
    %s6484 = scalar_lea.vmem [#allocation4], 55
    %v6485 = vld [vmem:[%s6484] ss:$8 sm:$0x3]
    %s6486 = scalar_lea.vmem [#allocation4], 87
    %v6487 = vld [vmem:[%s6486] ss:$8 sm:$0x3]
    %s6488 = scalar_lea.vmem [#allocation4], 119
    %v6489 = vld [vmem:[%s6488] ss:$8 sm:$0x3]
    %s6490 = scalar_lea.vmem [#allocation4], 151
    %v6491 = vld [vmem:[%s6490] ss:$8 sm:$0x3]
    %s6492 = scalar_lea.vmem [#allocation4], 183
    %v6493 = vld [vmem:[%s6492] ss:$8 sm:$0x3]
    %s6494 = scalar_lea.vmem [#allocation4], 215
    %v6495 = vld [vmem:[%s6494] ss:$8 sm:$0x3]
    %s6496 = scalar_lea.vmem [#allocation4], 247
    %v6497 = vld [vmem:[%s6496] ss:$8 sm:$0x3]
    %v6500 = vcombine.low %v6476, %v6478
    %v6501 = vcombine.high %v6476, %v6478
    %v6503 = vunpack.c.l.s4 1966171168
    %v6504 = vunpack.c.0.s8 %v6503
    %v6505 = vlaneseq
    %v6506 = vshrl.u32 %v6505, 7
    %v6507 = vsub.s32 %v6504, %v6506
    %v6508 = vrot.slane %v6500, %v6507
    %v6510 = vunpack.c.l.s4 1966171168
    %v6511 = vunpack.c.0.s8 %v6510
    %v6512 = vlaneseq
    %v6513 = vshrl.u32 %v6512, 7
    %v6514 = vsub.s32 %v6511, %v6513
    %v6515 = vrot.slane %v6501, %v6514
    %v6516 = vcombine.high %v6508, %v6508
    %v6517 = vcombine.high %v6515, %v6515
    %v6519 = vunpack.c.l.s4 1966171168
    %v6520 = vunpack.c.0.s8 %v6519
    %v6521 = vlaneseq
    %v6522 = vshrl.u32 %v6521, 7
    %v6523 = vsub.s32 %v6520, %v6522
    %v6524 = vrot.slane %v6508, %v6523
    %v6526 = vunpack.c.l.s4 1966171168
    %v6527 = vunpack.c.0.s8 %v6526
    %v6528 = vlaneseq
    %v6529 = vshrl.u32 %v6528, 7
    %v6530 = vsub.s32 %v6527, %v6529
    %v6531 = vrot.slane %v6515, %v6530
    %v6533 = vunpack.c.l.s4 1966171168
    %v6534 = vunpack.c.0.s8 %v6533
    %v6535 = vlaneseq
    %v6536 = vshrl.u32 %v6535, 7
    %v6537 = vsub.s32 %v6534, %v6536
    %v6538 = vrot.slane %v6516, %v6537
    %v6540 = vunpack.c.l.s4 1966171168
    %v6541 = vunpack.c.0.s8 %v6540
    %v6542 = vlaneseq
    %v6543 = vshrl.u32 %v6542, 7
    %v6544 = vsub.s32 %v6541, %v6543
    %v6545 = vrot.slane %v6517, %v6544
    %v6546 = vcombine.high %v6524, %v6524
    %v6547 = vcombine.high %v6531, %v6531
    %v6548 = vcombine.high %v6538, %v6538
    %v6549 = vcombine.high %v6545, %v6545
    %v6558 = vadd.f32 %v6483, %v6524
    %v6559 = vadd.f32 %v6485, %v6538
    %v6560 = vadd.f32 %v6487, %v6546
    %v6561 = vadd.f32 %v6489, %v6548
    %v6562 = vadd.f32 %v6491, %v6531
    %v6563 = vadd.f32 %v6493, %v6545
    %v6564 = vadd.f32 %v6495, %v6547
    %v6565 = vadd.f32 %v6497, %v6549
    %v6566 = vxor.u32 %v6558, 2147483648
    %v6567 = vxor.u32 %v6559, 2147483648
    %v6568 = vxor.u32 %v6560, 2147483648
    %v6569 = vxor.u32 %v6561, 2147483648
    %v6570 = vxor.u32 %v6562, 2147483648
    %v6571 = vxor.u32 %v6563, 2147483648
    %v6572 = vxor.u32 %v6564, 2147483648
    %v6573 = vxor.u32 %v6565, 2147483648
    %v6574 = vmul.f32 %v6566, 1.442695
    %v6575 = vpow.pop %v6574
    %v6576 = vmul.f32 %v6567, 1.442695
    %v6577 = vpow.pop %v6576
    %v6578 = vmul.f32 %v6568, 1.442695
    %v6579 = vpow.pop %v6578
    %v6580 = vmul.f32 %v6569, 1.442695
    %v6581 = vpow.pop %v6580
    %v6582 = vmul.f32 %v6570, 1.442695
    %v6583 = vpow.pop %v6582
    %v6584 = vmul.f32 %v6571, 1.442695
    %v6585 = vpow.pop %v6584
    %v6586 = vmul.f32 %v6572, 1.442695
    %v6587 = vpow.pop %v6586
    %v6588 = vmul.f32 %v6573, 1.442695
    %v6589 = vpow.pop %v6588
    %v6590 = vadd.f32 %v6575, 1.0
    %v6591 = vadd.f32 %v6577, 1.0
    %v6592 = vadd.f32 %v6579, 1.0
    %v6593 = vadd.f32 %v6581, 1.0
    %v6594 = vadd.f32 %v6583, 1.0
    %v6595 = vadd.f32 %v6585, 1.0
    %v6596 = vadd.f32 %v6587, 1.0
    %v6597 = vadd.f32 %v6589, 1.0
    %v6598 = vrcp.pop %v6590
    %v6599 = vmul.f32 1.0, %v6598
    %v6600 = vrcp.pop %v6591
    %v6601 = vmul.f32 1.0, %v6600
    %v6602 = vrcp.pop %v6592
    %v6603 = vmul.f32 1.0, %v6602
    %v6604 = vrcp.pop %v6593
    %v6605 = vmul.f32 1.0, %v6604
    %v6606 = vrcp.pop %v6594
    %v6607 = vmul.f32 1.0, %v6606
    %v6608 = vrcp.pop %v6595
    %v6609 = vmul.f32 1.0, %v6608
    %v6610 = vrcp.pop %v6596
    %v6611 = vmul.f32 1.0, %v6610
    %v6612 = vrcp.pop %v6597
    %v6613 = vmul.f32 1.0, %v6612
    %6622 = vrot.lane.b32.xlu0 %v6558, 64
    %v6623 = vpop.permute.xlu0 %6622
    %6624 = vrot.lane.b32.xlu0 %v6559, 64
    %v6625 = vpop.permute.xlu0 %6624
    %6626 = vrot.lane.b32.xlu0 %v6560, 64
    %v6627 = vpop.permute.xlu0 %6626
    %6628 = vrot.lane.b32.xlu0 %v6561, 64
    %v6629 = vpop.permute.xlu0 %6628
    %6630 = vrot.lane.b32.xlu0 %v6562, 64
    %v6631 = vpop.permute.xlu0 %6630
    %6632 = vrot.lane.b32.xlu0 %v6563, 64
    %v6633 = vpop.permute.xlu0 %6632
    %6634 = vrot.lane.b32.xlu0 %v6564, 64
    %v6635 = vpop.permute.xlu0 %6634
    %6636 = vrot.lane.b32.xlu0 %v6565, 64
    %v6637 = vpop.permute.xlu0 %6636
    %v6638 = vrot.slane %v6623, 1
    %v6639 = vrot.slane %v6625, 1
    %v6640 = vrot.slane %v6627, 1
    %v6641 = vrot.slane %v6629, 1
    %v6642 = vrot.slane %v6631, 1
    %v6643 = vrot.slane %v6633, 1
    %v6644 = vrot.slane %v6635, 1
    %v6645 = vrot.slane %v6637, 1
    %v6654 = vtanh.pop %v6638
    %v6655 = vtanh.pop %v6639
    %v6656 = vtanh.pop %v6640
    %v6657 = vtanh.pop %v6641
    %v6658 = vtanh.pop %v6642
    %v6659 = vtanh.pop %v6643
    %v6660 = vtanh.pop %v6644
    %v6661 = vtanh.pop %v6645
    %v6662 = vmul.f32 %v6599, %v6319
    %v6663 = vmul.f32 %v6601, %v6320
    %v6664 = vmul.f32 %v6603, %v6321
    %v6665 = vmul.f32 %v6605, %v6322
    %v6666 = vmul.f32 %v6607, %v6323
    %v6667 = vmul.f32 %v6609, %v6324
    %v6668 = vmul.f32 %v6611, %v6325
    %v6669 = vmul.f32 %v6613, %v6326
    %v6670 = vmul.f32 %v6599, %v6654
    %v6671 = vmul.f32 %v6601, %v6655
    %v6672 = vmul.f32 %v6603, %v6656
    %v6673 = vmul.f32 %v6605, %v6657
    %v6674 = vmul.f32 %v6607, %v6658
    %v6675 = vmul.f32 %v6609, %v6659
    %v6676 = vmul.f32 %v6611, %v6660
    %v6677 = vmul.f32 %v6613, %v6661
    %6686 = vrot.lane.b32.xlu0 %v6670, 64
    %v6687 = vpop.permute.xlu0 %6686
    %6688 = vrot.lane.b32.xlu0 %v6671, 64
    %v6689 = vpop.permute.xlu0 %6688
    %6690 = vrot.lane.b32.xlu0 %v6672, 64
    %v6691 = vpop.permute.xlu0 %6690
    %6692 = vrot.lane.b32.xlu0 %v6673, 64
    %v6693 = vpop.permute.xlu0 %6692
    %6694 = vrot.lane.b32.xlu0 %v6674, 64
    %v6695 = vpop.permute.xlu0 %6694
    %6696 = vrot.lane.b32.xlu0 %v6675, 64
    %v6697 = vpop.permute.xlu0 %6696
    %6698 = vrot.lane.b32.xlu0 %v6676, 64
    %v6699 = vpop.permute.xlu0 %6698
    %6700 = vrot.lane.b32.xlu0 %v6677, 64
    %v6701 = vpop.permute.xlu0 %6700
    %v6710 = vadd.f32 %v6662, %v6687
    %v6711 = vadd.f32 %v6663, %v6689
    %v6712 = vadd.f32 %v6664, %v6691
    %v6713 = vadd.f32 %v6665, %v6693
    %v6714 = vadd.f32 %v6666, %v6695
    %v6715 = vadd.f32 %v6667, %v6697
    %v6716 = vadd.f32 %v6668, %v6699
    %v6717 = vadd.f32 %v6669, %v6701
    %v6718 = vtanh.pop %v6710
    %v6719 = vtanh.pop %v6711
    %v6720 = vtanh.pop %v6712
    %v6721 = vtanh.pop %v6713
    %v6722 = vtanh.pop %v6714
    %v6723 = vtanh.pop %v6715
    %v6724 = vtanh.pop %v6716
    %v6725 = vtanh.pop %v6717
    %v6734 = vrot.slane %v6599, 1
    %v6735 = vrot.slane %v6601, 1
    %v6736 = vrot.slane %v6603, 1
    %v6737 = vrot.slane %v6605, 1
    %v6738 = vrot.slane %v6607, 1
    %v6739 = vrot.slane %v6609, 1
    %v6740 = vrot.slane %v6611, 1
    %v6741 = vrot.slane %v6613, 1
    %6758 = vrot.lane.b32.xlu0 %v6718, 64
    %v6759 = vpop.permute.xlu0 %6758
    %6760 = vrot.lane.b32.xlu0 %v6719, 64
    %v6761 = vpop.permute.xlu0 %6760
    %6762 = vrot.lane.b32.xlu0 %v6720, 64
    %v6763 = vpop.permute.xlu0 %6762
    %6764 = vrot.lane.b32.xlu0 %v6721, 64
    %v6765 = vpop.permute.xlu0 %6764
    %6766 = vrot.lane.b32.xlu0 %v6722, 64
    %v6767 = vpop.permute.xlu0 %6766
    %6768 = vrot.lane.b32.xlu0 %v6723, 64
    %v6769 = vpop.permute.xlu0 %6768
    %6770 = vrot.lane.b32.xlu0 %v6724, 64
    %v6771 = vpop.permute.xlu0 %6770
    %6772 = vrot.lane.b32.xlu0 %v6725, 64
    %v6773 = vpop.permute.xlu0 %6772
    %v6782 = vmul.f32 %v6734, %v6759
    %v6783 = vmul.f32 %v6735, %v6761
    %v6784 = vmul.f32 %v6736, %v6763
    %v6785 = vmul.f32 %v6737, %v6765
    %v6786 = vmul.f32 %v6738, %v6767
    %v6787 = vmul.f32 %v6739, %v6769
    %v6788 = vmul.f32 %v6740, %v6771
    %v6789 = vmul.f32 %v6741, %v6773
    %v6798 = vcombine.low %v6782, %v6783
    %v6799 = vcombine.low %v6784, %v6785
    %v6800 = vcombine.low %v6786, %v6787
    %v6801 = vcombine.low %v6788, %v6789
    %v6803 = vunpack.c.l.s4 1966171168
    %v6804 = vunpack.c.0.s8 %v6803
    %v6805 = vlaneseq
    %v6806 = vshrl.u32 %v6805, 7
    %v6807 = vsub.s32 %v6804, %v6806
    %v6808 = vrot.slane %v6798, %v6807
    %v6810 = vunpack.c.l.s4 1966171168
    %v6811 = vunpack.c.0.s8 %v6810
    %v6812 = vlaneseq
    %v6813 = vshrl.u32 %v6812, 7
    %v6814 = vsub.s32 %v6811, %v6813
    %v6815 = vrot.slane %v6799, %v6814
    %v6817 = vunpack.c.l.s4 1966171168
    %v6818 = vunpack.c.0.s8 %v6817
    %v6819 = vlaneseq
    %v6820 = vshrl.u32 %v6819, 7
    %v6821 = vsub.s32 %v6818, %v6820
    %v6822 = vrot.slane %v6800, %v6821
    %v6824 = vunpack.c.l.s4 1966171168
    %v6825 = vunpack.c.0.s8 %v6824
    %v6826 = vlaneseq
    %v6827 = vshrl.u32 %v6826, 7
    %v6828 = vsub.s32 %v6825, %v6827
    %v6829 = vrot.slane %v6801, %v6828
    %v6830 = vcombine.low %v6808, %v6815
    %v6831 = vcombine.low %v6822, %v6829
    %v6833 = vunpack.c.l.s4 1966171168
    %v6834 = vunpack.c.0.s8 %v6833
    %v6835 = vlaneseq
    %v6836 = vshrl.u32 %v6835, 7
    %v6837 = vsub.s32 %v6834, %v6836
    %v6838 = vrot.slane %v6830, %v6837
    %v6840 = vunpack.c.l.s4 1966171168
    %v6841 = vunpack.c.0.s8 %v6840
    %v6842 = vlaneseq
    %v6843 = vshrl.u32 %v6842, 7
    %v6844 = vsub.s32 %v6841, %v6843
    %v6845 = vrot.slane %v6831, %v6844
    %v6846 = vcombine.low %v6838, %v6845
    %6848 = vst.msk [vmem:[#allocation2] sm:$0xff] %vm331, %v6846
    %v6857 = vcombine.low %v6710, %v6711
    %v6858 = vcombine.low %v6712, %v6713
    %v6859 = vcombine.low %v6714, %v6715
    %v6860 = vcombine.low %v6716, %v6717
    %v6862 = vunpack.c.l.s4 1966171168
    %v6863 = vunpack.c.0.s8 %v6862
    %v6864 = vlaneseq
    %v6865 = vshrl.u32 %v6864, 7
    %v6866 = vsub.s32 %v6863, %v6865
    %v6867 = vrot.slane %v6857, %v6866
    %v6869 = vunpack.c.l.s4 1966171168
    %v6870 = vunpack.c.0.s8 %v6869
    %v6871 = vlaneseq
    %v6872 = vshrl.u32 %v6871, 7
    %v6873 = vsub.s32 %v6870, %v6872
    %v6874 = vrot.slane %v6858, %v6873
    %v6876 = vunpack.c.l.s4 1966171168
    %v6877 = vunpack.c.0.s8 %v6876
    %v6878 = vlaneseq
    %v6879 = vshrl.u32 %v6878, 7
    %v6880 = vsub.s32 %v6877, %v6879
    %v6881 = vrot.slane %v6859, %v6880
    %v6883 = vunpack.c.l.s4 1966171168
    %v6884 = vunpack.c.0.s8 %v6883
    %v6885 = vlaneseq
    %v6886 = vshrl.u32 %v6885, 7
    %v6887 = vsub.s32 %v6884, %v6886
    %v6888 = vrot.slane %v6860, %v6887
    %v6889 = vcombine.low %v6867, %v6874
    %v6890 = vcombine.low %v6881, %v6888
    %v6892 = vunpack.c.l.s4 1966171168
    %v6893 = vunpack.c.0.s8 %v6892
    %v6894 = vlaneseq
    %v6895 = vshrl.u32 %v6894, 7
    %v6896 = vsub.s32 %v6893, %v6895
    %v6897 = vrot.slane %v6889, %v6896
    %v6899 = vunpack.c.l.s4 1966171168
    %v6900 = vunpack.c.0.s8 %v6899
    %v6901 = vlaneseq
    %v6902 = vshrl.u32 %v6901, 7
    %v6903 = vsub.s32 %v6900, %v6902
    %v6904 = vrot.slane %v6890, %v6903
    %v6905 = vcombine.low %v6897, %v6904
    %6906 = vrot.lane.b32.xlu0 %v6905, 64
    %v6907 = vpop.permute.xlu0 %6906
    %6909 = vst.msk [vmem:[#allocation3] sm:$0xff] %vm331, %v6907
    // Predicated region
    $region38: #{tpu_custom_call.1} parent=1 // pred_check
      %p6910 = pneg %p52
    $region39: #{tpu_custom_call.1} parent=1 // pred_check_branch
      %6912 = sbr.rel (%p6910) target = $region41
    $region40: #{tpu_custom_call.1} parent=1 // pred_region
      %v6913 = vpack.c.bf16 %v6782, %v6782
      %v6914 = vpack.c.bf16 %v6783, %v6783
      %v6915 = vpack.c.bf16 %v6784, %v6784
      %v6916 = vpack.c.bf16 %v6785, %v6785
      %v6917 = vpack.c.bf16 %v6786, %v6786
      %v6918 = vpack.c.bf16 %v6787, %v6787
      %v6919 = vpack.c.bf16 %v6788, %v6788
      %v6920 = vpack.c.bf16 %v6789, %v6789
      %v6921 = vld [vmem:[%s3] sm:$0x3]
      %v6923 = vlaneseq
      %v6924 = vshrl.u32 %v6923, 7
      %v6925 = vsub.s32 0, %v6924
      %v6926 = vrot.slane %v6921, %v6925
      %v6927 = vlaneseq
      %v6928 = vshrl.u32 %v6927, 7
      %v6929 = vsub.s32 1, %v6928
      %v6930 = vrot.slane %v6921, %v6929
      %v6941 = vunpack.c.l.b16 %v6913
      %v6942 = vunpack.c.l.b16 %v6914
      %v6943 = vunpack.c.l.b16 %v6915
      %v6944 = vunpack.c.l.b16 %v6916
      %v6945 = vunpack.c.l.b16 %v6917
      %v6946 = vunpack.c.l.b16 %v6918
      %v6947 = vunpack.c.l.b16 %v6919
      %v6948 = vunpack.c.l.b16 %v6920
      %v6949 = vrot.slane %v6942, 7
      %v6950 = vsel %vm1334, %v6949, %v6941
      %v6951 = vrot.slane %v6943, 6
      %v6952 = vsel %vm1337, %v6951, %v6950
      %v6953 = vrot.slane %v6944, 5
      %v6954 = vsel %vm1340, %v6953, %v6952
      %v6955 = vrot.slane %v6945, 4
      %v6956 = vsel %vm1343, %v6955, %v6954
      %v6957 = vrot.slane %v6946, 3
      %v6958 = vsel %vm1346, %v6957, %v6956
      %v6959 = vrot.slane %v6947, 2
      %v6960 = vsel %vm1349, %v6959, %v6958
      %v6961 = vrot.slane %v6948, 1
      %v6962 = vsel %vm1352, %v6961, %v6960
      %v6963 = vpack.c.b16 %v6962, %v6962
      %v6965 = vsel %vm331, %v6963, 0
      %6967 = vmatprep.subr.bf16.mxu0 %v316
      %6968 = vmatpush1.bf16.msra.mxu0 %v315
      %6969 = vmatprep.subr.bf16.mxu0 %v318
      %6970 = vmatpush1.bf16.msra.mxu0 %v317
      %6971 = vmatprep.subr.bf16.mxu0 %v320
      %6972 = vmatpush1.bf16.msra.mxu0 %v319
      %6973 = vmatprep.subr.bf16.mxu0 %v322
      %6974 = vmatpush1.bf16.msra.mxu0 %v321
      %6975 = vmatprep.subr.bf16.mxu0 0
      %6976 = vmatpush1.bf16.msra.mxu0 0
      %6977 = vmatprep.subr.bf16.mxu0 0
      %6978 = vmatpush1.bf16.msra.mxu0 0
      %6979 = vmatprep.subr.bf16.mxu0 0
      %6980 = vmatpush1.bf16.msra.mxu0 0
      %6981 = vmatprep.subr.bf16.mxu0 0
      %6982 = vmatpush1.bf16.msra.mxu0 0
      %6983 = vmatprep.subr.bf16.mxu0 0
      %6984 = vmatpush1.bf16.msra.mxu0 0
      %6985 = vmatprep.subr.bf16.mxu0 0
      %6986 = vmatpush1.bf16.msra.mxu0 0
      %6987 = vmatprep.subr.bf16.mxu0 0
      %6988 = vmatpush1.bf16.msra.mxu0 0
      %6989 = vmatprep.subr.bf16.mxu0 0
      %6990 = vmatpush1.bf16.msra.mxu0 0
      %6991 = vmatprep.subr.bf16.mxu0 0
      %6992 = vmatpush1.bf16.msra.mxu0 0
      %6993 = vmatprep.subr.bf16.mxu0 0
      %6994 = vmatpush1.bf16.msra.mxu0 0
      %6995 = vmatprep.subr.bf16.mxu0 0
      %6996 = vmatpush1.bf16.msra.mxu0 0
      %6997 = vmatprep.subr.bf16.mxu0 0
      %6998 = vmatpush1.bf16.msra.mxu0 0
      %6999 = vmatprep.mubr.bf16.mxu0 0
      %7000 = vmatmul.mubr.bf16.gmra.mrb[0].mxu0 %v6965
      %v7001 = vpop.f32.mrb[0].mxu0
      %v7002 = vadd.f32 %v6926, %v7001
      %v7003 = vpop.f32.mrb[0].mxu0
      %v7004 = vadd.f32 %v6930, %v7003
      %v7005 = vpop.f32.mrb[0].mxu0
      %v7006 = vpop.f32.mrb[0].mxu0
      %7007 = vdwg.mxu0
      %v7008 = vxor.u32 %v7002, 2147483648
      %v7009 = vxor.u32 %v7004, 2147483648
      %v7010 = vmul.f32 %v7008, 1.442695
      %v7011 = vpow.pop %v7010
      %v7012 = vmul.f32 %v7009, 1.442695
      %v7013 = vpow.pop %v7012
      %v7014 = vadd.f32 %v7011, 1.0
      %v7015 = vadd.f32 %v7013, 1.0
      %v7016 = vrcp.pop %v7014
      %v7017 = vmul.f32 1.0, %v7016
      %v7018 = vrcp.pop %v7015
      %v7019 = vmul.f32 1.0, %v7018
      %v7020 = vtanh.pop %v7004
      %v7022 = vmul.f32 %v7017, %v6905
      %7024 = vrot.lane.b32.xlu0 %v7020, 64
      %v7025 = vpop.permute.xlu0 %7024
      %v7027 = vmul.f32 %v7017, %v7025
      %7029 = vrot.lane.b32.xlu0 %v7027, 64
      %v7030 = vpop.permute.xlu0 %7029
      %v7032 = vadd.f32 %v7022, %v7030
      %v7033 = vtanh.pop %v7032
      %7035 = vrot.lane.b32.xlu0 %v7033, 64
      %v7036 = vpop.permute.xlu0 %7035
      %v7038 = vmul.f32 %v7019, %v7036
      %v7039 = vpack.c.bf16 %v7038, %v7038
      %v7040 = vld [vmem:[%s4] sm:$0xf]
      %v7041 = vld [vmem:[%s4 + $0x4] sm:$0xf]
      %v7042 = vld [vmem:[%s4 + $0x8] sm:$0xf]
      %v7043 = vld [vmem:[%s4 + $0xc] sm:$0xf]
      %v7044 = vld [vmem:[%s5] sm:$0x1]
      %v7046 = vlaneseq
      %v7047 = vshrl.u32 %v7046, 7
      %v7048 = vsub.s32 0, %v7047
      %v7049 = vrot.slane %v7044, %v7048
      %7052 = vrot.lane.b32.xlu0 %v7039, 96
      %v7053 = vpop.permute.xlu0 %7052
      %v7058 = vunpack.c.l.b16 %v7040
      %v7059 = vunpack.c.l.b16 %v7041
      %v7060 = vunpack.c.l.b16 %v7042
      %v7061 = vunpack.c.l.b16 %v7043
      %v7062 = vpack.c.b16 %v7059, %v7058
      %v7063 = vpack.c.b16 %v7061, %v7060
      %vm7066 = vcmask 261120
      %v7068 = vsel %vm7066, %v7053, 0
      %7070 = vmatprep.subr.bf16.mxu0 0
      %7071 = vmatpush1.bf16.msra.mxu0 %v7062
      %7072 = vmatprep.subr.bf16.mxu0 0
      %7073 = vmatpush1.bf16.msra.mxu0 %v7063
      %7074 = vmatprep.subr.bf16.mxu0 0
      %7075 = vmatpush1.bf16.msra.mxu0 0
      %7076 = vmatprep.subr.bf16.mxu0 0
      %7077 = vmatpush1.bf16.msra.mxu0 0
      %7078 = vmatprep.subr.bf16.mxu0 0
      %7079 = vmatpush1.bf16.msra.mxu0 0
      %7080 = vmatprep.subr.bf16.mxu0 0
      %7081 = vmatpush1.bf16.msra.mxu0 0
      %7082 = vmatprep.subr.bf16.mxu0 0
      %7083 = vmatpush1.bf16.msra.mxu0 0
      %7084 = vmatprep.subr.bf16.mxu0 0
      %7085 = vmatpush1.bf16.msra.mxu0 0
      %7086 = vmatprep.subr.bf16.mxu0 0
      %7087 = vmatpush1.bf16.msra.mxu0 0
      %7088 = vmatprep.subr.bf16.mxu0 0
      %7089 = vmatpush1.bf16.msra.mxu0 0
      %7090 = vmatprep.subr.bf16.mxu0 0
      %7091 = vmatpush1.bf16.msra.mxu0 0
      %7092 = vmatprep.subr.bf16.mxu0 0
      %7093 = vmatpush1.bf16.msra.mxu0 0
      %7094 = vmatprep.subr.bf16.mxu0 0
      %7095 = vmatpush1.bf16.msra.mxu0 0
      %7096 = vmatprep.subr.bf16.mxu0 0
      %7097 = vmatpush1.bf16.msra.mxu0 0
      %7098 = vmatprep.subr.bf16.mxu0 0
      %7099 = vmatpush1.bf16.msra.mxu0 0
      %7100 = vmatprep.subr.bf16.mxu0 0
      %7101 = vmatpush1.bf16.msra.mxu0 0
      %7102 = vmatprep.mubr.bf16.mxu0 0
      %7103 = vmatmul.mubr.bf16.gmra.mrb[0].mxu0 %v7068
      %v7104 = vpop.f32.mrb[0].mxu0
      %v7105 = vadd.f32 %v7049, %v7104
      %v7106 = vpop.f32.mrb[0].mxu0
      %v7107 = vpop.f32.mrb[0].mxu0
      %v7108 = vpop.f32.mrb[0].mxu0
      %7109 = vdwg.mxu0
      %vm7110 = vcmask 15360
      %7111 = vst.msk [vmem:[%s6] sm:$0xff] %vm7110, %v7105
    $region41: #{tpu_custom_call.1} parent=1 // pred_fallthru
      _
    // Predicated region
    $region42: #{tpu_custom_call.1} parent=1 // pred_check
      _
    $region43: #{tpu_custom_call.1} parent=1 // pred_check_branch
      %7113 = sbr.rel (0) target = $region45
    $region44: #{tpu_custom_call.1} parent=1 // pred_region
      _
    $region45: #{tpu_custom_call.1} parent=1 // pred_fallthru
      _
    // Predicated region
    $region46: #{tpu_custom_call.1} parent=1 // pred_check
      _
    $region47: #{tpu_custom_call.1} parent=1 // pred_check_branch
      %7115 = sbr.rel (0) target = $region49
    $region48: #{tpu_custom_call.1} parent=1 // pred_region
      _
    $region49: #{tpu_custom_call.1} parent=1 // pred_fallthru
      _
    %7116 = vsyncpa [#allocation6], 1
    %7117 = vsyncpa [#allocation8], 1

</llo_original>
